<compile_context>
chip_gen: v7x
topology: tpu7x:2x2x1
jax: 0.10.0
libtpu: 0.0.40
codegen_flags: <defaults>
</compile_context>

<pallas_src>
import functools

import jax
import jax.numpy as jnp
from jax.experimental import pallas as pl
from jax.experimental.pallas import tpu as pltpu

MLP_HIDDEN = 4096
PROJ = 256
BN_EPS = 1e-5


def _mlp_kernel(x_ref, w1_ref, gb_ref, w2_ref, b2_ref, o_ref, *, eps):
    j = pl.program_id(0)   # core-slab index (hidden-axis split across TCs)
    k = pl.program_id(1)   # hidden-tile reduction index (per core)

    @pl.when(k == 0)
    def _():
        # Fold the layer-2 bias into the init of slab 0 only (slabs are summed
        # outside the kernel).
        b2b = jnp.broadcast_to(b2_ref[...].astype(jnp.float32), o_ref.shape)
        o_ref[...] = jnp.where(j == 0, b2b, jnp.zeros_like(b2b))

    # layer1 linear for this hidden tile: (B, in_dim) @ (in_dim, tile_h).
    # bf16 MXU inputs, f32 accumulation.  layer1 bias omitted: the batch-mean
    # subtraction below cancels any per-feature constant exactly (training-mode
    # BN only).
    h = jnp.dot(x_ref[...], w1_ref[...], preferred_element_type=jnp.float32)

    # BatchNorm1d, training mode, single-pass stats: var = E[h^2] - mean^2
    # (biased variance), folded into one per-feature affine.
    mean = jnp.mean(h, axis=0, keepdims=True)
    var = jnp.maximum(jnp.mean(h * h, axis=0, keepdims=True) - mean * mean, 0.0)
    gb = gb_ref[...]                      # (2, tile_h) f32: row 0 gamma, row 1 beta
    scale = gb[0:1, :] * jax.lax.rsqrt(var + eps)
    shift = gb[1:2, :] - mean * scale

    # affine + ReLU + bf16 cast, fused; then layer2 partial accumulated into the
    # VMEM-resident output slab.
    hr = jnp.maximum(h * scale + shift, 0.0).astype(w2_ref.dtype)
    o_ref[...] += jnp.dot(hr, w2_ref[...], preferred_element_type=jnp.float32)


def _tpu_vmem_capacity_bytes():
    try:
        cap = int(getattr(pltpu.get_tpu_info(), "vmem_capacity_bytes"))
        if cap > 0:
            return cap
    except Exception:
        pass
    try:
        kind = jax.devices()[0].device_kind.lower()
        if "v7" in kind:
            return 64 * 1024 * 1024
    except Exception:
        pass
    return 128 * 1024 * 1024


def _detect_num_cores():
    # v7x has 2 TensorCores per chip; split the hidden axis across them.
    try:
        kind = jax.devices()[0].device_kind.lower()
        return 2 if "v7" in kind else 1
    except Exception:
        return 1


def _pick_tile_h(B, in_dim, H, P, n_cores, vmem_budget_bytes):
    """Largest hidden tile whose per-step live VMEM fits the budget."""
    candidates = [4096, 2048, 1024, 512, 256, 128]
    feasible = [c for c in candidates if H % (n_cores * c) == 0]
    assert feasible, (H, n_cores)
    for th in feasible:
        bytes_step = (
            2 * in_dim * th * 2        # w1 double-buffer (bf16)
            + 2 * th * P * 2           # w2 double-buffer (bf16)
            + 2 * 2 * th * 4           # gamma/beta double-buffer (f32)
            + 2 * B * in_dim * 2       # x (bf16, default double-buffered)
            + B * th * 6               # h (f32) + hr (bf16) intermediates
            + 2 * B * P * 4            # resident output slab + headroom
            + 2 * P * 4                # b2
        )
        if bytes_step <= vmem_budget_bytes:
            return th
    return feasible[-1]


def mlp_forward(x, params, *, tile_h=None, n_cores=None):
    """x: (B, in_dim) f32.  params: dict of w1, b1, gamma, beta, w2, b2.

    n_cores: split of the hidden/reduction axis across TensorCores (2 on v7x).
    Auto-detected when None.  BN statistics stay correct because they are
    per-feature and the hidden split partitions features.
    """
    B, in_dim = x.shape
    H = params["w1"].shape[1]
    P = params["w2"].shape[1]

    if n_cores is None:
        n_cores = _detect_num_cores()
    if H % n_cores != 0:
        n_cores = 1

    # Generation-aware scoped-VMEM limit: ~100 MiB on 128-MiB chips (v5e/v6e),
    # ~54 MiB on 64-MiB chips (v7x).
    vmem_cap = _tpu_vmem_capacity_bytes()
    vmem_limit = min(100 * 1024 * 1024, int(vmem_cap * 0.85))

    if tile_h is None:
        tile_h = _pick_tile_h(B, in_dim, H, P, n_cores, int(vmem_limit * 0.75))
    assert H % (n_cores * tile_h) == 0
    assert P % 128 == 0
    kt = H // (n_cores * tile_h)       # reduction steps per core

    # bf16 weight/activation streaming (halves HBM bytes; kernel is BW-bound).
    x_bf = x.astype(jnp.bfloat16)
    w1_bf = params["w1"].astype(jnp.bfloat16)
    w2_bf = params["w2"].astype(jnp.bfloat16)
    # gamma/beta coalesced into a single (2, H) f32 stream.
    gb = jnp.stack([params["gamma"], params["beta"]], axis=0).astype(jnp.float32)
    b2 = params["b2"].reshape(1, P).astype(jnp.float32)
    # NOTE: params["b1"] is intentionally not streamed (cancelled by training-mode BN).

    kernel = functools.partial(_mlp_kernel, eps=BN_EPS)

    cost = pl.CostEstimate(
        flops=2 * B * in_dim * H + 2 * B * H * P,
        transcendentals=H,  # rsqrt per hidden feature
        bytes_accessed=(B * in_dim * 2 + in_dim * H * 2 + 2 * H * 4
                        + H * P * 2 + P * 4 + n_cores * B * P * 4),
    )

    slabs = pl.pallas_call(
        kernel,
        out_shape=jax.ShapeDtypeStruct((n_cores, B, P), jnp.float32),
        grid_spec=pltpu.PrefetchScalarGridSpec(
            num_scalar_prefetch=0,
            grid=(n_cores, kt),
            in_specs=[
                pl.BlockSpec((B, in_dim), lambda j, k: (0, 0)),              # x (full, bf16)
                pl.BlockSpec((in_dim, tile_h), lambda j, k: (0, j * kt + k)),  # w1 tile (bf16)
                pl.BlockSpec((2, tile_h), lambda j, k: (0, j * kt + k)),       # gamma/beta tile
                pl.BlockSpec((tile_h, P), lambda j, k: (j * kt + k, 0)),       # w2 tile (bf16)
                pl.BlockSpec((1, P), lambda j, k: (0, 0)),                     # b2
            ],
            out_specs=pl.BlockSpec((None, B, P), lambda j, k: (j, 0, 0)),      # per-core slab
        ),
        compiler_params=pltpu.CompilerParams(
            dimension_semantics=("parallel", "arbitrary"),
            vmem_limit_bytes=vmem_limit,
        ),
        cost_estimate=cost,
    )(x_bf, w1_bf, gb, w2_bf, b2)

    if n_cores == 1:
        return slabs[0]
    return jnp.sum(slabs, axis=0)


def init_params(key, in_dim, hidden=MLP_HIDDEN, proj=PROJ):
    k1, k2, k3, k4 = jax.random.split(key, 4)
    # nn.Linear default init: U(-1/sqrt(fan_in), 1/sqrt(fan_in))
    lim1 = 1.0 / jnp.sqrt(in_dim)
    lim2 = 1.0 / jnp.sqrt(hidden)
    return dict(
        w1=jax.random.uniform(k1, (in_dim, hidden), jnp.float32, -lim1, lim1),
        b1=jax.random.uniform(k2, (hidden,), jnp.float32, -lim1, lim1),
        gamma=jnp.ones((hidden,), jnp.float32),   # BatchNorm1d weight init
        beta=jnp.zeros((hidden,), jnp.float32),   # BatchNorm1d bias init
        w2=jax.random.uniform(k3, (hidden, proj), jnp.float32, -lim2, lim2),
        b2=jax.random.uniform(k4, (proj,), jnp.float32, -lim2, lim2),
    )


def mlp_reference(x, params):
    """Pure-f32 reference, faithful to the PyTorch module (includes layer1 bias)."""
    h = x @ params["w1"] + params["b1"]
    mean = jnp.mean(h, axis=0, keepdims=True)
    var = jnp.mean((h - mean) ** 2, axis=0, keepdims=True)
    hn = (h - mean) / jnp.sqrt(var + BN_EPS)
    hn = hn * params["gamma"] + params["beta"]
    hr = jnp.maximum(hn, 0.0)
    return hr @ params["w2"] + params["b2"]


def mlp_reference_mixed(x, params):
    """Reference with the same bf16 rounding of dot inputs as the kernel."""
    xb = x.astype(jnp.bfloat16).astype(jnp.float32)
    w1 = params["w1"].astype(jnp.bfloat16).astype(jnp.float32)
    w2 = params["w2"].astype(jnp.bfloat16).astype(jnp.float32)
    h = xb @ w1                                   # b1 cancels under training-mode BN
    mean = jnp.mean(h, axis=0, keepdims=True)
    var = jnp.mean((h - mean) ** 2, axis=0, keepdims=True)
    scale = params["gamma"] * jax.lax.rsqrt(var + BN_EPS)
    shift = params["beta"] - mean * scale
    hr = jnp.maximum(h * scale + shift, 0.0)
    hr = hr.astype(jnp.bfloat16).astype(jnp.float32)
    return hr @ w2 + params["b2"]


if __name__ == "__main__":
    key = jax.random.PRNGKey(0)
    kx, kp = jax.random.split(key)

    B, IN_DIM = 8, 64   # small test shape; H=4096 / P=256 come from the module
    x = jax.random.normal(kx, (B, IN_DIM), jnp.float32)
    params = init_params(kp, IN_DIM)

    out = mlp_forward(x, params)
    out = jax.block_until_ready(out)
    assert out.shape == (B, PROJ), out.shape

    # Check against a reference using (nearly) identical bf16-rounded dot inputs.
    ref_mixed = mlp_reference_mixed(x, params)
    assert jnp.allclose(out, ref_mixed, atol=5e-3, rtol=5e-3), \
        float(jnp.max(jnp.abs(out - ref_mixed)))

    # Loose sanity check against the full-f32 PyTorch-faithful reference
    # (difference is purely bf16 weight/activation rounding).
    ref_f32 = mlp_reference(x, params)
    assert jnp.allclose(out, ref_f32, atol=5e-2, rtol=5e-2), \
        float(jnp.max(jnp.abs(out - ref_f32)))

    # Also exercise the explicit 2-way hidden-split path (v7x strategy) on any chip.
    out2 = jax.block_until_ready(mlp_forward(x, params, n_cores=2))
    assert jnp.allclose(out2, ref_mixed, atol=5e-3, rtol=5e-3), \
        float(jnp.max(jnp.abs(out2 - ref_mixed)))

    print("KERNEL_OK")
</pallas_src>

<mosaic_0001>
module attributes {stable_mosaic.version = 11 : i64} {
  func.func @_mlp_kernel(%arg0: i32, %arg1: i32, %arg2: memref<8x64xbf16, #tpu.memory_space<vmem>>, %arg3: memref<64x4096xbf16, #tpu.memory_space<vmem>>, %arg4: memref<2x4096xf32, #tpu.memory_space<vmem>>, %arg5: memref<4096x256xbf16, #tpu.memory_space<vmem>>, %arg6: memref<1x256xf32, #tpu.memory_space<vmem>>, %arg7: memref<1x8x256xf32, #tpu.memory_space<vmem>>) attributes {dimension_semantics = [#tpu.dimension_semantics<parallel>, #tpu.dimension_semantics<arbitrary>], iteration_bounds = array<i64: 1, 1>, scalar_prefetch = 0 : i64, scratch_operands = 0 : i64, tpu.core_type = #tpu.core_type<tc>, window_params = [{pipeline_mode = #tpu.pipeline_mode<synchronous>, transform_indices = @transform_0, window_bounds = array<i64: 8, 64>}, {transform_indices = @transform_1, window_bounds = array<i64: 64, 4096>}, {transform_indices = @transform_2, window_bounds = array<i64: 2, 4096>}, {transform_indices = @transform_3, window_bounds = array<i64: 4096, 256>}, {pipeline_mode = #tpu.pipeline_mode<synchronous>, transform_indices = @transform_4, window_bounds = array<i64: 1, 256>}, {transform_indices = @transform_5, window_bounds = array<i64: 1, 8, 256>}]} {
    %c0_i32 = arith.constant 0 : i32
    %0 = arith.cmpi eq, %arg1, %c0_i32 : i32
    %1 = arith.extui %0 : i1 to i32
    %c0_i32_0 = arith.constant 0 : i32
    %2 = arith.cmpi ne, %1, %c0_i32_0 : i32
    scf.if %2 {
      %c0_22 = arith.constant 0 : index
      %c0_23 = arith.constant 0 : index
      %43 = vector.load %arg6[%c0_22, %c0_23] : memref<1x256xf32, #tpu.memory_space<vmem>>, vector<1x256xf32>
      %44 = vector.shape_cast %43 : vector<1x256xf32> to vector<1x256xf32>
      %45 = vector.broadcast %44 : vector<1x256xf32> to vector<8x256xf32>
      %c0_i32_24 = arith.constant 0 : i32
      %46 = arith.cmpi eq, %arg0, %c0_i32_24 : i32
      %cst_25 = arith.constant 0.000000e+00 : f32
      %47 = vector.broadcast %cst_25 : f32 to vector<8x256xf32>
      %48 = arith.select %46, %45, %47 : vector<8x256xf32>
      %c0_26 = arith.constant 0 : index
      %c0_27 = arith.constant 0 : index
      %c0_28 = arith.constant 0 : index
      %49 = vector.load %arg7[%c0_26, %c0_27, %c0_28] : memref<1x8x256xf32, #tpu.memory_space<vmem>>, vector<1x8x256xf32>
      %50 = vector.shape_cast %49 : vector<1x8x256xf32> to vector<8x256xf32>
      %51 = vector.shape_cast %48 : vector<8x256xf32> to vector<1x8x256xf32>
      tpu.vector_store %arg7[%c0_26, %c0_27, %c0_28], %51 {strides = array<i32>} : memref<1x8x256xf32, #tpu.memory_space<vmem>>, vector<1x8x256xf32>,
    } else {
    }
    %c0 = arith.constant 0 : index
    %c0_1 = arith.constant 0 : index
    %3 = vector.load %arg2[%c0, %c0_1] : memref<8x64xbf16, #tpu.memory_space<vmem>>, vector<8x64xbf16>
    %c0_2 = arith.constant 0 : index
    %c0_3 = arith.constant 0 : index
    %4 = vector.load %arg3[%c0_2, %c0_3] : memref<64x4096xbf16, #tpu.memory_space<vmem>>, vector<64x4096xbf16>
    %cst = arith.constant dense<0.000000e+00> : vector<8x4096xf32>
    %5 = tpu.matmul %3, %4, %cst {dimension_numbers = #tpu.dot_dimension_numbers<[1], [0], [0], [1], [0, 0, 1, 1], [], []>} : vector<8x64xbf16>, vector<64x4096xbf16>, vector<8x4096xf32> -> vector<8x4096xf32>
    %cst_4 = arith.constant dense<0.000000e+00> : vector<4096xf32>
    %6 = vector.multi_reduction <add>, %5, %cst_4 [0] : vector<8x4096xf32> to vector<4096xf32>
    %7 = vector.shape_cast %6 : vector<4096xf32> to vector<1x4096xf32>
    %cst_5 = arith.constant 8.000000e+00 : f32
    %8 = vector.broadcast %cst_5 : f32 to vector<1x4096xf32>
    %9 = arith.divf %7, %8 : vector<1x4096xf32>
    %10 = arith.mulf %5, %5 : vector<8x4096xf32>
    %cst_6 = arith.constant dense<0.000000e+00> : vector<4096xf32>
    %11 = vector.multi_reduction <add>, %10, %cst_6 [0] : vector<8x4096xf32> to vector<4096xf32>
    %12 = vector.shape_cast %11 : vector<4096xf32> to vector<1x4096xf32>
    %cst_7 = arith.constant 8.000000e+00 : f32
    %13 = vector.broadcast %cst_7 : f32 to vector<1x4096xf32>
    %14 = arith.divf %12, %13 : vector<1x4096xf32>
    %15 = arith.mulf %9, %9 : vector<1x4096xf32>
    %16 = arith.subf %14, %15 : vector<1x4096xf32>
    %cst_8 = arith.constant 0.000000e+00 : f32
    %17 = vector.broadcast %cst_8 : f32 to vector<1x4096xf32>
    %18 = arith.maximumf %16, %17 : vector<1x4096xf32>
    %c0_9 = arith.constant 0 : index
    %c0_10 = arith.constant 0 : index
    %19 = vector.load %arg4[%c0_9, %c0_10] : memref<2x4096xf32, #tpu.memory_space<vmem>>, vector<2x4096xf32>
    %20 = vector.extract_strided_slice %19 {offsets = [0, 0], sizes = [1, 4096], strides = [1, 1]} : vector<2x4096xf32> to vector<1x4096xf32>
    %cst_11 = arith.constant 9.99999974E-6 : f32
    %21 = vector.broadcast %cst_11 : f32 to vector<1x4096xf32>
    %22 = arith.addf %18, %21 : vector<1x4096xf32>
    %23 = math.rsqrt %22 : vector<1x4096xf32>
    %24 = arith.mulf %20, %23 : vector<1x4096xf32>
    %25 = vector.extract_strided_slice %19 {offsets = [1, 0], sizes = [1, 4096], strides = [1, 1]} : vector<2x4096xf32> to vector<1x4096xf32>
    %26 = arith.mulf %9, %24 : vector<1x4096xf32>
    %27 = arith.subf %25, %26 : vector<1x4096xf32>
    %28 = vector.broadcast %24 : vector<1x4096xf32> to vector<8x4096xf32>
    %29 = arith.mulf %5, %28 : vector<8x4096xf32>
    %30 = vector.broadcast %27 : vector<1x4096xf32> to vector<8x4096xf32>
    %31 = arith.addf %29, %30 : vector<8x4096xf32>
    %cst_12 = arith.constant 0.000000e+00 : f32
    %32 = vector.broadcast %cst_12 : f32 to vector<8x4096xf32>
    %33 = arith.maximumf %31, %32 : vector<8x4096xf32>
    %34 = arith.truncf %33 : vector<8x4096xf32> to vector<8x4096xbf16>
    %c0_13 = arith.constant 0 : index
    %c0_14 = arith.constant 0 : index
    %c0_15 = arith.constant 0 : index
    %35 = vector.load %arg7[%c0_13, %c0_14, %c0_15] : memref<1x8x256xf32, #tpu.memory_space<vmem>>, vector<1x8x256xf32>
    %36 = vector.shape_cast %35 : vector<1x8x256xf32> to vector<8x256xf32>
    %c0_16 = arith.constant 0 : index
    %c0_17 = arith.constant 0 : index
    %37 = vector.load %arg5[%c0_16, %c0_17] : memref<4096x256xbf16, #tpu.memory_space<vmem>>, vector<4096x256xbf16>
    %cst_18 = arith.constant dense<0.000000e+00> : vector<8x256xf32>
    %38 = tpu.matmul %34, %37, %cst_18 {dimension_numbers = #tpu.dot_dimension_numbers<[1], [0], [0], [1], [0, 0, 1, 1], [], []>} : vector<8x4096xbf16>, vector<4096x256xbf16>, vector<8x256xf32> -> vector<8x256xf32>
    %39 = arith.addf %36, %38 : vector<8x256xf32>
    %c0_19 = arith.constant 0 : index
    %c0_20 = arith.constant 0 : index
    %c0_21 = arith.constant 0 : index
    %40 = vector.load %arg7[%c0_19, %c0_20, %c0_21] : memref<1x8x256xf32, #tpu.memory_space<vmem>>, vector<1x8x256xf32>
    %41 = vector.shape_cast %40 : vector<1x8x256xf32> to vector<8x256xf32>
    %42 = vector.shape_cast %39 : vector<8x256xf32> to vector<1x8x256xf32>
    tpu.vector_store %arg7[%c0_19, %c0_20, %c0_21], %42 {strides = array<i32>} : memref<1x8x256xf32, #tpu.memory_space<vmem>>, vector<1x8x256xf32>,
    return
  }
  func.func @transform_0(%arg0: i32, %arg1: i32) -> (i32, i32) {
    %c0_i32 = arith.constant 0 : i32
    %c0_i32_0 = arith.constant 0 : i32
    %c0_i32_1 = arith.constant 0 : i32
    return %c0_i32, %c0_i32_0 : i32, i32
  }
  func.func @transform_1(%arg0: i32, %arg1: i32) -> (i32, i32) {
    %c1_i32 = arith.constant 1 : i32
    %0 = arith.muli %arg0, %c1_i32 : i32
    %1 = arith.addi %0, %arg1 : i32
    %c0_i32 = arith.constant 0 : i32
    %c0_i32_0 = arith.constant 0 : i32
    return %c0_i32, %1 : i32, i32
  }
  func.func @transform_2(%arg0: i32, %arg1: i32) -> (i32, i32) {
    %c1_i32 = arith.constant 1 : i32
    %0 = arith.muli %arg0, %c1_i32 : i32
    %1 = arith.addi %0, %arg1 : i32
    %c0_i32 = arith.constant 0 : i32
    %c0_i32_0 = arith.constant 0 : i32
    return %c0_i32, %1 : i32, i32
  }
  func.func @transform_3(%arg0: i32, %arg1: i32) -> (i32, i32) {
    %c1_i32 = arith.constant 1 : i32
    %0 = arith.muli %arg0, %c1_i32 : i32
    %1 = arith.addi %0, %arg1 : i32
    %c0_i32 = arith.constant 0 : i32
    %c0_i32_0 = arith.constant 0 : i32
    return %1, %c0_i32 : i32, i32
  }
  func.func @transform_4(%arg0: i32, %arg1: i32) -> (i32, i32) {
    %c0_i32 = arith.constant 0 : i32
    %c0_i32_0 = arith.constant 0 : i32
    %c0_i32_1 = arith.constant 0 : i32
    return %c0_i32, %c0_i32_0 : i32, i32
  }
  func.func @transform_5(%arg0: i32, %arg1: i32) -> (i32, i32, i32) {
    %c0_i32 = arith.constant 0 : i32
    %c0_i32_0 = arith.constant 0 : i32
    %c0_i32_1 = arith.constant 0 : i32
    return %arg0, %c0_i32, %c0_i32_0 : i32, i32, i32
  }
}

</mosaic_0001>

<llo_original>
// kernel: tpu_custom_call.1
$region0: #{tpu_custom_call.1}
  #allocation0 [shape = 'u32[]', space=smem, size = 0x4, offset = 0x4, fixed_abs, tag = 'smem constant byte address 0x4 - core index']
  #allocation1 [shape = 'u32[144,128]{1,0:T(1,128)}', space=vmem, size = 0x12000, scoped, tag = 'internal scratch']
  %s0 = inlined_call_operand.hbm [shape: bf16[8,64], index: 0, kind: input, shape index: {}]
  %s1 = inlined_call_operand.hbm [shape: bf16[64,4096], index: 1, kind: input, shape index: {}]
  %s2 = inlined_call_operand.hbm [shape: f32[2,4096], index: 2, kind: input, shape index: {}]
  %s3 = inlined_call_operand.hbm [shape: bf16[4096,256], index: 3, kind: input, shape index: {}]
  %s4 = inlined_call_operand.hbm [shape: f32[1,256], index: 4, kind: input, shape index: {}]
  %s5 = inlined_call_operand.hbm [shape: f32[1,8,256], index: 5, kind: output, shape index: {}]
  %s6 = sld [smem:[#allocation0]]
  $region54: #{tpu_custom_call.1} parent=0
    _
  %s8 = ssub.s32 1, %s6
  %s9 = scalar_select 0, %s8, %s6
  $region1: #{tpu_custom_call.1} parent=0
    #allocation2 [shape = 'u8[2048]{0}', space=vmem, size = 0x800, scoped, tag = 'input window, operand 0, single buffered']
    #allocation3 [shape = 's32[1]{0}', space=sflag, size = 0x4, scoped, tag = 'scoped memory for tpu_custom_call.1']
    #allocation4 [shape = 's32[1]{0}', space=sflag, size = 0x4, scoped, tag = 'scoped memory for tpu_custom_call.1']
    #allocation5 [shape = 'u8[524288]{0}', space=vmem, size = 0x80000, scoped, tag = 'input window, operand 1, single buffered']
    #allocation6 [shape = 's32[1]{0}', space=sflag, size = 0x4, scoped, tag = 'scoped memory for tpu_custom_call.1']
    #allocation7 [shape = 'u8[32768]{0}', space=vmem, size = 0x8000, scoped, tag = 'input window, operand 2, single buffered']
    #allocation8 [shape = 'u8[2097152]{0}', space=vmem, size = 0x200000, scoped, tag = 'input window, operand 3, single buffered']
    #allocation9 [shape = 's32[1]{0}', space=sflag, size = 0x4, scoped, tag = 'scoped memory for tpu_custom_call.1']
    #allocation10 [shape = 'u8[1024]{0}', space=vmem, size = 0x400, scoped, tag = 'input window, operand 4, single buffered']
    #allocation11 [shape = 'u8[8192]{0}', space=vmem, size = 0x2000, scoped, tag = 'output window, operand 0, single buffered']
    %10 = vsyncpa [#allocation3], 0
    %11 = vsyncpa [#allocation6], 0
    %12 = vsyncpa [#allocation9], 0
    %13 = vsyncpa [#allocation4], 0
    // Predicated region
    $region2: #{tpu_custom_call.1} parent=1 // pred_check
      _
    $region3: #{tpu_custom_call.1} parent=1 // pred_check_branch
      %15 = sbr.rel (0) target = $region5
    $region4: #{tpu_custom_call.1} parent=1 // pred_region
      %s17 = ssub.s32 64, 64
      %18 = vsyncadd [#allocation3], %s17
      %s20 = sshll.u32 [#allocation2], 4
      %s21 = int_to_ptr.vmem [resolvable:$true] %s20
      %23 = dma.hbm_to_vmem [thread:$0]  %s0, 64, %s21, [#allocation3]
    $region5: #{tpu_custom_call.1} parent=1 // pred_fallthru
      _
    // Predicated region
    $region6: #{tpu_custom_call.1} parent=1 // pred_check
      _
    $region7: #{tpu_custom_call.1} parent=1 // pred_check_branch
      %25 = sbr.rel (0) target = $region9
    $region8: #{tpu_custom_call.1} parent=1 // pred_region
      %s26 = sadd.s32 0, 0
      %s27 = smul.u32 32, %s26
      %s29 = ssub.s32 16384, 16384
      %30 = vsyncadd [#allocation6], %s29
      %s31 = smul.addr %s27, 64
      %s32 = scalar_lea.hbm %s1, %s31
      %s33 = sshll.u32 [#allocation5], 4
      %s34 = int_to_ptr.vmem [resolvable:$true] %s33
      %39 = dma.hbm_to_vmem [thread:$0]  %s32, 16384, %s34, [#allocation6], 2048, 2048, 128
    $region9: #{tpu_custom_call.1} parent=1 // pred_fallthru
      _
    // Predicated region
    $region10: #{tpu_custom_call.1} parent=1 // pred_check
      _
    $region11: #{tpu_custom_call.1} parent=1 // pred_check_branch
      %41 = sbr.rel (0) target = $region13
    $region12: #{tpu_custom_call.1} parent=1 // pred_region
      %s42 = sadd.s32 0, 0
      %s43 = smul.u32 32, %s42
      %s45 = ssub.s32 1024, 1024
      %46 = vsyncadd [#allocation6], %s45
      %s47 = smul.addr %s43, 32
      %s48 = scalar_lea.hbm %s2, %s47
      %s50 = sshll.u32 [#allocation7], 4
      %s51 = int_to_ptr.vmem [resolvable:$true] %s50
      %53 = dma.hbm_to_vmem [thread:$0]  %s48, 1024, %s51, [#allocation6]
    $region13: #{tpu_custom_call.1} parent=1 // pred_fallthru
      _
    // Predicated region
    $region14: #{tpu_custom_call.1} parent=1 // pred_check
      _
    $region15: #{tpu_custom_call.1} parent=1 // pred_check_branch
      %55 = sbr.rel (0) target = $region17
    $region16: #{tpu_custom_call.1} parent=1 // pred_region
      %s56 = sadd.s32 0, 0
      %s57 = smul.u32 512, %s56
      %s59 = ssub.s32 65536, 65536
      %60 = vsyncadd [#allocation9], %s59
      %s61 = smul.addr %s57, 2
      %s62 = smul.addr %s61, 64
      %s63 = scalar_lea.hbm %s3, %s62
      %s64 = sshll.u32 [#allocation8], 4
      %s65 = int_to_ptr.vmem [resolvable:$true] %s64
      %70 = dma.hbm_to_vmem [thread:$0]  %s63, 65536, %s65, [#allocation9], 128, 128, 8
    $region17: #{tpu_custom_call.1} parent=1 // pred_fallthru
      _
    // Predicated region
    $region18: #{tpu_custom_call.1} parent=1 // pred_check
      _
    $region19: #{tpu_custom_call.1} parent=1 // pred_check_branch
      %72 = sbr.rel (0) target = $region21
    $region20: #{tpu_custom_call.1} parent=1 // pred_region
      %s74 = ssub.s32 32, 32
      %75 = vsyncadd [#allocation9], %s74
      %s77 = sshll.u32 [#allocation10], 4
      %s78 = int_to_ptr.vmem [resolvable:$true] %s77
      %80 = dma.hbm_to_vmem [thread:$0]  %s4, 32, %s78, [#allocation9]
    $region21: #{tpu_custom_call.1} parent=1 // pred_fallthru
      _
    // Predicated region
    $region22: #{tpu_custom_call.1} parent=1 // pred_check
      _
    $region23: #{tpu_custom_call.1} parent=1 // pred_check_branch
      %82 = sbr.rel (0) target = $region25
    $region24: #{tpu_custom_call.1} parent=1 // pred_region
      %83 = dma.done [#allocation3], 64
    $region25: #{tpu_custom_call.1} parent=1 // pred_fallthru
      _
    // Predicated region
    $region26: #{tpu_custom_call.1} parent=1 // pred_check
      _
    $region27: #{tpu_custom_call.1} parent=1 // pred_check_branch
      %85 = sbr.rel (0) target = $region29
    $region28: #{tpu_custom_call.1} parent=1 // pred_region
      %86 = dma.done [#allocation6], 16384
    $region29: #{tpu_custom_call.1} parent=1 // pred_fallthru
      _
    // Predicated region
    $region30: #{tpu_custom_call.1} parent=1 // pred_check
      _
    $region31: #{tpu_custom_call.1} parent=1 // pred_check_branch
      %88 = sbr.rel (0) target = $region33
    $region32: #{tpu_custom_call.1} parent=1 // pred_region
      %89 = dma.done [#allocation6], 1024
    $region33: #{tpu_custom_call.1} parent=1 // pred_fallthru
      _
    // Predicated region
    $region34: #{tpu_custom_call.1} parent=1 // pred_check
      _
    $region35: #{tpu_custom_call.1} parent=1 // pred_check_branch
      %91 = sbr.rel (0) target = $region37
    $region36: #{tpu_custom_call.1} parent=1 // pred_region
      %92 = dma.done [#allocation9], 65536
    $region37: #{tpu_custom_call.1} parent=1 // pred_fallthru
      _
    // Predicated region
    $region38: #{tpu_custom_call.1} parent=1 // pred_check
      _
    $region39: #{tpu_custom_call.1} parent=1 // pred_check_branch
      %94 = sbr.rel (0) target = $region41
    $region40: #{tpu_custom_call.1} parent=1 // pred_region
      %95 = dma.done [#allocation9], 32
    $region41: #{tpu_custom_call.1} parent=1 // pred_fallthru
      _
    %s96 = sadd.s32 0, 0
    %s97 = smul.u32 32, %s96
    %s98 = sadd.s32 0, 0
    %s99 = smul.u32 32, %s98
    %s100 = sadd.s32 0, 0
    %s101 = smul.u32 512, %s100
    %p103 = scmp.eq.s32.totalorder 0, 0
    // Predicated region
    $region42: #{tpu_custom_call.1} parent=1 // pred_check
      %p104 = pneg %p103
    $region43: #{tpu_custom_call.1} parent=1 // pred_check_branch
      %106 = sbr.rel (%p104) target = $region45
    $region44: #{tpu_custom_call.1} parent=1 // pred_region
      %v107 = vld [vmem:[#allocation10] sm:$0x3]
      %v109 = vlaneseq
      %v110 = vshrl.u32 %v109, 7
      %v111 = vsub.s32 0, %v110
      %v112 = vrot.slane %v107, %v111
      %v113 = vlaneseq
      %v114 = vshrl.u32 %v113, 7
      %v115 = vsub.s32 1, %v114
      %v116 = vrot.slane %v107, %v115
      %p119 = scmp.eq.s32.totalorder 0, 0
      %s120 = scalar_select %p119, 1, 0
      %v121 = vstv %s120
      %vm122 = vcmp.eq.s32.totalorder %v121, 1
      %v123 = vsel %vm122, %v112, 0.0
      %v124 = vsel %vm122, %v116, 0.0
      %125 = vst [vmem:[#allocation11] sm:$0xff] %v123
      %126 = vst [vmem:[#allocation11 + $0x8] sm:$0xff] %v124
    $region45: #{tpu_custom_call.1} parent=1 // pred_fallthru
      _
    %v127 = vld [vmem:[#allocation2] sm:$0xf]
    %v128 = vld [vmem:[#allocation5] sm:$0xff]
    %v129 = vld [vmem:[#allocation5 + $0x8] sm:$0xff]
    %v130 = vld [vmem:[#allocation5 + $0x10] sm:$0xff]
    %v131 = vld [vmem:[#allocation5 + $0x18] sm:$0xff]
    %v132 = vld [vmem:[#allocation5 + $0x20] sm:$0xff]
    %v133 = vld [vmem:[#allocation5 + $0x28] sm:$0xff]
    %v134 = vld [vmem:[#allocation5 + $0x30] sm:$0xff]
    %v135 = vld [vmem:[#allocation5 + $0x38] sm:$0xff]
    %v136 = vld [vmem:[#allocation5 + $0x40] sm:$0xff]
    %v137 = vld [vmem:[#allocation5 + $0x48] sm:$0xff]
    %v138 = vld [vmem:[#allocation5 + $0x50] sm:$0xff]
    %v139 = vld [vmem:[#allocation5 + $0x58] sm:$0xff]
    %v140 = vld [vmem:[#allocation5 + $0x60] sm:$0xff]
    %v141 = vld [vmem:[#allocation5 + $0x68] sm:$0xff]
    %v142 = vld [vmem:[#allocation5 + $0x70] sm:$0xff]
    %v143 = vld [vmem:[#allocation5 + $0x78] sm:$0xff]
    %v144 = vld [vmem:[#allocation5 + $0x80] sm:$0xff]
    %v145 = vld [vmem:[#allocation5 + $0x88] sm:$0xff]
    %v146 = vld [vmem:[#allocation5 + $0x90] sm:$0xff]
    %v147 = vld [vmem:[#allocation5 + $0x98] sm:$0xff]
    %v148 = vld [vmem:[#allocation5 + $0xa0] sm:$0xff]
    %v149 = vld [vmem:[#allocation5 + $0xa8] sm:$0xff]
    %v150 = vld [vmem:[#allocation5 + $0xb0] sm:$0xff]
    %v151 = vld [vmem:[#allocation5 + $0xb8] sm:$0xff]
    %v152 = vld [vmem:[#allocation5 + $0xc0] sm:$0xff]
    %v153 = vld [vmem:[#allocation5 + $0xc8] sm:$0xff]
    %v154 = vld [vmem:[#allocation5 + $0xd0] sm:$0xff]
    %v155 = vld [vmem:[#allocation5 + $0xd8] sm:$0xff]
    %v156 = vld [vmem:[#allocation5 + $0xe0] sm:$0xff]
    %v157 = vld [vmem:[#allocation5 + $0xe8] sm:$0xff]
    %v158 = vld [vmem:[#allocation5 + $0xf0] sm:$0xff]
    %v159 = vld [vmem:[#allocation5 + $0xf8] sm:$0xff]
    %v160 = vld [vmem:[#allocation5 + $0x100] sm:$0xff]
    %v161 = vld [vmem:[#allocation5 + $0x108] sm:$0xff]
    %v162 = vld [vmem:[#allocation5 + $0x110] sm:$0xff]
    %v163 = vld [vmem:[#allocation5 + $0x118] sm:$0xff]
    %v164 = vld [vmem:[#allocation5 + $0x120] sm:$0xff]
    %v165 = vld [vmem:[#allocation5 + $0x128] sm:$0xff]
    %v166 = vld [vmem:[#allocation5 + $0x130] sm:$0xff]
    %v167 = vld [vmem:[#allocation5 + $0x138] sm:$0xff]
    %v168 = vld [vmem:[#allocation5 + $0x140] sm:$0xff]
    %v169 = vld [vmem:[#allocation5 + $0x148] sm:$0xff]
    %v170 = vld [vmem:[#allocation5 + $0x150] sm:$0xff]
    %v171 = vld [vmem:[#allocation5 + $0x158] sm:$0xff]
    %v172 = vld [vmem:[#allocation5 + $0x160] sm:$0xff]
    %v173 = vld [vmem:[#allocation5 + $0x168] sm:$0xff]
    %v174 = vld [vmem:[#allocation5 + $0x170] sm:$0xff]
    %v175 = vld [vmem:[#allocation5 + $0x178] sm:$0xff]
    %v176 = vld [vmem:[#allocation5 + $0x180] sm:$0xff]
    %v177 = vld [vmem:[#allocation5 + $0x188] sm:$0xff]
    %v178 = vld [vmem:[#allocation5 + $0x190] sm:$0xff]
    %v179 = vld [vmem:[#allocation5 + $0x198] sm:$0xff]
    %v180 = vld [vmem:[#allocation5 + $0x1a0] sm:$0xff]
    %v181 = vld [vmem:[#allocation5 + $0x1a8] sm:$0xff]
    %v182 = vld [vmem:[#allocation5 + $0x1b0] sm:$0xff]
    %v183 = vld [vmem:[#allocation5 + $0x1b8] sm:$0xff]
    %v184 = vld [vmem:[#allocation5 + $0x1c0] sm:$0xff]
    %v185 = vld [vmem:[#allocation5 + $0x1c8] sm:$0xff]
    %v186 = vld [vmem:[#allocation5 + $0x1d0] sm:$0xff]
    %v187 = vld [vmem:[#allocation5 + $0x1d8] sm:$0xff]
    %v188 = vld [vmem:[#allocation5 + $0x1e0] sm:$0xff]
    %v189 = vld [vmem:[#allocation5 + $0x1e8] sm:$0xff]
    %v190 = vld [vmem:[#allocation5 + $0x1f0] sm:$0xff]
    %v191 = vld [vmem:[#allocation5 + $0x1f8] sm:$0xff]
    %v192 = vld [vmem:[#allocation5 + $0x200] sm:$0xff]
    %v193 = vld [vmem:[#allocation5 + $0x208] sm:$0xff]
    %v194 = vld [vmem:[#allocation5 + $0x210] sm:$0xff]
    %v195 = vld [vmem:[#allocation5 + $0x218] sm:$0xff]
    %v196 = vld [vmem:[#allocation5 + $0x220] sm:$0xff]
    %v197 = vld [vmem:[#allocation5 + $0x228] sm:$0xff]
    %v198 = vld [vmem:[#allocation5 + $0x230] sm:$0xff]
    %v199 = vld [vmem:[#allocation5 + $0x238] sm:$0xff]
    %v200 = vld [vmem:[#allocation5 + $0x240] sm:$0xff]
    %v201 = vld [vmem:[#allocation5 + $0x248] sm:$0xff]
    %v202 = vld [vmem:[#allocation5 + $0x250] sm:$0xff]
    %v203 = vld [vmem:[#allocation5 + $0x258] sm:$0xff]
    %v204 = vld [vmem:[#allocation5 + $0x260] sm:$0xff]
    %v205 = vld [vmem:[#allocation5 + $0x268] sm:$0xff]
    %v206 = vld [vmem:[#allocation5 + $0x270] sm:$0xff]
    %v207 = vld [vmem:[#allocation5 + $0x278] sm:$0xff]
    %v208 = vld [vmem:[#allocation5 + $0x280] sm:$0xff]
    %v209 = vld [vmem:[#allocation5 + $0x288] sm:$0xff]
    %v210 = vld [vmem:[#allocation5 + $0x290] sm:$0xff]
    %v211 = vld [vmem:[#allocation5 + $0x298] sm:$0xff]
    %v212 = vld [vmem:[#allocation5 + $0x2a0] sm:$0xff]
    %v213 = vld [vmem:[#allocation5 + $0x2a8] sm:$0xff]
    %v214 = vld [vmem:[#allocation5 + $0x2b0] sm:$0xff]
    %v215 = vld [vmem:[#allocation5 + $0x2b8] sm:$0xff]
    %v216 = vld [vmem:[#allocation5 + $0x2c0] sm:$0xff]
    %v217 = vld [vmem:[#allocation5 + $0x2c8] sm:$0xff]
    %v218 = vld [vmem:[#allocation5 + $0x2d0] sm:$0xff]
    %v219 = vld [vmem:[#allocation5 + $0x2d8] sm:$0xff]
    %v220 = vld [vmem:[#allocation5 + $0x2e0] sm:$0xff]
    %v221 = vld [vmem:[#allocation5 + $0x2e8] sm:$0xff]
    %v222 = vld [vmem:[#allocation5 + $0x2f0] sm:$0xff]
    %v223 = vld [vmem:[#allocation5 + $0x2f8] sm:$0xff]
    %v224 = vld [vmem:[#allocation5 + $0x300] sm:$0xff]
    %v225 = vld [vmem:[#allocation5 + $0x308] sm:$0xff]
    %v226 = vld [vmem:[#allocation5 + $0x310] sm:$0xff]
    %v227 = vld [vmem:[#allocation5 + $0x318] sm:$0xff]
    %v228 = vld [vmem:[#allocation5 + $0x320] sm:$0xff]
    %v229 = vld [vmem:[#allocation5 + $0x328] sm:$0xff]
    %v230 = vld [vmem:[#allocation5 + $0x330] sm:$0xff]
    %v231 = vld [vmem:[#allocation5 + $0x338] sm:$0xff]
    %v232 = vld [vmem:[#allocation5 + $0x340] sm:$0xff]
    %v233 = vld [vmem:[#allocation5 + $0x348] sm:$0xff]
    %v234 = vld [vmem:[#allocation5 + $0x350] sm:$0xff]
    %v235 = vld [vmem:[#allocation5 + $0x358] sm:$0xff]
    %v236 = vld [vmem:[#allocation5 + $0x360] sm:$0xff]
    %v237 = vld [vmem:[#allocation5 + $0x368] sm:$0xff]
    %v238 = vld [vmem:[#allocation5 + $0x370] sm:$0xff]
    %v239 = vld [vmem:[#allocation5 + $0x378] sm:$0xff]
    %v240 = vld [vmem:[#allocation5 + $0x380] sm:$0xff]
    %v241 = vld [vmem:[#allocation5 + $0x388] sm:$0xff]
    %v242 = vld [vmem:[#allocation5 + $0x390] sm:$0xff]
    %v243 = vld [vmem:[#allocation5 + $0x398] sm:$0xff]
    %v244 = vld [vmem:[#allocation5 + $0x3a0] sm:$0xff]
    %v245 = vld [vmem:[#allocation5 + $0x3a8] sm:$0xff]
    %v246 = vld [vmem:[#allocation5 + $0x3b0] sm:$0xff]
    %v247 = vld [vmem:[#allocation5 + $0x3b8] sm:$0xff]
    %v248 = vld [vmem:[#allocation5 + $0x3c0] sm:$0xff]
    %v249 = vld [vmem:[#allocation5 + $0x3c8] sm:$0xff]
    %v250 = vld [vmem:[#allocation5 + $0x3d0] sm:$0xff]
    %v251 = vld [vmem:[#allocation5 + $0x3d8] sm:$0xff]
    %v252 = vld [vmem:[#allocation5 + $0x3e0] sm:$0xff]
    %v253 = vld [vmem:[#allocation5 + $0x3e8] sm:$0xff]
    %v254 = vld [vmem:[#allocation5 + $0x3f0] sm:$0xff]
    %v255 = vld [vmem:[#allocation5 + $0x3f8] sm:$0xff]
    %v384 = vunpack.c.l.b16 %v128
    %v385 = vunpack.c.h.b16 %v128
    %v386 = vunpack.c.l.b16 %v129
    %v387 = vunpack.c.h.b16 %v129
    %v388 = vunpack.c.l.b16 %v130
    %v389 = vunpack.c.h.b16 %v130
    %v390 = vunpack.c.l.b16 %v131
    %v391 = vunpack.c.h.b16 %v131
    %v392 = vunpack.c.l.b16 %v132
    %v393 = vunpack.c.h.b16 %v132
    %v394 = vunpack.c.l.b16 %v133
    %v395 = vunpack.c.h.b16 %v133
    %v396 = vunpack.c.l.b16 %v134
    %v397 = vunpack.c.h.b16 %v134
    %v398 = vunpack.c.l.b16 %v135
    %v399 = vunpack.c.h.b16 %v135
    %v400 = vunpack.c.l.b16 %v136
    %v401 = vunpack.c.h.b16 %v136
    %v402 = vunpack.c.l.b16 %v137
    %v403 = vunpack.c.h.b16 %v137
    %v404 = vunpack.c.l.b16 %v138
    %v405 = vunpack.c.h.b16 %v138
    %v406 = vunpack.c.l.b16 %v139
    %v407 = vunpack.c.h.b16 %v139
    %v408 = vunpack.c.l.b16 %v140
    %v409 = vunpack.c.h.b16 %v140
    %v410 = vunpack.c.l.b16 %v141
    %v411 = vunpack.c.h.b16 %v141
    %v412 = vunpack.c.l.b16 %v142
    %v413 = vunpack.c.h.b16 %v142
    %v414 = vunpack.c.l.b16 %v143
    %v415 = vunpack.c.h.b16 %v143
    %v416 = vunpack.c.l.b16 %v144
    %v417 = vunpack.c.h.b16 %v144
    %v418 = vunpack.c.l.b16 %v145
    %v419 = vunpack.c.h.b16 %v145
    %v420 = vunpack.c.l.b16 %v146
    %v421 = vunpack.c.h.b16 %v146
    %v422 = vunpack.c.l.b16 %v147
    %v423 = vunpack.c.h.b16 %v147
    %v424 = vunpack.c.l.b16 %v148
    %v425 = vunpack.c.h.b16 %v148
    %v426 = vunpack.c.l.b16 %v149
    %v427 = vunpack.c.h.b16 %v149
    %v428 = vunpack.c.l.b16 %v150
    %v429 = vunpack.c.h.b16 %v150
    %v430 = vunpack.c.l.b16 %v151
    %v431 = vunpack.c.h.b16 %v151
    %v432 = vunpack.c.l.b16 %v152
    %v433 = vunpack.c.h.b16 %v152
    %v434 = vunpack.c.l.b16 %v153
    %v435 = vunpack.c.h.b16 %v153
    %v436 = vunpack.c.l.b16 %v154
    %v437 = vunpack.c.h.b16 %v154
    %v438 = vunpack.c.l.b16 %v155
    %v439 = vunpack.c.h.b16 %v155
    %v440 = vunpack.c.l.b16 %v156
    %v441 = vunpack.c.h.b16 %v156
    %v442 = vunpack.c.l.b16 %v157
    %v443 = vunpack.c.h.b16 %v157
    %v444 = vunpack.c.l.b16 %v158
    %v445 = vunpack.c.h.b16 %v158
    %v446 = vunpack.c.l.b16 %v159
    %v447 = vunpack.c.h.b16 %v159
    %v448 = vunpack.c.l.b16 %v160
    %v449 = vunpack.c.h.b16 %v160
    %v450 = vunpack.c.l.b16 %v161
    %v451 = vunpack.c.h.b16 %v161
    %v452 = vunpack.c.l.b16 %v162
    %v453 = vunpack.c.h.b16 %v162
    %v454 = vunpack.c.l.b16 %v163
    %v455 = vunpack.c.h.b16 %v163
    %v456 = vunpack.c.l.b16 %v164
    %v457 = vunpack.c.h.b16 %v164
    %v458 = vunpack.c.l.b16 %v165
    %v459 = vunpack.c.h.b16 %v165
    %v460 = vunpack.c.l.b16 %v166
    %v461 = vunpack.c.h.b16 %v166
    %v462 = vunpack.c.l.b16 %v167
    %v463 = vunpack.c.h.b16 %v167
    %v464 = vunpack.c.l.b16 %v168
    %v465 = vunpack.c.h.b16 %v168
    %v466 = vunpack.c.l.b16 %v169
    %v467 = vunpack.c.h.b16 %v169
    %v468 = vunpack.c.l.b16 %v170
    %v469 = vunpack.c.h.b16 %v170
    %v470 = vunpack.c.l.b16 %v171
    %v471 = vunpack.c.h.b16 %v171
    %v472 = vunpack.c.l.b16 %v172
    %v473 = vunpack.c.h.b16 %v172
    %v474 = vunpack.c.l.b16 %v173
    %v475 = vunpack.c.h.b16 %v173
    %v476 = vunpack.c.l.b16 %v174
    %v477 = vunpack.c.h.b16 %v174
    %v478 = vunpack.c.l.b16 %v175
    %v479 = vunpack.c.h.b16 %v175
    %v480 = vunpack.c.l.b16 %v176
    %v481 = vunpack.c.h.b16 %v176
    %v482 = vunpack.c.l.b16 %v177
    %v483 = vunpack.c.h.b16 %v177
    %v484 = vunpack.c.l.b16 %v178
    %v485 = vunpack.c.h.b16 %v178
    %v486 = vunpack.c.l.b16 %v179
    %v487 = vunpack.c.h.b16 %v179
    %v488 = vunpack.c.l.b16 %v180
    %v489 = vunpack.c.h.b16 %v180
    %v490 = vunpack.c.l.b16 %v181
    %v491 = vunpack.c.h.b16 %v181
    %v492 = vunpack.c.l.b16 %v182
    %v493 = vunpack.c.h.b16 %v182
    %v494 = vunpack.c.l.b16 %v183
    %v495 = vunpack.c.h.b16 %v183
    %v496 = vunpack.c.l.b16 %v184
    %v497 = vunpack.c.h.b16 %v184
    %v498 = vunpack.c.l.b16 %v185
    %v499 = vunpack.c.h.b16 %v185
    %v500 = vunpack.c.l.b16 %v186
    %v501 = vunpack.c.h.b16 %v186
    %v502 = vunpack.c.l.b16 %v187
    %v503 = vunpack.c.h.b16 %v187
    %v504 = vunpack.c.l.b16 %v188
    %v505 = vunpack.c.h.b16 %v188
    %v506 = vunpack.c.l.b16 %v189
    %v507 = vunpack.c.h.b16 %v189
    %v508 = vunpack.c.l.b16 %v190
    %v509 = vunpack.c.h.b16 %v190
    %v510 = vunpack.c.l.b16 %v191
    %v511 = vunpack.c.h.b16 %v191
    %v512 = vunpack.c.l.b16 %v192
    %v513 = vunpack.c.h.b16 %v192
    %v514 = vunpack.c.l.b16 %v193
    %v515 = vunpack.c.h.b16 %v193
    %v516 = vunpack.c.l.b16 %v194
    %v517 = vunpack.c.h.b16 %v194
    %v518 = vunpack.c.l.b16 %v195
    %v519 = vunpack.c.h.b16 %v195
    %v520 = vunpack.c.l.b16 %v196
    %v521 = vunpack.c.h.b16 %v196
    %v522 = vunpack.c.l.b16 %v197
    %v523 = vunpack.c.h.b16 %v197
    %v524 = vunpack.c.l.b16 %v198
    %v525 = vunpack.c.h.b16 %v198
    %v526 = vunpack.c.l.b16 %v199
    %v527 = vunpack.c.h.b16 %v199
    %v528 = vunpack.c.l.b16 %v200
    %v529 = vunpack.c.h.b16 %v200
    %v530 = vunpack.c.l.b16 %v201
    %v531 = vunpack.c.h.b16 %v201
    %v532 = vunpack.c.l.b16 %v202
    %v533 = vunpack.c.h.b16 %v202
    %v534 = vunpack.c.l.b16 %v203
    %v535 = vunpack.c.h.b16 %v203
    %v536 = vunpack.c.l.b16 %v204
    %v537 = vunpack.c.h.b16 %v204
    %v538 = vunpack.c.l.b16 %v205
    %v539 = vunpack.c.h.b16 %v205
    %v540 = vunpack.c.l.b16 %v206
    %v541 = vunpack.c.h.b16 %v206
    %v542 = vunpack.c.l.b16 %v207
    %v543 = vunpack.c.h.b16 %v207
    %v544 = vunpack.c.l.b16 %v208
    %v545 = vunpack.c.h.b16 %v208
    %v546 = vunpack.c.l.b16 %v209
    %v547 = vunpack.c.h.b16 %v209
    %v548 = vunpack.c.l.b16 %v210
    %v549 = vunpack.c.h.b16 %v210
    %v550 = vunpack.c.l.b16 %v211
    %v551 = vunpack.c.h.b16 %v211
    %v552 = vunpack.c.l.b16 %v212
    %v553 = vunpack.c.h.b16 %v212
    %v554 = vunpack.c.l.b16 %v213
    %v555 = vunpack.c.h.b16 %v213
    %v556 = vunpack.c.l.b16 %v214
    %v557 = vunpack.c.h.b16 %v214
    %v558 = vunpack.c.l.b16 %v215
    %v559 = vunpack.c.h.b16 %v215
    %v560 = vunpack.c.l.b16 %v216
    %v561 = vunpack.c.h.b16 %v216
    %v562 = vunpack.c.l.b16 %v217
    %v563 = vunpack.c.h.b16 %v217
    %v564 = vunpack.c.l.b16 %v218
    %v565 = vunpack.c.h.b16 %v218
    %v566 = vunpack.c.l.b16 %v219
    %v567 = vunpack.c.h.b16 %v219
    %v568 = vunpack.c.l.b16 %v220
    %v569 = vunpack.c.h.b16 %v220
    %v570 = vunpack.c.l.b16 %v221
    %v571 = vunpack.c.h.b16 %v221
    %v572 = vunpack.c.l.b16 %v222
    %v573 = vunpack.c.h.b16 %v222
    %v574 = vunpack.c.l.b16 %v223
    %v575 = vunpack.c.h.b16 %v223
    %v576 = vunpack.c.l.b16 %v224
    %v577 = vunpack.c.h.b16 %v224
    %v578 = vunpack.c.l.b16 %v225
    %v579 = vunpack.c.h.b16 %v225
    %v580 = vunpack.c.l.b16 %v226
    %v581 = vunpack.c.h.b16 %v226
    %v582 = vunpack.c.l.b16 %v227
    %v583 = vunpack.c.h.b16 %v227
    %v584 = vunpack.c.l.b16 %v228
    %v585 = vunpack.c.h.b16 %v228
    %v586 = vunpack.c.l.b16 %v229
    %v587 = vunpack.c.h.b16 %v229
    %v588 = vunpack.c.l.b16 %v230
    %v589 = vunpack.c.h.b16 %v230
    %v590 = vunpack.c.l.b16 %v231
    %v591 = vunpack.c.h.b16 %v231
    %v592 = vunpack.c.l.b16 %v232
    %v593 = vunpack.c.h.b16 %v232
    %v594 = vunpack.c.l.b16 %v233
    %v595 = vunpack.c.h.b16 %v233
    %v596 = vunpack.c.l.b16 %v234
    %v597 = vunpack.c.h.b16 %v234
    %v598 = vunpack.c.l.b16 %v235
    %v599 = vunpack.c.h.b16 %v235
    %v600 = vunpack.c.l.b16 %v236
    %v601 = vunpack.c.h.b16 %v236
    %v602 = vunpack.c.l.b16 %v237
    %v603 = vunpack.c.h.b16 %v237
    %v604 = vunpack.c.l.b16 %v238
    %v605 = vunpack.c.h.b16 %v238
    %v606 = vunpack.c.l.b16 %v239
    %v607 = vunpack.c.h.b16 %v239
    %v608 = vunpack.c.l.b16 %v240
    %v609 = vunpack.c.h.b16 %v240
    %v610 = vunpack.c.l.b16 %v241
    %v611 = vunpack.c.h.b16 %v241
    %v612 = vunpack.c.l.b16 %v242
    %v613 = vunpack.c.h.b16 %v242
    %v614 = vunpack.c.l.b16 %v243
    %v615 = vunpack.c.h.b16 %v243
    %v616 = vunpack.c.l.b16 %v244
    %v617 = vunpack.c.h.b16 %v244
    %v618 = vunpack.c.l.b16 %v245
    %v619 = vunpack.c.h.b16 %v245
    %v620 = vunpack.c.l.b16 %v246
    %v621 = vunpack.c.h.b16 %v246
    %v622 = vunpack.c.l.b16 %v247
    %v623 = vunpack.c.h.b16 %v247
    %v624 = vunpack.c.l.b16 %v248
    %v625 = vunpack.c.h.b16 %v248
    %v626 = vunpack.c.l.b16 %v249
    %v627 = vunpack.c.h.b16 %v249
    %v628 = vunpack.c.l.b16 %v250
    %v629 = vunpack.c.h.b16 %v250
    %v630 = vunpack.c.l.b16 %v251
    %v631 = vunpack.c.h.b16 %v251
    %v632 = vunpack.c.l.b16 %v252
    %v633 = vunpack.c.h.b16 %v252
    %v634 = vunpack.c.l.b16 %v253
    %v635 = vunpack.c.h.b16 %v253
    %v636 = vunpack.c.l.b16 %v254
    %v637 = vunpack.c.h.b16 %v254
    %v638 = vunpack.c.l.b16 %v255
    %v639 = vunpack.c.h.b16 %v255
    %v640 = vpack.c.b16 %v416, %v384
    %v641 = vpack.c.b16 %v417, %v385
    %v642 = vpack.c.b16 %v418, %v386
    %v643 = vpack.c.b16 %v419, %v387
    %v644 = vpack.c.b16 %v420, %v388
    %v645 = vpack.c.b16 %v421, %v389
    %v646 = vpack.c.b16 %v422, %v390
    %v647 = vpack.c.b16 %v423, %v391
    %v648 = vpack.c.b16 %v424, %v392
    %v649 = vpack.c.b16 %v425, %v393
    %v650 = vpack.c.b16 %v426, %v394
    %v651 = vpack.c.b16 %v427, %v395
    %v652 = vpack.c.b16 %v428, %v396
    %v653 = vpack.c.b16 %v429, %v397
    %v654 = vpack.c.b16 %v430, %v398
    %v655 = vpack.c.b16 %v431, %v399
    %v656 = vpack.c.b16 %v432, %v400
    %v657 = vpack.c.b16 %v433, %v401
    %v658 = vpack.c.b16 %v434, %v402
    %v659 = vpack.c.b16 %v435, %v403
    %v660 = vpack.c.b16 %v436, %v404
    %v661 = vpack.c.b16 %v437, %v405
    %v662 = vpack.c.b16 %v438, %v406
    %v663 = vpack.c.b16 %v439, %v407
    %v664 = vpack.c.b16 %v440, %v408
    %v665 = vpack.c.b16 %v441, %v409
    %v666 = vpack.c.b16 %v442, %v410
    %v667 = vpack.c.b16 %v443, %v411
    %v668 = vpack.c.b16 %v444, %v412
    %v669 = vpack.c.b16 %v445, %v413
    %v670 = vpack.c.b16 %v446, %v414
    %v671 = vpack.c.b16 %v447, %v415
    %v672 = vpack.c.b16 %v480, %v448
    %v673 = vpack.c.b16 %v481, %v449
    %v674 = vpack.c.b16 %v482, %v450
    %v675 = vpack.c.b16 %v483, %v451
    %v676 = vpack.c.b16 %v484, %v452
    %v677 = vpack.c.b16 %v485, %v453
    %v678 = vpack.c.b16 %v486, %v454
    %v679 = vpack.c.b16 %v487, %v455
    %v680 = vpack.c.b16 %v488, %v456
    %v681 = vpack.c.b16 %v489, %v457
    %v682 = vpack.c.b16 %v490, %v458
    %v683 = vpack.c.b16 %v491, %v459
    %v684 = vpack.c.b16 %v492, %v460
    %v685 = vpack.c.b16 %v493, %v461
    %v686 = vpack.c.b16 %v494, %v462
    %v687 = vpack.c.b16 %v495, %v463
    %v688 = vpack.c.b16 %v496, %v464
    %v689 = vpack.c.b16 %v497, %v465
    %v690 = vpack.c.b16 %v498, %v466
    %v691 = vpack.c.b16 %v499, %v467
    %v692 = vpack.c.b16 %v500, %v468
    %v693 = vpack.c.b16 %v501, %v469
    %v694 = vpack.c.b16 %v502, %v470
    %v695 = vpack.c.b16 %v503, %v471
    %v696 = vpack.c.b16 %v504, %v472
    %v697 = vpack.c.b16 %v505, %v473
    %v698 = vpack.c.b16 %v506, %v474
    %v699 = vpack.c.b16 %v507, %v475
    %v700 = vpack.c.b16 %v508, %v476
    %v701 = vpack.c.b16 %v509, %v477
    %v702 = vpack.c.b16 %v510, %v478
    %v703 = vpack.c.b16 %v511, %v479
    %v704 = vpack.c.b16 %v544, %v512
    %v705 = vpack.c.b16 %v545, %v513
    %v706 = vpack.c.b16 %v546, %v514
    %v707 = vpack.c.b16 %v547, %v515
    %v708 = vpack.c.b16 %v548, %v516
    %v709 = vpack.c.b16 %v549, %v517
    %v710 = vpack.c.b16 %v550, %v518
    %v711 = vpack.c.b16 %v551, %v519
    %v712 = vpack.c.b16 %v552, %v520
    %v713 = vpack.c.b16 %v553, %v521
    %v714 = vpack.c.b16 %v554, %v522
    %v715 = vpack.c.b16 %v555, %v523
    %v716 = vpack.c.b16 %v556, %v524
    %v717 = vpack.c.b16 %v557, %v525
    %v718 = vpack.c.b16 %v558, %v526
    %v719 = vpack.c.b16 %v559, %v527
    %v720 = vpack.c.b16 %v560, %v528
    %v721 = vpack.c.b16 %v561, %v529
    %v722 = vpack.c.b16 %v562, %v530
    %v723 = vpack.c.b16 %v563, %v531
    %v724 = vpack.c.b16 %v564, %v532
    %v725 = vpack.c.b16 %v565, %v533
    %v726 = vpack.c.b16 %v566, %v534
    %v727 = vpack.c.b16 %v567, %v535
    %v728 = vpack.c.b16 %v568, %v536
    %v729 = vpack.c.b16 %v569, %v537
    %v730 = vpack.c.b16 %v570, %v538
    %v731 = vpack.c.b16 %v571, %v539
    %v732 = vpack.c.b16 %v572, %v540
    %v733 = vpack.c.b16 %v573, %v541
    %v734 = vpack.c.b16 %v574, %v542
    %v735 = vpack.c.b16 %v575, %v543
    %v736 = vpack.c.b16 %v608, %v576
    %v737 = vpack.c.b16 %v609, %v577
    %v738 = vpack.c.b16 %v610, %v578
    %v739 = vpack.c.b16 %v611, %v579
    %v740 = vpack.c.b16 %v612, %v580
    %v741 = vpack.c.b16 %v613, %v581
    %v742 = vpack.c.b16 %v614, %v582
    %v743 = vpack.c.b16 %v615, %v583
    %v744 = vpack.c.b16 %v616, %v584
    %v745 = vpack.c.b16 %v617, %v585
    %v746 = vpack.c.b16 %v618, %v586
    %v747 = vpack.c.b16 %v619, %v587
    %v748 = vpack.c.b16 %v620, %v588
    %v749 = vpack.c.b16 %v621, %v589
    %v750 = vpack.c.b16 %v622, %v590
    %v751 = vpack.c.b16 %v623, %v591
    %v752 = vpack.c.b16 %v624, %v592
    %v753 = vpack.c.b16 %v625, %v593
    %v754 = vpack.c.b16 %v626, %v594
    %v755 = vpack.c.b16 %v627, %v595
    %v756 = vpack.c.b16 %v628, %v596
    %v757 = vpack.c.b16 %v629, %v597
    %v758 = vpack.c.b16 %v630, %v598
    %v759 = vpack.c.b16 %v631, %v599
    %v760 = vpack.c.b16 %v632, %v600
    %v761 = vpack.c.b16 %v633, %v601
    %v762 = vpack.c.b16 %v634, %v602
    %v763 = vpack.c.b16 %v635, %v603
    %v764 = vpack.c.b16 %v636, %v604
    %v765 = vpack.c.b16 %v637, %v605
    %v766 = vpack.c.b16 %v638, %v606
    %v767 = vpack.c.b16 %v639, %v607
    %vm896 = vcmask 523264
    %v898 = vsel %vm896, %v127, 0
    %900 = vmatprep.subr.bf16.mxu0 %v641
    %901 = vmatpush1.bf16.msra.mxu0 %v640
    %902 = vmatprep.subr.bf16.mxu0 %v673
    %903 = vmatpush1.bf16.msra.mxu0 %v672
    %904 = vmatprep.subr.bf16.mxu0 %v705
    %905 = vmatpush1.bf16.msra.mxu0 %v704
    %906 = vmatprep.subr.bf16.mxu0 %v737
    %907 = vmatpush1.bf16.msra.mxu0 %v736
    %908 = vmatprep.subr.bf16.mxu0 0
    %909 = vmatpush1.bf16.msra.mxu0 0
    %910 = vmatprep.subr.bf16.mxu0 0
    %911 = vmatpush1.bf16.msra.mxu0 0
    %912 = vmatprep.subr.bf16.mxu0 0
    %913 = vmatpush1.bf16.msra.mxu0 0
    %914 = vmatprep.subr.bf16.mxu0 0
    %915 = vmatpush1.bf16.msra.mxu0 0
    %916 = vmatprep.subr.bf16.mxu0 0
    %917 = vmatpush1.bf16.msra.mxu0 0
    %918 = vmatprep.subr.bf16.mxu0 0
    %919 = vmatpush1.bf16.msra.mxu0 0
    %920 = vmatprep.subr.bf16.mxu0 0
    %921 = vmatpush1.bf16.msra.mxu0 0
    %922 = vmatprep.subr.bf16.mxu0 0
    %923 = vmatpush1.bf16.msra.mxu0 0
    %924 = vmatprep.subr.bf16.mxu0 0
    %925 = vmatpush1.bf16.msra.mxu0 0
    %926 = vmatprep.subr.bf16.mxu0 0
    %927 = vmatpush1.bf16.msra.mxu0 0
    %928 = vmatprep.subr.bf16.mxu0 0
    %929 = vmatpush1.bf16.msra.mxu0 0
    %930 = vmatprep.subr.bf16.mxu0 0
    %931 = vmatpush1.bf16.msra.mxu0 0
    %932 = vmatprep.mubr.bf16.mxu0 0
    %933 = vmatmul.mubr.bf16.gmra.mrb[0].mxu0 %v898
    %v934 = vpop.f32.mrb[0].mxu0
    %v935 = vadd.f32 0.0, %v934
    %v936 = vpop.f32.mrb[0].mxu0
    %v937 = vadd.f32 0.0, %v936
    %v938 = vpop.f32.mrb[0].mxu0
    %v939 = vpop.f32.mrb[0].mxu0
    %940 = vdwg.mxu0
    %941 = vmatprep.subr.bf16.mxu0 %v643
    %942 = vmatpush1.bf16.msra.mxu0 %v642
    %943 = vmatprep.subr.bf16.mxu0 %v675
    %944 = vmatpush1.bf16.msra.mxu0 %v674
    %945 = vmatprep.subr.bf16.mxu0 %v707
    %946 = vmatpush1.bf16.msra.mxu0 %v706
    %947 = vmatprep.subr.bf16.mxu0 %v739
    %948 = vmatpush1.bf16.msra.mxu0 %v738
    %949 = vmatprep.subr.bf16.mxu0 0
    %950 = vmatpush1.bf16.msra.mxu0 0
    %951 = vmatprep.subr.bf16.mxu0 0
    %952 = vmatpush1.bf16.msra.mxu0 0
    %953 = vmatprep.subr.bf16.mxu0 0
    %954 = vmatpush1.bf16.msra.mxu0 0
    %955 = vmatprep.subr.bf16.mxu0 0
    %956 = vmatpush1.bf16.msra.mxu0 0
    %957 = vmatprep.subr.bf16.mxu0 0
    %958 = vmatpush1.bf16.msra.mxu0 0
    %959 = vmatprep.subr.bf16.mxu0 0
    %960 = vmatpush1.bf16.msra.mxu0 0
    %961 = vmatprep.subr.bf16.mxu0 0
    %962 = vmatpush1.bf16.msra.mxu0 0
    %963 = vmatprep.subr.bf16.mxu0 0
    %964 = vmatpush1.bf16.msra.mxu0 0
    %965 = vmatprep.subr.bf16.mxu0 0
    %966 = vmatpush1.bf16.msra.mxu0 0
    %967 = vmatprep.subr.bf16.mxu0 0
    %968 = vmatpush1.bf16.msra.mxu0 0
    %969 = vmatprep.subr.bf16.mxu0 0
    %970 = vmatpush1.bf16.msra.mxu0 0
    %971 = vmatprep.subr.bf16.mxu0 0
    %972 = vmatpush1.bf16.msra.mxu0 0
    %973 = vmatprep.mubr.bf16.mxu0 0
    %974 = vmatmul.mubr.bf16.gmra.mrb[0].mxu0 %v898
    %v975 = vpop.f32.mrb[0].mxu0
    %v976 = vadd.f32 0.0, %v975
    %v977 = vpop.f32.mrb[0].mxu0
    %v978 = vadd.f32 0.0, %v977
    %v979 = vpop.f32.mrb[0].mxu0
    %v980 = vpop.f32.mrb[0].mxu0
    %981 = vdwg.mxu0
    %982 = vmatprep.subr.bf16.mxu0 %v645
    %983 = vmatpush1.bf16.msra.mxu0 %v644
    %984 = vmatprep.subr.bf16.mxu0 %v677
    %985 = vmatpush1.bf16.msra.mxu0 %v676
    %986 = vmatprep.subr.bf16.mxu0 %v709
    %987 = vmatpush1.bf16.msra.mxu0 %v708
    %988 = vmatprep.subr.bf16.mxu0 %v741
    %989 = vmatpush1.bf16.msra.mxu0 %v740
    %990 = vmatprep.subr.bf16.mxu0 0
    %991 = vmatpush1.bf16.msra.mxu0 0
    %992 = vmatprep.subr.bf16.mxu0 0
    %993 = vmatpush1.bf16.msra.mxu0 0
    %994 = vmatprep.subr.bf16.mxu0 0
    %995 = vmatpush1.bf16.msra.mxu0 0
    %996 = vmatprep.subr.bf16.mxu0 0
    %997 = vmatpush1.bf16.msra.mxu0 0
    %998 = vmatprep.subr.bf16.mxu0 0
    %999 = vmatpush1.bf16.msra.mxu0 0
    %1000 = vmatprep.subr.bf16.mxu0 0
    %1001 = vmatpush1.bf16.msra.mxu0 0
    %1002 = vmatprep.subr.bf16.mxu0 0
    %1003 = vmatpush1.bf16.msra.mxu0 0
    %1004 = vmatprep.subr.bf16.mxu0 0
    %1005 = vmatpush1.bf16.msra.mxu0 0
    %1006 = vmatprep.subr.bf16.mxu0 0
    %1007 = vmatpush1.bf16.msra.mxu0 0
    %1008 = vmatprep.subr.bf16.mxu0 0
    %1009 = vmatpush1.bf16.msra.mxu0 0
    %1010 = vmatprep.subr.bf16.mxu0 0
    %1011 = vmatpush1.bf16.msra.mxu0 0
    %1012 = vmatprep.subr.bf16.mxu0 0
    %1013 = vmatpush1.bf16.msra.mxu0 0
    %1014 = vmatprep.mubr.bf16.mxu0 0
    %1015 = vmatmul.mubr.bf16.gmra.mrb[0].mxu0 %v898
    %v1016 = vpop.f32.mrb[0].mxu0
    %v1017 = vadd.f32 0.0, %v1016
    %v1018 = vpop.f32.mrb[0].mxu0
    %v1019 = vadd.f32 0.0, %v1018
    %v1020 = vpop.f32.mrb[0].mxu0
    %v1021 = vpop.f32.mrb[0].mxu0
    %1022 = vdwg.mxu0
    %1023 = vmatprep.subr.bf16.mxu0 %v647
    %1024 = vmatpush1.bf16.msra.mxu0 %v646
    %1025 = vmatprep.subr.bf16.mxu0 %v679
    %1026 = vmatpush1.bf16.msra.mxu0 %v678
    %1027 = vmatprep.subr.bf16.mxu0 %v711
    %1028 = vmatpush1.bf16.msra.mxu0 %v710
    %1029 = vmatprep.subr.bf16.mxu0 %v743
    %1030 = vmatpush1.bf16.msra.mxu0 %v742
    %1031 = vmatprep.subr.bf16.mxu0 0
    %1032 = vmatpush1.bf16.msra.mxu0 0
    %1033 = vmatprep.subr.bf16.mxu0 0
    %1034 = vmatpush1.bf16.msra.mxu0 0
    %1035 = vmatprep.subr.bf16.mxu0 0
    %1036 = vmatpush1.bf16.msra.mxu0 0
    %1037 = vmatprep.subr.bf16.mxu0 0
    %1038 = vmatpush1.bf16.msra.mxu0 0
    %1039 = vmatprep.subr.bf16.mxu0 0
    %1040 = vmatpush1.bf16.msra.mxu0 0
    %1041 = vmatprep.subr.bf16.mxu0 0
    %1042 = vmatpush1.bf16.msra.mxu0 0
    %1043 = vmatprep.subr.bf16.mxu0 0
    %1044 = vmatpush1.bf16.msra.mxu0 0
    %1045 = vmatprep.subr.bf16.mxu0 0
    %1046 = vmatpush1.bf16.msra.mxu0 0
    %1047 = vmatprep.subr.bf16.mxu0 0
    %1048 = vmatpush1.bf16.msra.mxu0 0
    %1049 = vmatprep.subr.bf16.mxu0 0
    %1050 = vmatpush1.bf16.msra.mxu0 0
    %1051 = vmatprep.subr.bf16.mxu0 0
    %1052 = vmatpush1.bf16.msra.mxu0 0
    %1053 = vmatprep.subr.bf16.mxu0 0
    %1054 = vmatpush1.bf16.msra.mxu0 0
    %1055 = vmatprep.mubr.bf16.mxu0 0
    %1056 = vmatmul.mubr.bf16.gmra.mrb[0].mxu0 %v898
    %v1057 = vpop.f32.mrb[0].mxu0
    %v1058 = vadd.f32 0.0, %v1057
    %v1059 = vpop.f32.mrb[0].mxu0
    %v1060 = vadd.f32 0.0, %v1059
    %v1061 = vpop.f32.mrb[0].mxu0
    %v1062 = vpop.f32.mrb[0].mxu0
    %1063 = vdwg.mxu0
    %1064 = vmatprep.subr.bf16.mxu0 %v649
    %1065 = vmatpush1.bf16.msra.mxu0 %v648
    %1066 = vmatprep.subr.bf16.mxu0 %v681
    %1067 = vmatpush1.bf16.msra.mxu0 %v680
    %1068 = vmatprep.subr.bf16.mxu0 %v713
    %1069 = vmatpush1.bf16.msra.mxu0 %v712
    %1070 = vmatprep.subr.bf16.mxu0 %v745
    %1071 = vmatpush1.bf16.msra.mxu0 %v744
    %1072 = vmatprep.subr.bf16.mxu0 0
    %1073 = vmatpush1.bf16.msra.mxu0 0
    %1074 = vmatprep.subr.bf16.mxu0 0
    %1075 = vmatpush1.bf16.msra.mxu0 0
    %1076 = vmatprep.subr.bf16.mxu0 0
    %1077 = vmatpush1.bf16.msra.mxu0 0
    %1078 = vmatprep.subr.bf16.mxu0 0
    %1079 = vmatpush1.bf16.msra.mxu0 0
    %1080 = vmatprep.subr.bf16.mxu0 0
    %1081 = vmatpush1.bf16.msra.mxu0 0
    %1082 = vmatprep.subr.bf16.mxu0 0
    %1083 = vmatpush1.bf16.msra.mxu0 0
    %1084 = vmatprep.subr.bf16.mxu0 0
    %1085 = vmatpush1.bf16.msra.mxu0 0
    %1086 = vmatprep.subr.bf16.mxu0 0
    %1087 = vmatpush1.bf16.msra.mxu0 0
    %1088 = vmatprep.subr.bf16.mxu0 0
    %1089 = vmatpush1.bf16.msra.mxu0 0
    %1090 = vmatprep.subr.bf16.mxu0 0
    %1091 = vmatpush1.bf16.msra.mxu0 0
    %1092 = vmatprep.subr.bf16.mxu0 0
    %1093 = vmatpush1.bf16.msra.mxu0 0
    %1094 = vmatprep.subr.bf16.mxu0 0
    %1095 = vmatpush1.bf16.msra.mxu0 0
    %1096 = vmatprep.mubr.bf16.mxu0 0
    %1097 = vmatmul.mubr.bf16.gmra.mrb[0].mxu0 %v898
    %v1098 = vpop.f32.mrb[0].mxu0
    %v1099 = vadd.f32 0.0, %v1098
    %v1100 = vpop.f32.mrb[0].mxu0
    %v1101 = vadd.f32 0.0, %v1100
    %v1102 = vpop.f32.mrb[0].mxu0
    %v1103 = vpop.f32.mrb[0].mxu0
    %1104 = vdwg.mxu0
    %1105 = vmatprep.subr.bf16.mxu0 %v651
    %1106 = vmatpush1.bf16.msra.mxu0 %v650
    %1107 = vmatprep.subr.bf16.mxu0 %v683
    %1108 = vmatpush1.bf16.msra.mxu0 %v682
    %1109 = vmatprep.subr.bf16.mxu0 %v715
    %1110 = vmatpush1.bf16.msra.mxu0 %v714
    %1111 = vmatprep.subr.bf16.mxu0 %v747
    %1112 = vmatpush1.bf16.msra.mxu0 %v746
    %1113 = vmatprep.subr.bf16.mxu0 0
    %1114 = vmatpush1.bf16.msra.mxu0 0
    %1115 = vmatprep.subr.bf16.mxu0 0
    %1116 = vmatpush1.bf16.msra.mxu0 0
    %1117 = vmatprep.subr.bf16.mxu0 0
    %1118 = vmatpush1.bf16.msra.mxu0 0
    %1119 = vmatprep.subr.bf16.mxu0 0
    %1120 = vmatpush1.bf16.msra.mxu0 0
    %1121 = vmatprep.subr.bf16.mxu0 0
    %1122 = vmatpush1.bf16.msra.mxu0 0
    %1123 = vmatprep.subr.bf16.mxu0 0
    %1124 = vmatpush1.bf16.msra.mxu0 0
    %1125 = vmatprep.subr.bf16.mxu0 0
    %1126 = vmatpush1.bf16.msra.mxu0 0
    %1127 = vmatprep.subr.bf16.mxu0 0
    %1128 = vmatpush1.bf16.msra.mxu0 0
    %1129 = vmatprep.subr.bf16.mxu0 0
    %1130 = vmatpush1.bf16.msra.mxu0 0
    %1131 = vmatprep.subr.bf16.mxu0 0
    %1132 = vmatpush1.bf16.msra.mxu0 0
    %1133 = vmatprep.subr.bf16.mxu0 0
    %1134 = vmatpush1.bf16.msra.mxu0 0
    %1135 = vmatprep.subr.bf16.mxu0 0
    %1136 = vmatpush1.bf16.msra.mxu0 0
    %1137 = vmatprep.mubr.bf16.mxu0 0
    %1138 = vmatmul.mubr.bf16.gmra.mrb[0].mxu0 %v898
    %v1139 = vpop.f32.mrb[0].mxu0
    %v1140 = vadd.f32 0.0, %v1139
    %v1141 = vpop.f32.mrb[0].mxu0
    %v1142 = vadd.f32 0.0, %v1141
    %v1143 = vpop.f32.mrb[0].mxu0
    %v1144 = vpop.f32.mrb[0].mxu0
    %1145 = vdwg.mxu0
    %1146 = vmatprep.subr.bf16.mxu0 %v653
    %1147 = vmatpush1.bf16.msra.mxu0 %v652
    %1148 = vmatprep.subr.bf16.mxu0 %v685
    %1149 = vmatpush1.bf16.msra.mxu0 %v684
    %1150 = vmatprep.subr.bf16.mxu0 %v717
    %1151 = vmatpush1.bf16.msra.mxu0 %v716
    %1152 = vmatprep.subr.bf16.mxu0 %v749
    %1153 = vmatpush1.bf16.msra.mxu0 %v748
    %1154 = vmatprep.subr.bf16.mxu0 0
    %1155 = vmatpush1.bf16.msra.mxu0 0
    %1156 = vmatprep.subr.bf16.mxu0 0
    %1157 = vmatpush1.bf16.msra.mxu0 0
    %1158 = vmatprep.subr.bf16.mxu0 0
    %1159 = vmatpush1.bf16.msra.mxu0 0
    %1160 = vmatprep.subr.bf16.mxu0 0
    %1161 = vmatpush1.bf16.msra.mxu0 0
    %1162 = vmatprep.subr.bf16.mxu0 0
    %1163 = vmatpush1.bf16.msra.mxu0 0
    %1164 = vmatprep.subr.bf16.mxu0 0
    %1165 = vmatpush1.bf16.msra.mxu0 0
    %1166 = vmatprep.subr.bf16.mxu0 0
    %1167 = vmatpush1.bf16.msra.mxu0 0
    %1168 = vmatprep.subr.bf16.mxu0 0
    %1169 = vmatpush1.bf16.msra.mxu0 0
    %1170 = vmatprep.subr.bf16.mxu0 0
    %1171 = vmatpush1.bf16.msra.mxu0 0
    %1172 = vmatprep.subr.bf16.mxu0 0
    %1173 = vmatpush1.bf16.msra.mxu0 0
    %1174 = vmatprep.subr.bf16.mxu0 0
    %1175 = vmatpush1.bf16.msra.mxu0 0
    %1176 = vmatprep.subr.bf16.mxu0 0
    %1177 = vmatpush1.bf16.msra.mxu0 0
    %1178 = vmatprep.mubr.bf16.mxu0 0
    %1179 = vmatmul.mubr.bf16.gmra.mrb[0].mxu0 %v898
    %v1180 = vpop.f32.mrb[0].mxu0
    %v1181 = vadd.f32 0.0, %v1180
    %v1182 = vpop.f32.mrb[0].mxu0
    %v1183 = vadd.f32 0.0, %v1182
    %v1184 = vpop.f32.mrb[0].mxu0
    %v1185 = vpop.f32.mrb[0].mxu0
    %1186 = vdwg.mxu0
    %1187 = vmatprep.subr.bf16.mxu0 %v655
    %1188 = vmatpush1.bf16.msra.mxu0 %v654
    %1189 = vmatprep.subr.bf16.mxu0 %v687
    %1190 = vmatpush1.bf16.msra.mxu0 %v686
    %1191 = vmatprep.subr.bf16.mxu0 %v719
    %1192 = vmatpush1.bf16.msra.mxu0 %v718
    %1193 = vmatprep.subr.bf16.mxu0 %v751
    %1194 = vmatpush1.bf16.msra.mxu0 %v750
    %1195 = vmatprep.subr.bf16.mxu0 0
    %1196 = vmatpush1.bf16.msra.mxu0 0
    %1197 = vmatprep.subr.bf16.mxu0 0
    %1198 = vmatpush1.bf16.msra.mxu0 0
    %1199 = vmatprep.subr.bf16.mxu0 0
    %1200 = vmatpush1.bf16.msra.mxu0 0
    %1201 = vmatprep.subr.bf16.mxu0 0
    %1202 = vmatpush1.bf16.msra.mxu0 0
    %1203 = vmatprep.subr.bf16.mxu0 0
    %1204 = vmatpush1.bf16.msra.mxu0 0
    %1205 = vmatprep.subr.bf16.mxu0 0
    %1206 = vmatpush1.bf16.msra.mxu0 0
    %1207 = vmatprep.subr.bf16.mxu0 0
    %1208 = vmatpush1.bf16.msra.mxu0 0
    %1209 = vmatprep.subr.bf16.mxu0 0
    %1210 = vmatpush1.bf16.msra.mxu0 0
    %1211 = vmatprep.subr.bf16.mxu0 0
    %1212 = vmatpush1.bf16.msra.mxu0 0
    %1213 = vmatprep.subr.bf16.mxu0 0
    %1214 = vmatpush1.bf16.msra.mxu0 0
    %1215 = vmatprep.subr.bf16.mxu0 0
    %1216 = vmatpush1.bf16.msra.mxu0 0
    %1217 = vmatprep.subr.bf16.mxu0 0
    %1218 = vmatpush1.bf16.msra.mxu0 0
    %1219 = vmatprep.mubr.bf16.mxu0 0
    %1220 = vmatmul.mubr.bf16.gmra.mrb[0].mxu0 %v898
    %v1221 = vpop.f32.mrb[0].mxu0
    %v1222 = vadd.f32 0.0, %v1221
    %v1223 = vpop.f32.mrb[0].mxu0
    %v1224 = vadd.f32 0.0, %v1223
    %v1225 = vpop.f32.mrb[0].mxu0
    %v1226 = vpop.f32.mrb[0].mxu0
    %1227 = vdwg.mxu0
    %1228 = vmatprep.subr.bf16.mxu0 %v657
    %1229 = vmatpush1.bf16.msra.mxu0 %v656
    %1230 = vmatprep.subr.bf16.mxu0 %v689
    %1231 = vmatpush1.bf16.msra.mxu0 %v688
    %1232 = vmatprep.subr.bf16.mxu0 %v721
    %1233 = vmatpush1.bf16.msra.mxu0 %v720
    %1234 = vmatprep.subr.bf16.mxu0 %v753
    %1235 = vmatpush1.bf16.msra.mxu0 %v752
    %1236 = vmatprep.subr.bf16.mxu0 0
    %1237 = vmatpush1.bf16.msra.mxu0 0
    %1238 = vmatprep.subr.bf16.mxu0 0
    %1239 = vmatpush1.bf16.msra.mxu0 0
    %1240 = vmatprep.subr.bf16.mxu0 0
    %1241 = vmatpush1.bf16.msra.mxu0 0
    %1242 = vmatprep.subr.bf16.mxu0 0
    %1243 = vmatpush1.bf16.msra.mxu0 0
    %1244 = vmatprep.subr.bf16.mxu0 0
    %1245 = vmatpush1.bf16.msra.mxu0 0
    %1246 = vmatprep.subr.bf16.mxu0 0
    %1247 = vmatpush1.bf16.msra.mxu0 0
    %1248 = vmatprep.subr.bf16.mxu0 0
    %1249 = vmatpush1.bf16.msra.mxu0 0
    %1250 = vmatprep.subr.bf16.mxu0 0
    %1251 = vmatpush1.bf16.msra.mxu0 0
    %1252 = vmatprep.subr.bf16.mxu0 0
    %1253 = vmatpush1.bf16.msra.mxu0 0
    %1254 = vmatprep.subr.bf16.mxu0 0
    %1255 = vmatpush1.bf16.msra.mxu0 0
    %1256 = vmatprep.subr.bf16.mxu0 0
    %1257 = vmatpush1.bf16.msra.mxu0 0
    %1258 = vmatprep.subr.bf16.mxu0 0
    %1259 = vmatpush1.bf16.msra.mxu0 0
    %1260 = vmatprep.mubr.bf16.mxu0 0
    %1261 = vmatmul.mubr.bf16.gmra.mrb[0].mxu0 %v898
    %v1262 = vpop.f32.mrb[0].mxu0
    %v1263 = vadd.f32 0.0, %v1262
    %v1264 = vpop.f32.mrb[0].mxu0
    %v1265 = vadd.f32 0.0, %v1264
    %v1266 = vpop.f32.mrb[0].mxu0
    %v1267 = vpop.f32.mrb[0].mxu0
    %1268 = vdwg.mxu0
    %1269 = vmatprep.subr.bf16.mxu0 %v659
    %1270 = vmatpush1.bf16.msra.mxu0 %v658
    %1271 = vmatprep.subr.bf16.mxu0 %v691
    %1272 = vmatpush1.bf16.msra.mxu0 %v690
    %1273 = vmatprep.subr.bf16.mxu0 %v723
    %1274 = vmatpush1.bf16.msra.mxu0 %v722
    %1275 = vmatprep.subr.bf16.mxu0 %v755
    %1276 = vmatpush1.bf16.msra.mxu0 %v754
    %1277 = vmatprep.subr.bf16.mxu0 0
    %1278 = vmatpush1.bf16.msra.mxu0 0
    %1279 = vmatprep.subr.bf16.mxu0 0
    %1280 = vmatpush1.bf16.msra.mxu0 0
    %1281 = vmatprep.subr.bf16.mxu0 0
    %1282 = vmatpush1.bf16.msra.mxu0 0
    %1283 = vmatprep.subr.bf16.mxu0 0
    %1284 = vmatpush1.bf16.msra.mxu0 0
    %1285 = vmatprep.subr.bf16.mxu0 0
    %1286 = vmatpush1.bf16.msra.mxu0 0
    %1287 = vmatprep.subr.bf16.mxu0 0
    %1288 = vmatpush1.bf16.msra.mxu0 0
    %1289 = vmatprep.subr.bf16.mxu0 0
    %1290 = vmatpush1.bf16.msra.mxu0 0
    %1291 = vmatprep.subr.bf16.mxu0 0
    %1292 = vmatpush1.bf16.msra.mxu0 0
    %1293 = vmatprep.subr.bf16.mxu0 0
    %1294 = vmatpush1.bf16.msra.mxu0 0
    %1295 = vmatprep.subr.bf16.mxu0 0
    %1296 = vmatpush1.bf16.msra.mxu0 0
    %1297 = vmatprep.subr.bf16.mxu0 0
    %1298 = vmatpush1.bf16.msra.mxu0 0
    %1299 = vmatprep.subr.bf16.mxu0 0
    %1300 = vmatpush1.bf16.msra.mxu0 0
    %1301 = vmatprep.mubr.bf16.mxu0 0
    %1302 = vmatmul.mubr.bf16.gmra.mrb[0].mxu0 %v898
    %v1303 = vpop.f32.mrb[0].mxu0
    %v1304 = vadd.f32 0.0, %v1303
    %v1305 = vpop.f32.mrb[0].mxu0
    %v1306 = vadd.f32 0.0, %v1305
    %v1307 = vpop.f32.mrb[0].mxu0
    %v1308 = vpop.f32.mrb[0].mxu0
    %1309 = vdwg.mxu0
    %1310 = vmatprep.subr.bf16.mxu0 %v661
    %1311 = vmatpush1.bf16.msra.mxu0 %v660
    %1312 = vmatprep.subr.bf16.mxu0 %v693
    %1313 = vmatpush1.bf16.msra.mxu0 %v692
    %1314 = vmatprep.subr.bf16.mxu0 %v725
    %1315 = vmatpush1.bf16.msra.mxu0 %v724
    %1316 = vmatprep.subr.bf16.mxu0 %v757
    %1317 = vmatpush1.bf16.msra.mxu0 %v756
    %1318 = vmatprep.subr.bf16.mxu0 0
    %1319 = vmatpush1.bf16.msra.mxu0 0
    %1320 = vmatprep.subr.bf16.mxu0 0
    %1321 = vmatpush1.bf16.msra.mxu0 0
    %1322 = vmatprep.subr.bf16.mxu0 0
    %1323 = vmatpush1.bf16.msra.mxu0 0
    %1324 = vmatprep.subr.bf16.mxu0 0
    %1325 = vmatpush1.bf16.msra.mxu0 0
    %1326 = vmatprep.subr.bf16.mxu0 0
    %1327 = vmatpush1.bf16.msra.mxu0 0
    %1328 = vmatprep.subr.bf16.mxu0 0
    %1329 = vmatpush1.bf16.msra.mxu0 0
    %1330 = vmatprep.subr.bf16.mxu0 0
    %1331 = vmatpush1.bf16.msra.mxu0 0
    %1332 = vmatprep.subr.bf16.mxu0 0
    %1333 = vmatpush1.bf16.msra.mxu0 0
    %1334 = vmatprep.subr.bf16.mxu0 0
    %1335 = vmatpush1.bf16.msra.mxu0 0
    %1336 = vmatprep.subr.bf16.mxu0 0
    %1337 = vmatpush1.bf16.msra.mxu0 0
    %1338 = vmatprep.subr.bf16.mxu0 0
    %1339 = vmatpush1.bf16.msra.mxu0 0
    %1340 = vmatprep.subr.bf16.mxu0 0
    %1341 = vmatpush1.bf16.msra.mxu0 0
    %1342 = vmatprep.mubr.bf16.mxu0 0
    %1343 = vmatmul.mubr.bf16.gmra.mrb[0].mxu0 %v898
    %v1344 = vpop.f32.mrb[0].mxu0
    %v1345 = vadd.f32 0.0, %v1344
    %v1346 = vpop.f32.mrb[0].mxu0
    %v1347 = vadd.f32 0.0, %v1346
    %v1348 = vpop.f32.mrb[0].mxu0
    %v1349 = vpop.f32.mrb[0].mxu0
    %1350 = vdwg.mxu0
    %1351 = vmatprep.subr.bf16.mxu0 %v663
    %1352 = vmatpush1.bf16.msra.mxu0 %v662
    %1353 = vmatprep.subr.bf16.mxu0 %v695
    %1354 = vmatpush1.bf16.msra.mxu0 %v694
    %1355 = vmatprep.subr.bf16.mxu0 %v727
    %1356 = vmatpush1.bf16.msra.mxu0 %v726
    %1357 = vmatprep.subr.bf16.mxu0 %v759
    %1358 = vmatpush1.bf16.msra.mxu0 %v758
    %1359 = vmatprep.subr.bf16.mxu0 0
    %1360 = vmatpush1.bf16.msra.mxu0 0
    %1361 = vmatprep.subr.bf16.mxu0 0
    %1362 = vmatpush1.bf16.msra.mxu0 0
    %1363 = vmatprep.subr.bf16.mxu0 0
    %1364 = vmatpush1.bf16.msra.mxu0 0
    %1365 = vmatprep.subr.bf16.mxu0 0
    %1366 = vmatpush1.bf16.msra.mxu0 0
    %1367 = vmatprep.subr.bf16.mxu0 0
    %1368 = vmatpush1.bf16.msra.mxu0 0
    %1369 = vmatprep.subr.bf16.mxu0 0
    %1370 = vmatpush1.bf16.msra.mxu0 0
    %1371 = vmatprep.subr.bf16.mxu0 0
    %1372 = vmatpush1.bf16.msra.mxu0 0
    %1373 = vmatprep.subr.bf16.mxu0 0
    %1374 = vmatpush1.bf16.msra.mxu0 0
    %1375 = vmatprep.subr.bf16.mxu0 0
    %1376 = vmatpush1.bf16.msra.mxu0 0
    %1377 = vmatprep.subr.bf16.mxu0 0
    %1378 = vmatpush1.bf16.msra.mxu0 0
    %1379 = vmatprep.subr.bf16.mxu0 0
    %1380 = vmatpush1.bf16.msra.mxu0 0
    %1381 = vmatprep.subr.bf16.mxu0 0
    %1382 = vmatpush1.bf16.msra.mxu0 0
    %1383 = vmatprep.mubr.bf16.mxu0 0
    %1384 = vmatmul.mubr.bf16.gmra.mrb[0].mxu0 %v898
    %v1385 = vpop.f32.mrb[0].mxu0
    %v1386 = vadd.f32 0.0, %v1385
    %v1387 = vpop.f32.mrb[0].mxu0
    %v1388 = vadd.f32 0.0, %v1387
    %v1389 = vpop.f32.mrb[0].mxu0
    %v1390 = vpop.f32.mrb[0].mxu0
    %1391 = vdwg.mxu0
    %1392 = vmatprep.subr.bf16.mxu0 %v665
    %1393 = vmatpush1.bf16.msra.mxu0 %v664
    %1394 = vmatprep.subr.bf16.mxu0 %v697
    %1395 = vmatpush1.bf16.msra.mxu0 %v696
    %1396 = vmatprep.subr.bf16.mxu0 %v729
    %1397 = vmatpush1.bf16.msra.mxu0 %v728
    %1398 = vmatprep.subr.bf16.mxu0 %v761
    %1399 = vmatpush1.bf16.msra.mxu0 %v760
    %1400 = vmatprep.subr.bf16.mxu0 0
    %1401 = vmatpush1.bf16.msra.mxu0 0
    %1402 = vmatprep.subr.bf16.mxu0 0
    %1403 = vmatpush1.bf16.msra.mxu0 0
    %1404 = vmatprep.subr.bf16.mxu0 0
    %1405 = vmatpush1.bf16.msra.mxu0 0
    %1406 = vmatprep.subr.bf16.mxu0 0
    %1407 = vmatpush1.bf16.msra.mxu0 0
    %1408 = vmatprep.subr.bf16.mxu0 0
    %1409 = vmatpush1.bf16.msra.mxu0 0
    %1410 = vmatprep.subr.bf16.mxu0 0
    %1411 = vmatpush1.bf16.msra.mxu0 0
    %1412 = vmatprep.subr.bf16.mxu0 0
    %1413 = vmatpush1.bf16.msra.mxu0 0
    %1414 = vmatprep.subr.bf16.mxu0 0
    %1415 = vmatpush1.bf16.msra.mxu0 0
    %1416 = vmatprep.subr.bf16.mxu0 0
    %1417 = vmatpush1.bf16.msra.mxu0 0
    %1418 = vmatprep.subr.bf16.mxu0 0
    %1419 = vmatpush1.bf16.msra.mxu0 0
    %1420 = vmatprep.subr.bf16.mxu0 0
    %1421 = vmatpush1.bf16.msra.mxu0 0
    %1422 = vmatprep.subr.bf16.mxu0 0
    %1423 = vmatpush1.bf16.msra.mxu0 0
    %1424 = vmatprep.mubr.bf16.mxu0 0
    %1425 = vmatmul.mubr.bf16.gmra.mrb[0].mxu0 %v898
    %v1426 = vpop.f32.mrb[0].mxu0
    %v1427 = vadd.f32 0.0, %v1426
    %v1428 = vpop.f32.mrb[0].mxu0
    %v1429 = vadd.f32 0.0, %v1428
    %v1430 = vpop.f32.mrb[0].mxu0
    %v1431 = vpop.f32.mrb[0].mxu0
    %1432 = vdwg.mxu0
    %1433 = vmatprep.subr.bf16.mxu0 %v667
    %1434 = vmatpush1.bf16.msra.mxu0 %v666
    %1435 = vmatprep.subr.bf16.mxu0 %v699
    %1436 = vmatpush1.bf16.msra.mxu0 %v698
    %1437 = vmatprep.subr.bf16.mxu0 %v731
    %1438 = vmatpush1.bf16.msra.mxu0 %v730
    %1439 = vmatprep.subr.bf16.mxu0 %v763
    %1440 = vmatpush1.bf16.msra.mxu0 %v762
    %1441 = vmatprep.subr.bf16.mxu0 0
    %1442 = vmatpush1.bf16.msra.mxu0 0
    %1443 = vmatprep.subr.bf16.mxu0 0
    %1444 = vmatpush1.bf16.msra.mxu0 0
    %1445 = vmatprep.subr.bf16.mxu0 0
    %1446 = vmatpush1.bf16.msra.mxu0 0
    %1447 = vmatprep.subr.bf16.mxu0 0
    %1448 = vmatpush1.bf16.msra.mxu0 0
    %1449 = vmatprep.subr.bf16.mxu0 0
    %1450 = vmatpush1.bf16.msra.mxu0 0
    %1451 = vmatprep.subr.bf16.mxu0 0
    %1452 = vmatpush1.bf16.msra.mxu0 0
    %1453 = vmatprep.subr.bf16.mxu0 0
    %1454 = vmatpush1.bf16.msra.mxu0 0
    %1455 = vmatprep.subr.bf16.mxu0 0
    %1456 = vmatpush1.bf16.msra.mxu0 0
    %1457 = vmatprep.subr.bf16.mxu0 0
    %1458 = vmatpush1.bf16.msra.mxu0 0
    %1459 = vmatprep.subr.bf16.mxu0 0
    %1460 = vmatpush1.bf16.msra.mxu0 0
    %1461 = vmatprep.subr.bf16.mxu0 0
    %1462 = vmatpush1.bf16.msra.mxu0 0
    %1463 = vmatprep.subr.bf16.mxu0 0
    %1464 = vmatpush1.bf16.msra.mxu0 0
    %1465 = vmatprep.mubr.bf16.mxu0 0
    %1466 = vmatmul.mubr.bf16.gmra.mrb[0].mxu0 %v898
    %v1467 = vpop.f32.mrb[0].mxu0
    %v1468 = vadd.f32 0.0, %v1467
    %v1469 = vpop.f32.mrb[0].mxu0
    %v1470 = vadd.f32 0.0, %v1469
    %v1471 = vpop.f32.mrb[0].mxu0
    %v1472 = vpop.f32.mrb[0].mxu0
    %1473 = vdwg.mxu0
    %1474 = vmatprep.subr.bf16.mxu0 %v669
    %1475 = vmatpush1.bf16.msra.mxu0 %v668
    %1476 = vmatprep.subr.bf16.mxu0 %v701
    %1477 = vmatpush1.bf16.msra.mxu0 %v700
    %1478 = vmatprep.subr.bf16.mxu0 %v733
    %1479 = vmatpush1.bf16.msra.mxu0 %v732
    %1480 = vmatprep.subr.bf16.mxu0 %v765
    %1481 = vmatpush1.bf16.msra.mxu0 %v764
    %1482 = vmatprep.subr.bf16.mxu0 0
    %1483 = vmatpush1.bf16.msra.mxu0 0
    %1484 = vmatprep.subr.bf16.mxu0 0
    %1485 = vmatpush1.bf16.msra.mxu0 0
    %1486 = vmatprep.subr.bf16.mxu0 0
    %1487 = vmatpush1.bf16.msra.mxu0 0
    %1488 = vmatprep.subr.bf16.mxu0 0
    %1489 = vmatpush1.bf16.msra.mxu0 0
    %1490 = vmatprep.subr.bf16.mxu0 0
    %1491 = vmatpush1.bf16.msra.mxu0 0
    %1492 = vmatprep.subr.bf16.mxu0 0
    %1493 = vmatpush1.bf16.msra.mxu0 0
    %1494 = vmatprep.subr.bf16.mxu0 0
    %1495 = vmatpush1.bf16.msra.mxu0 0
    %1496 = vmatprep.subr.bf16.mxu0 0
    %1497 = vmatpush1.bf16.msra.mxu0 0
    %1498 = vmatprep.subr.bf16.mxu0 0
    %1499 = vmatpush1.bf16.msra.mxu0 0
    %1500 = vmatprep.subr.bf16.mxu0 0
    %1501 = vmatpush1.bf16.msra.mxu0 0
    %1502 = vmatprep.subr.bf16.mxu0 0
    %1503 = vmatpush1.bf16.msra.mxu0 0
    %1504 = vmatprep.subr.bf16.mxu0 0
    %1505 = vmatpush1.bf16.msra.mxu0 0
    %1506 = vmatprep.mubr.bf16.mxu0 0
    %1507 = vmatmul.mubr.bf16.gmra.mrb[0].mxu0 %v898
    %v1508 = vpop.f32.mrb[0].mxu0
    %v1509 = vadd.f32 0.0, %v1508
    %v1510 = vpop.f32.mrb[0].mxu0
    %v1511 = vadd.f32 0.0, %v1510
    %v1512 = vpop.f32.mrb[0].mxu0
    %v1513 = vpop.f32.mrb[0].mxu0
    %1514 = vdwg.mxu0
    %1515 = vmatprep.subr.bf16.mxu0 %v671
    %1516 = vmatpush1.bf16.msra.mxu0 %v670
    %1517 = vmatprep.subr.bf16.mxu0 %v703
    %1518 = vmatpush1.bf16.msra.mxu0 %v702
    %1519 = vmatprep.subr.bf16.mxu0 %v735
    %1520 = vmatpush1.bf16.msra.mxu0 %v734
    %1521 = vmatprep.subr.bf16.mxu0 %v767
    %1522 = vmatpush1.bf16.msra.mxu0 %v766
    %1523 = vmatprep.subr.bf16.mxu0 0
    %1524 = vmatpush1.bf16.msra.mxu0 0
    %1525 = vmatprep.subr.bf16.mxu0 0
    %1526 = vmatpush1.bf16.msra.mxu0 0
    %1527 = vmatprep.subr.bf16.mxu0 0
    %1528 = vmatpush1.bf16.msra.mxu0 0
    %1529 = vmatprep.subr.bf16.mxu0 0
    %1530 = vmatpush1.bf16.msra.mxu0 0
    %1531 = vmatprep.subr.bf16.mxu0 0
    %1532 = vmatpush1.bf16.msra.mxu0 0
    %1533 = vmatprep.subr.bf16.mxu0 0
    %1534 = vmatpush1.bf16.msra.mxu0 0
    %1535 = vmatprep.subr.bf16.mxu0 0
    %1536 = vmatpush1.bf16.msra.mxu0 0
    %1537 = vmatprep.subr.bf16.mxu0 0
    %1538 = vmatpush1.bf16.msra.mxu0 0
    %1539 = vmatprep.subr.bf16.mxu0 0
    %1540 = vmatpush1.bf16.msra.mxu0 0
    %1541 = vmatprep.subr.bf16.mxu0 0
    %1542 = vmatpush1.bf16.msra.mxu0 0
    %1543 = vmatprep.subr.bf16.mxu0 0
    %1544 = vmatpush1.bf16.msra.mxu0 0
    %1545 = vmatprep.subr.bf16.mxu0 0
    %1546 = vmatpush1.bf16.msra.mxu0 0
    %1547 = vmatprep.mubr.bf16.mxu0 0
    %1548 = vmatmul.mubr.bf16.gmra.mrb[0].mxu0 %v898
    %v1549 = vpop.f32.mrb[0].mxu0
    %v1550 = vadd.f32 0.0, %v1549
    %v1551 = vpop.f32.mrb[0].mxu0
    %v1552 = vadd.f32 0.0, %v1551
    %v1553 = vpop.f32.mrb[0].mxu0
    %v1554 = vpop.f32.mrb[0].mxu0
    %1555 = vdwg.mxu0
    %v1556 = vrot.slane %v935, 4
    %v1557 = vadd.f32 %v935, %v1556
    %v1558 = vrot.slane %v1557, 2
    %v1559 = vadd.f32 %v1557, %v1558
    %v1560 = vrot.slane %v1559, 1
    %v1561 = vadd.f32 %v1559, %v1560
    %v1562 = vrot.slane %v937, 4
    %v1563 = vadd.f32 %v937, %v1562
    %v1564 = vrot.slane %v1563, 2
    %v1565 = vadd.f32 %v1563, %v1564
    %v1566 = vrot.slane %v1565, 1
    %v1567 = vadd.f32 %v1565, %v1566
    %v1568 = vrot.slane %v976, 4
    %v1569 = vadd.f32 %v976, %v1568
    %v1570 = vrot.slane %v1569, 2
    %v1571 = vadd.f32 %v1569, %v1570
    %v1572 = vrot.slane %v1571, 1
    %v1573 = vadd.f32 %v1571, %v1572
    %v1574 = vrot.slane %v978, 4
    %v1575 = vadd.f32 %v978, %v1574
    %v1576 = vrot.slane %v1575, 2
    %v1577 = vadd.f32 %v1575, %v1576
    %v1578 = vrot.slane %v1577, 1
    %v1579 = vadd.f32 %v1577, %v1578
    %v1580 = vrot.slane %v1017, 4
    %v1581 = vadd.f32 %v1017, %v1580
    %v1582 = vrot.slane %v1581, 2
    %v1583 = vadd.f32 %v1581, %v1582
    %v1584 = vrot.slane %v1583, 1
    %v1585 = vadd.f32 %v1583, %v1584
    %v1586 = vrot.slane %v1019, 4
    %v1587 = vadd.f32 %v1019, %v1586
    %v1588 = vrot.slane %v1587, 2
    %v1589 = vadd.f32 %v1587, %v1588
    %v1590 = vrot.slane %v1589, 1
    %v1591 = vadd.f32 %v1589, %v1590
    %v1592 = vrot.slane %v1058, 4
    %v1593 = vadd.f32 %v1058, %v1592
    %v1594 = vrot.slane %v1593, 2
    %v1595 = vadd.f32 %v1593, %v1594
    %v1596 = vrot.slane %v1595, 1
    %v1597 = vadd.f32 %v1595, %v1596
    %v1598 = vrot.slane %v1060, 4
    %v1599 = vadd.f32 %v1060, %v1598
    %v1600 = vrot.slane %v1599, 2
    %v1601 = vadd.f32 %v1599, %v1600
    %v1602 = vrot.slane %v1601, 1
    %v1603 = vadd.f32 %v1601, %v1602
    %v1604 = vrot.slane %v1099, 4
    %v1605 = vadd.f32 %v1099, %v1604
    %v1606 = vrot.slane %v1605, 2
    %v1607 = vadd.f32 %v1605, %v1606
    %v1608 = vrot.slane %v1607, 1
    %v1609 = vadd.f32 %v1607, %v1608
    %v1610 = vrot.slane %v1101, 4
    %v1611 = vadd.f32 %v1101, %v1610
    %v1612 = vrot.slane %v1611, 2
    %v1613 = vadd.f32 %v1611, %v1612
    %v1614 = vrot.slane %v1613, 1
    %v1615 = vadd.f32 %v1613, %v1614
    %v1616 = vrot.slane %v1140, 4
    %v1617 = vadd.f32 %v1140, %v1616
    %v1618 = vrot.slane %v1617, 2
    %v1619 = vadd.f32 %v1617, %v1618
    %v1620 = vrot.slane %v1619, 1
    %v1621 = vadd.f32 %v1619, %v1620
    %v1622 = vrot.slane %v1142, 4
    %v1623 = vadd.f32 %v1142, %v1622
    %v1624 = vrot.slane %v1623, 2
    %v1625 = vadd.f32 %v1623, %v1624
    %v1626 = vrot.slane %v1625, 1
    %v1627 = vadd.f32 %v1625, %v1626
    %v1628 = vrot.slane %v1181, 4
    %v1629 = vadd.f32 %v1181, %v1628
    %v1630 = vrot.slane %v1629, 2
    %v1631 = vadd.f32 %v1629, %v1630
    %v1632 = vrot.slane %v1631, 1
    %v1633 = vadd.f32 %v1631, %v1632
    %v1634 = vrot.slane %v1183, 4
    %v1635 = vadd.f32 %v1183, %v1634
    %v1636 = vrot.slane %v1635, 2
    %v1637 = vadd.f32 %v1635, %v1636
    %v1638 = vrot.slane %v1637, 1
    %v1639 = vadd.f32 %v1637, %v1638
    %v1640 = vrot.slane %v1222, 4
    %v1641 = vadd.f32 %v1222, %v1640
    %v1642 = vrot.slane %v1641, 2
    %v1643 = vadd.f32 %v1641, %v1642
    %v1644 = vrot.slane %v1643, 1
    %v1645 = vadd.f32 %v1643, %v1644
    %v1646 = vrot.slane %v1224, 4
    %v1647 = vadd.f32 %v1224, %v1646
    %v1648 = vrot.slane %v1647, 2
    %v1649 = vadd.f32 %v1647, %v1648
    %v1650 = vrot.slane %v1649, 1
    %v1651 = vadd.f32 %v1649, %v1650
    %v1652 = vrot.slane %v1263, 4
    %v1653 = vadd.f32 %v1263, %v1652
    %v1654 = vrot.slane %v1653, 2
    %v1655 = vadd.f32 %v1653, %v1654
    %v1656 = vrot.slane %v1655, 1
    %v1657 = vadd.f32 %v1655, %v1656
    %v1658 = vrot.slane %v1265, 4
    %v1659 = vadd.f32 %v1265, %v1658
    %v1660 = vrot.slane %v1659, 2
    %v1661 = vadd.f32 %v1659, %v1660
    %v1662 = vrot.slane %v1661, 1
    %v1663 = vadd.f32 %v1661, %v1662
    %v1664 = vrot.slane %v1304, 4
    %v1665 = vadd.f32 %v1304, %v1664
    %v1666 = vrot.slane %v1665, 2
    %v1667 = vadd.f32 %v1665, %v1666
    %v1668 = vrot.slane %v1667, 1
    %v1669 = vadd.f32 %v1667, %v1668
    %v1670 = vrot.slane %v1306, 4
    %v1671 = vadd.f32 %v1306, %v1670
    %v1672 = vrot.slane %v1671, 2
    %v1673 = vadd.f32 %v1671, %v1672
    %v1674 = vrot.slane %v1673, 1
    %v1675 = vadd.f32 %v1673, %v1674
    %v1676 = vrot.slane %v1345, 4
    %v1677 = vadd.f32 %v1345, %v1676
    %v1678 = vrot.slane %v1677, 2
    %v1679 = vadd.f32 %v1677, %v1678
    %v1680 = vrot.slane %v1679, 1
    %v1681 = vadd.f32 %v1679, %v1680
    %v1682 = vrot.slane %v1347, 4
    %v1683 = vadd.f32 %v1347, %v1682
    %v1684 = vrot.slane %v1683, 2
    %v1685 = vadd.f32 %v1683, %v1684
    %v1686 = vrot.slane %v1685, 1
    %v1687 = vadd.f32 %v1685, %v1686
    %v1688 = vrot.slane %v1386, 4
    %v1689 = vadd.f32 %v1386, %v1688
    %v1690 = vrot.slane %v1689, 2
    %v1691 = vadd.f32 %v1689, %v1690
    %v1692 = vrot.slane %v1691, 1
    %v1693 = vadd.f32 %v1691, %v1692
    %v1694 = vrot.slane %v1388, 4
    %v1695 = vadd.f32 %v1388, %v1694
    %v1696 = vrot.slane %v1695, 2
    %v1697 = vadd.f32 %v1695, %v1696
    %v1698 = vrot.slane %v1697, 1
    %v1699 = vadd.f32 %v1697, %v1698
    %v1700 = vrot.slane %v1427, 4
    %v1701 = vadd.f32 %v1427, %v1700
    %v1702 = vrot.slane %v1701, 2
    %v1703 = vadd.f32 %v1701, %v1702
    %v1704 = vrot.slane %v1703, 1
    %v1705 = vadd.f32 %v1703, %v1704
    %v1706 = vrot.slane %v1429, 4
    %v1707 = vadd.f32 %v1429, %v1706
    %v1708 = vrot.slane %v1707, 2
    %v1709 = vadd.f32 %v1707, %v1708
    %v1710 = vrot.slane %v1709, 1
    %v1711 = vadd.f32 %v1709, %v1710
    %v1712 = vrot.slane %v1468, 4
    %v1713 = vadd.f32 %v1468, %v1712
    %v1714 = vrot.slane %v1713, 2
    %v1715 = vadd.f32 %v1713, %v1714
    %v1716 = vrot.slane %v1715, 1
    %v1717 = vadd.f32 %v1715, %v1716
    %v1718 = vrot.slane %v1470, 4
    %v1719 = vadd.f32 %v1470, %v1718
    %v1720 = vrot.slane %v1719, 2
    %v1721 = vadd.f32 %v1719, %v1720
    %v1722 = vrot.slane %v1721, 1
    %v1723 = vadd.f32 %v1721, %v1722
    %v1724 = vrot.slane %v1509, 4
    %v1725 = vadd.f32 %v1509, %v1724
    %v1726 = vrot.slane %v1725, 2
    %v1727 = vadd.f32 %v1725, %v1726
    %v1728 = vrot.slane %v1727, 1
    %v1729 = vadd.f32 %v1727, %v1728
    %v1730 = vrot.slane %v1511, 4
    %v1731 = vadd.f32 %v1511, %v1730
    %v1732 = vrot.slane %v1731, 2
    %v1733 = vadd.f32 %v1731, %v1732
    %v1734 = vrot.slane %v1733, 1
    %v1735 = vadd.f32 %v1733, %v1734
    %v1736 = vrot.slane %v1550, 4
    %v1737 = vadd.f32 %v1550, %v1736
    %v1738 = vrot.slane %v1737, 2
    %v1739 = vadd.f32 %v1737, %v1738
    %v1740 = vrot.slane %v1739, 1
    %v1741 = vadd.f32 %v1739, %v1740
    %v1742 = vrot.slane %v1552, 4
    %v1743 = vadd.f32 %v1552, %v1742
    %v1744 = vrot.slane %v1743, 2
    %v1745 = vadd.f32 %v1743, %v1744
    %v1746 = vrot.slane %v1745, 1
    %v1747 = vadd.f32 %v1745, %v1746
    %v1748 = vrcp.pop 8.0
    %v1749 = vmul.f32 %v1561, %v1748
    %v1750 = vmul.f32 %v1567, %v1748
    %v1751 = vmul.f32 %v1573, %v1748
    %v1752 = vmul.f32 %v1579, %v1748
    %v1753 = vmul.f32 %v1585, %v1748
    %v1754 = vmul.f32 %v1591, %v1748
    %v1755 = vmul.f32 %v1597, %v1748
    %v1756 = vmul.f32 %v1603, %v1748
    %v1757 = vmul.f32 %v1609, %v1748
    %v1758 = vmul.f32 %v1615, %v1748
    %v1759 = vmul.f32 %v1621, %v1748
    %v1760 = vmul.f32 %v1627, %v1748
    %v1761 = vmul.f32 %v1633, %v1748
    %v1762 = vmul.f32 %v1639, %v1748
    %v1763 = vmul.f32 %v1645, %v1748
    %v1764 = vmul.f32 %v1651, %v1748
    %v1765 = vmul.f32 %v1657, %v1748
    %v1766 = vmul.f32 %v1663, %v1748
    %v1767 = vmul.f32 %v1669, %v1748
    %v1768 = vmul.f32 %v1675, %v1748
    %v1769 = vmul.f32 %v1681, %v1748
    %v1770 = vmul.f32 %v1687, %v1748
    %v1771 = vmul.f32 %v1693, %v1748
    %v1772 = vmul.f32 %v1699, %v1748
    %v1773 = vmul.f32 %v1705, %v1748
    %v1774 = vmul.f32 %v1711, %v1748
    %v1775 = vmul.f32 %v1717, %v1748
    %v1776 = vmul.f32 %v1723, %v1748
    %v1777 = vmul.f32 %v1729, %v1748
    %v1778 = vmul.f32 %v1735, %v1748
    %v1779 = vmul.f32 %v1741, %v1748
    %v1780 = vmul.f32 %v1747, %v1748
    %v1781 = vmul.f32 %v935, %v935
    %v1782 = vmul.f32 %v937, %v937
    %v1783 = vmul.f32 %v976, %v976
    %v1784 = vmul.f32 %v978, %v978
    %v1785 = vmul.f32 %v1017, %v1017
    %v1786 = vmul.f32 %v1019, %v1019
    %v1787 = vmul.f32 %v1058, %v1058
    %v1788 = vmul.f32 %v1060, %v1060
    %v1789 = vmul.f32 %v1099, %v1099
    %v1790 = vmul.f32 %v1101, %v1101
    %v1791 = vmul.f32 %v1140, %v1140
    %v1792 = vmul.f32 %v1142, %v1142
    %v1793 = vmul.f32 %v1181, %v1181
    %v1794 = vmul.f32 %v1183, %v1183
    %v1795 = vmul.f32 %v1222, %v1222
    %v1796 = vmul.f32 %v1224, %v1224
    %v1797 = vmul.f32 %v1263, %v1263
    %v1798 = vmul.f32 %v1265, %v1265
    %v1799 = vmul.f32 %v1304, %v1304
    %v1800 = vmul.f32 %v1306, %v1306
    %v1801 = vmul.f32 %v1345, %v1345
    %v1802 = vmul.f32 %v1347, %v1347
    %v1803 = vmul.f32 %v1386, %v1386
    %v1804 = vmul.f32 %v1388, %v1388
    %v1805 = vmul.f32 %v1427, %v1427
    %v1806 = vmul.f32 %v1429, %v1429
    %v1807 = vmul.f32 %v1468, %v1468
    %v1808 = vmul.f32 %v1470, %v1470
    %v1809 = vmul.f32 %v1509, %v1509
    %v1810 = vmul.f32 %v1511, %v1511
    %v1811 = vmul.f32 %v1550, %v1550
    %v1812 = vmul.f32 %v1552, %v1552
    %v1813 = vrot.slane %v1781, 4
    %v1814 = vadd.f32 %v1781, %v1813
    %v1815 = vrot.slane %v1814, 2
    %v1816 = vadd.f32 %v1814, %v1815
    %v1817 = vrot.slane %v1816, 1
    %v1818 = vadd.f32 %v1816, %v1817
    %v1819 = vrot.slane %v1782, 4
    %v1820 = vadd.f32 %v1782, %v1819
    %v1821 = vrot.slane %v1820, 2
    %v1822 = vadd.f32 %v1820, %v1821
    %v1823 = vrot.slane %v1822, 1
    %v1824 = vadd.f32 %v1822, %v1823
    %v1825 = vrot.slane %v1783, 4
    %v1826 = vadd.f32 %v1783, %v1825
    %v1827 = vrot.slane %v1826, 2
    %v1828 = vadd.f32 %v1826, %v1827
    %v1829 = vrot.slane %v1828, 1
    %v1830 = vadd.f32 %v1828, %v1829
    %v1831 = vrot.slane %v1784, 4
    %v1832 = vadd.f32 %v1784, %v1831
    %v1833 = vrot.slane %v1832, 2
    %v1834 = vadd.f32 %v1832, %v1833
    %v1835 = vrot.slane %v1834, 1
    %v1836 = vadd.f32 %v1834, %v1835
    %v1837 = vrot.slane %v1785, 4
    %v1838 = vadd.f32 %v1785, %v1837
    %v1839 = vrot.slane %v1838, 2
    %v1840 = vadd.f32 %v1838, %v1839
    %v1841 = vrot.slane %v1840, 1
    %v1842 = vadd.f32 %v1840, %v1841
    %v1843 = vrot.slane %v1786, 4
    %v1844 = vadd.f32 %v1786, %v1843
    %v1845 = vrot.slane %v1844, 2
    %v1846 = vadd.f32 %v1844, %v1845
    %v1847 = vrot.slane %v1846, 1
    %v1848 = vadd.f32 %v1846, %v1847
    %v1849 = vrot.slane %v1787, 4
    %v1850 = vadd.f32 %v1787, %v1849
    %v1851 = vrot.slane %v1850, 2
    %v1852 = vadd.f32 %v1850, %v1851
    %v1853 = vrot.slane %v1852, 1
    %v1854 = vadd.f32 %v1852, %v1853
    %v1855 = vrot.slane %v1788, 4
    %v1856 = vadd.f32 %v1788, %v1855
    %v1857 = vrot.slane %v1856, 2
    %v1858 = vadd.f32 %v1856, %v1857
    %v1859 = vrot.slane %v1858, 1
    %v1860 = vadd.f32 %v1858, %v1859
    %v1861 = vrot.slane %v1789, 4
    %v1862 = vadd.f32 %v1789, %v1861
    %v1863 = vrot.slane %v1862, 2
    %v1864 = vadd.f32 %v1862, %v1863
    %v1865 = vrot.slane %v1864, 1
    %v1866 = vadd.f32 %v1864, %v1865
    %v1867 = vrot.slane %v1790, 4
    %v1868 = vadd.f32 %v1790, %v1867
    %v1869 = vrot.slane %v1868, 2
    %v1870 = vadd.f32 %v1868, %v1869
    %v1871 = vrot.slane %v1870, 1
    %v1872 = vadd.f32 %v1870, %v1871
    %v1873 = vrot.slane %v1791, 4
    %v1874 = vadd.f32 %v1791, %v1873
    %v1875 = vrot.slane %v1874, 2
    %v1876 = vadd.f32 %v1874, %v1875
    %v1877 = vrot.slane %v1876, 1
    %v1878 = vadd.f32 %v1876, %v1877
    %v1879 = vrot.slane %v1792, 4
    %v1880 = vadd.f32 %v1792, %v1879
    %v1881 = vrot.slane %v1880, 2
    %v1882 = vadd.f32 %v1880, %v1881
    %v1883 = vrot.slane %v1882, 1
    %v1884 = vadd.f32 %v1882, %v1883
    %v1885 = vrot.slane %v1793, 4
    %v1886 = vadd.f32 %v1793, %v1885
    %v1887 = vrot.slane %v1886, 2
    %v1888 = vadd.f32 %v1886, %v1887
    %v1889 = vrot.slane %v1888, 1
    %v1890 = vadd.f32 %v1888, %v1889
    %v1891 = vrot.slane %v1794, 4
    %v1892 = vadd.f32 %v1794, %v1891
    %v1893 = vrot.slane %v1892, 2
    %v1894 = vadd.f32 %v1892, %v1893
    %v1895 = vrot.slane %v1894, 1
    %v1896 = vadd.f32 %v1894, %v1895
    %v1897 = vrot.slane %v1795, 4
    %v1898 = vadd.f32 %v1795, %v1897
    %v1899 = vrot.slane %v1898, 2
    %v1900 = vadd.f32 %v1898, %v1899
    %v1901 = vrot.slane %v1900, 1
    %v1902 = vadd.f32 %v1900, %v1901
    %v1903 = vrot.slane %v1796, 4
    %v1904 = vadd.f32 %v1796, %v1903
    %v1905 = vrot.slane %v1904, 2
    %v1906 = vadd.f32 %v1904, %v1905
    %v1907 = vrot.slane %v1906, 1
    %v1908 = vadd.f32 %v1906, %v1907
    %v1909 = vrot.slane %v1797, 4
    %v1910 = vadd.f32 %v1797, %v1909
    %v1911 = vrot.slane %v1910, 2
    %v1912 = vadd.f32 %v1910, %v1911
    %v1913 = vrot.slane %v1912, 1
    %v1914 = vadd.f32 %v1912, %v1913
    %v1915 = vrot.slane %v1798, 4
    %v1916 = vadd.f32 %v1798, %v1915
    %v1917 = vrot.slane %v1916, 2
    %v1918 = vadd.f32 %v1916, %v1917
    %v1919 = vrot.slane %v1918, 1
    %v1920 = vadd.f32 %v1918, %v1919
    %v1921 = vrot.slane %v1799, 4
    %v1922 = vadd.f32 %v1799, %v1921
    %v1923 = vrot.slane %v1922, 2
    %v1924 = vadd.f32 %v1922, %v1923
    %v1925 = vrot.slane %v1924, 1
    %v1926 = vadd.f32 %v1924, %v1925
    %v1927 = vrot.slane %v1800, 4
    %v1928 = vadd.f32 %v1800, %v1927
    %v1929 = vrot.slane %v1928, 2
    %v1930 = vadd.f32 %v1928, %v1929
    %v1931 = vrot.slane %v1930, 1
    %v1932 = vadd.f32 %v1930, %v1931
    %v1933 = vrot.slane %v1801, 4
    %v1934 = vadd.f32 %v1801, %v1933
    %v1935 = vrot.slane %v1934, 2
    %v1936 = vadd.f32 %v1934, %v1935
    %v1937 = vrot.slane %v1936, 1
    %v1938 = vadd.f32 %v1936, %v1937
    %v1939 = vrot.slane %v1802, 4
    %v1940 = vadd.f32 %v1802, %v1939
    %v1941 = vrot.slane %v1940, 2
    %v1942 = vadd.f32 %v1940, %v1941
    %v1943 = vrot.slane %v1942, 1
    %v1944 = vadd.f32 %v1942, %v1943
    %v1945 = vrot.slane %v1803, 4
    %v1946 = vadd.f32 %v1803, %v1945
    %v1947 = vrot.slane %v1946, 2
    %v1948 = vadd.f32 %v1946, %v1947
    %v1949 = vrot.slane %v1948, 1
    %v1950 = vadd.f32 %v1948, %v1949
    %v1951 = vrot.slane %v1804, 4
    %v1952 = vadd.f32 %v1804, %v1951
    %v1953 = vrot.slane %v1952, 2
    %v1954 = vadd.f32 %v1952, %v1953
    %v1955 = vrot.slane %v1954, 1
    %v1956 = vadd.f32 %v1954, %v1955
    %v1957 = vrot.slane %v1805, 4
    %v1958 = vadd.f32 %v1805, %v1957
    %v1959 = vrot.slane %v1958, 2
    %v1960 = vadd.f32 %v1958, %v1959
    %v1961 = vrot.slane %v1960, 1
    %v1962 = vadd.f32 %v1960, %v1961
    %v1963 = vrot.slane %v1806, 4
    %v1964 = vadd.f32 %v1806, %v1963
    %v1965 = vrot.slane %v1964, 2
    %v1966 = vadd.f32 %v1964, %v1965
    %v1967 = vrot.slane %v1966, 1
    %v1968 = vadd.f32 %v1966, %v1967
    %v1969 = vrot.slane %v1807, 4
    %v1970 = vadd.f32 %v1807, %v1969
    %v1971 = vrot.slane %v1970, 2
    %v1972 = vadd.f32 %v1970, %v1971
    %v1973 = vrot.slane %v1972, 1
    %v1974 = vadd.f32 %v1972, %v1973
    %v1975 = vrot.slane %v1808, 4
    %v1976 = vadd.f32 %v1808, %v1975
    %v1977 = vrot.slane %v1976, 2
    %v1978 = vadd.f32 %v1976, %v1977
    %v1979 = vrot.slane %v1978, 1
    %v1980 = vadd.f32 %v1978, %v1979
    %v1981 = vrot.slane %v1809, 4
    %v1982 = vadd.f32 %v1809, %v1981
    %v1983 = vrot.slane %v1982, 2
    %v1984 = vadd.f32 %v1982, %v1983
    %v1985 = vrot.slane %v1984, 1
    %v1986 = vadd.f32 %v1984, %v1985
    %v1987 = vrot.slane %v1810, 4
    %v1988 = vadd.f32 %v1810, %v1987
    %v1989 = vrot.slane %v1988, 2
    %v1990 = vadd.f32 %v1988, %v1989
    %v1991 = vrot.slane %v1990, 1
    %v1992 = vadd.f32 %v1990, %v1991
    %v1993 = vrot.slane %v1811, 4
    %v1994 = vadd.f32 %v1811, %v1993
    %v1995 = vrot.slane %v1994, 2
    %v1996 = vadd.f32 %v1994, %v1995
    %v1997 = vrot.slane %v1996, 1
    %v1998 = vadd.f32 %v1996, %v1997
    %v1999 = vrot.slane %v1812, 4
    %v2000 = vadd.f32 %v1812, %v1999
    %v2001 = vrot.slane %v2000, 2
    %v2002 = vadd.f32 %v2000, %v2001
    %v2003 = vrot.slane %v2002, 1
    %v2004 = vadd.f32 %v2002, %v2003
    %v2005 = vmul.f32 %v1818, %v1748
    %v2006 = vmul.f32 %v1824, %v1748
    %v2007 = vmul.f32 %v1830, %v1748
    %v2008 = vmul.f32 %v1836, %v1748
    %v2009 = vmul.f32 %v1842, %v1748
    %v2010 = vmul.f32 %v1848, %v1748
    %v2011 = vmul.f32 %v1854, %v1748
    %v2012 = vmul.f32 %v1860, %v1748
    %v2013 = vmul.f32 %v1866, %v1748
    %v2014 = vmul.f32 %v1872, %v1748
    %v2015 = vmul.f32 %v1878, %v1748
    %v2016 = vmul.f32 %v1884, %v1748
    %v2017 = vmul.f32 %v1890, %v1748
    %v2018 = vmul.f32 %v1896, %v1748
    %v2019 = vmul.f32 %v1902, %v1748
    %v2020 = vmul.f32 %v1908, %v1748
    %v2021 = vmul.f32 %v1914, %v1748
    %v2022 = vmul.f32 %v1920, %v1748
    %v2023 = vmul.f32 %v1926, %v1748
    %v2024 = vmul.f32 %v1932, %v1748
    %v2025 = vmul.f32 %v1938, %v1748
    %v2026 = vmul.f32 %v1944, %v1748
    %v2027 = vmul.f32 %v1950, %v1748
    %v2028 = vmul.f32 %v1956, %v1748
    %v2029 = vmul.f32 %v1962, %v1748
    %v2030 = vmul.f32 %v1968, %v1748
    %v2031 = vmul.f32 %v1974, %v1748
    %v2032 = vmul.f32 %v1980, %v1748
    %v2033 = vmul.f32 %v1986, %v1748
    %v2034 = vmul.f32 %v1992, %v1748
    %v2035 = vmul.f32 %v1998, %v1748
    %v2036 = vmul.f32 %v2004, %v1748
    %v2037 = vmul.f32 %v1749, %v1749
    %v2038 = vmul.f32 %v1750, %v1750
    %v2039 = vmul.f32 %v1751, %v1751
    %v2040 = vmul.f32 %v1752, %v1752
    %v2041 = vmul.f32 %v1753, %v1753
    %v2042 = vmul.f32 %v1754, %v1754
    %v2043 = vmul.f32 %v1755, %v1755
    %v2044 = vmul.f32 %v1756, %v1756
    %v2045 = vmul.f32 %v1757, %v1757
    %v2046 = vmul.f32 %v1758, %v1758
    %v2047 = vmul.f32 %v1759, %v1759
    %v2048 = vmul.f32 %v1760, %v1760
    %v2049 = vmul.f32 %v1761, %v1761
    %v2050 = vmul.f32 %v1762, %v1762
    %v2051 = vmul.f32 %v1763, %v1763
    %v2052 = vmul.f32 %v1764, %v1764
    %v2053 = vmul.f32 %v1765, %v1765
    %v2054 = vmul.f32 %v1766, %v1766
    %v2055 = vmul.f32 %v1767, %v1767
    %v2056 = vmul.f32 %v1768, %v1768
    %v2057 = vmul.f32 %v1769, %v1769
    %v2058 = vmul.f32 %v1770, %v1770
    %v2059 = vmul.f32 %v1771, %v1771
    %v2060 = vmul.f32 %v1772, %v1772
    %v2061 = vmul.f32 %v1773, %v1773
    %v2062 = vmul.f32 %v1774, %v1774
    %v2063 = vmul.f32 %v1775, %v1775
    %v2064 = vmul.f32 %v1776, %v1776
    %v2065 = vmul.f32 %v1777, %v1777
    %v2066 = vmul.f32 %v1778, %v1778
    %v2067 = vmul.f32 %v1779, %v1779
    %v2068 = vmul.f32 %v1780, %v1780
    %v2069 = vsub.f32 %v2005, %v2037
    %v2070 = vsub.f32 %v2006, %v2038
    %v2071 = vsub.f32 %v2007, %v2039
    %v2072 = vsub.f32 %v2008, %v2040
    %v2073 = vsub.f32 %v2009, %v2041
    %v2074 = vsub.f32 %v2010, %v2042
    %v2075 = vsub.f32 %v2011, %v2043
    %v2076 = vsub.f32 %v2012, %v2044
    %v2077 = vsub.f32 %v2013, %v2045
    %v2078 = vsub.f32 %v2014, %v2046
    %v2079 = vsub.f32 %v2015, %v2047
    %v2080 = vsub.f32 %v2016, %v2048
    %v2081 = vsub.f32 %v2017, %v2049
    %v2082 = vsub.f32 %v2018, %v2050
    %v2083 = vsub.f32 %v2019, %v2051
    %v2084 = vsub.f32 %v2020, %v2052
    %v2085 = vsub.f32 %v2021, %v2053
    %v2086 = vsub.f32 %v2022, %v2054
    %v2087 = vsub.f32 %v2023, %v2055
    %v2088 = vsub.f32 %v2024, %v2056
    %v2089 = vsub.f32 %v2025, %v2057
    %v2090 = vsub.f32 %v2026, %v2058
    %v2091 = vsub.f32 %v2027, %v2059
    %v2092 = vsub.f32 %v2028, %v2060
    %v2093 = vsub.f32 %v2029, %v2061
    %v2094 = vsub.f32 %v2030, %v2062
    %v2095 = vsub.f32 %v2031, %v2063
    %v2096 = vsub.f32 %v2032, %v2064
    %v2097 = vsub.f32 %v2033, %v2065
    %v2098 = vsub.f32 %v2034, %v2066
    %v2099 = vsub.f32 %v2035, %v2067
    %v2100 = vsub.f32 %v2036, %v2068
    %v2101 = vmax.f32 %v2069, 0.0
    %v2102 = vmax.f32 %v2070, 0.0
    %v2103 = vmax.f32 %v2071, 0.0
    %v2104 = vmax.f32 %v2072, 0.0
    %v2105 = vmax.f32 %v2073, 0.0
    %v2106 = vmax.f32 %v2074, 0.0
    %v2107 = vmax.f32 %v2075, 0.0
    %v2108 = vmax.f32 %v2076, 0.0
    %v2109 = vmax.f32 %v2077, 0.0
    %v2110 = vmax.f32 %v2078, 0.0
    %v2111 = vmax.f32 %v2079, 0.0
    %v2112 = vmax.f32 %v2080, 0.0
    %v2113 = vmax.f32 %v2081, 0.0
    %v2114 = vmax.f32 %v2082, 0.0
    %v2115 = vmax.f32 %v2083, 0.0
    %v2116 = vmax.f32 %v2084, 0.0
    %v2117 = vmax.f32 %v2085, 0.0
    %v2118 = vmax.f32 %v2086, 0.0
    %v2119 = vmax.f32 %v2087, 0.0
    %v2120 = vmax.f32 %v2088, 0.0
    %v2121 = vmax.f32 %v2089, 0.0
    %v2122 = vmax.f32 %v2090, 0.0
    %v2123 = vmax.f32 %v2091, 0.0
    %v2124 = vmax.f32 %v2092, 0.0
    %v2125 = vmax.f32 %v2093, 0.0
    %v2126 = vmax.f32 %v2094, 0.0
    %v2127 = vmax.f32 %v2095, 0.0
    %v2128 = vmax.f32 %v2096, 0.0
    %v2129 = vmax.f32 %v2097, 0.0
    %v2130 = vmax.f32 %v2098, 0.0
    %v2131 = vmax.f32 %v2099, 0.0
    %v2132 = vmax.f32 %v2100, 0.0
    %v2133 = vld [vmem:[#allocation7] sm:$0xff]
    %v2134 = vld [vmem:[#allocation7 + $0x8] sm:$0xff]
    %v2135 = vld [vmem:[#allocation7 + $0x10] sm:$0xff]
    %v2136 = vld [vmem:[#allocation7 + $0x18] sm:$0xff]
    %v2137 = vld [vmem:[#allocation7 + $0x20] sm:$0xff]
    %v2138 = vld [vmem:[#allocation7 + $0x28] sm:$0xff]
    %v2139 = vld [vmem:[#allocation7 + $0x30] sm:$0xff]
    %v2140 = vld [vmem:[#allocation7 + $0x38] sm:$0xff]
    %v2141 = vadd.f32 %v2101, 1e-05
    %v2142 = vadd.f32 %v2102, 1e-05
    %v2143 = vadd.f32 %v2103, 1e-05
    %v2144 = vadd.f32 %v2104, 1e-05
    %v2145 = vadd.f32 %v2105, 1e-05
    %v2146 = vadd.f32 %v2106, 1e-05
    %v2147 = vadd.f32 %v2107, 1e-05
    %v2148 = vadd.f32 %v2108, 1e-05
    %v2149 = vadd.f32 %v2109, 1e-05
    %v2150 = vadd.f32 %v2110, 1e-05
    %v2151 = vadd.f32 %v2111, 1e-05
    %v2152 = vadd.f32 %v2112, 1e-05
    %v2153 = vadd.f32 %v2113, 1e-05
    %v2154 = vadd.f32 %v2114, 1e-05
    %v2155 = vadd.f32 %v2115, 1e-05
    %v2156 = vadd.f32 %v2116, 1e-05
    %v2157 = vadd.f32 %v2117, 1e-05
    %v2158 = vadd.f32 %v2118, 1e-05
    %v2159 = vadd.f32 %v2119, 1e-05
    %v2160 = vadd.f32 %v2120, 1e-05
    %v2161 = vadd.f32 %v2121, 1e-05
    %v2162 = vadd.f32 %v2122, 1e-05
    %v2163 = vadd.f32 %v2123, 1e-05
    %v2164 = vadd.f32 %v2124, 1e-05
    %v2165 = vadd.f32 %v2125, 1e-05
    %v2166 = vadd.f32 %v2126, 1e-05
    %v2167 = vadd.f32 %v2127, 1e-05
    %v2168 = vadd.f32 %v2128, 1e-05
    %v2169 = vadd.f32 %v2129, 1e-05
    %v2170 = vadd.f32 %v2130, 1e-05
    %v2171 = vadd.f32 %v2131, 1e-05
    %v2172 = vadd.f32 %v2132, 1e-05
    %v2173 = vrsqrt.pop %v2141
    %v2174 = vrsqrt.pop %v2142
    %v2175 = vrsqrt.pop %v2143
    %v2176 = vrsqrt.pop %v2144
    %v2177 = vrsqrt.pop %v2145
    %v2178 = vrsqrt.pop %v2146
    %v2179 = vrsqrt.pop %v2147
    %v2180 = vrsqrt.pop %v2148
    %v2181 = vrsqrt.pop %v2149
    %v2182 = vrsqrt.pop %v2150
    %v2183 = vrsqrt.pop %v2151
    %v2184 = vrsqrt.pop %v2152
    %v2185 = vrsqrt.pop %v2153
    %v2186 = vrsqrt.pop %v2154
    %v2187 = vrsqrt.pop %v2155
    %v2188 = vrsqrt.pop %v2156
    %v2189 = vrsqrt.pop %v2157
    %v2190 = vrsqrt.pop %v2158
    %v2191 = vrsqrt.pop %v2159
    %v2192 = vrsqrt.pop %v2160
    %v2193 = vrsqrt.pop %v2161
    %v2194 = vrsqrt.pop %v2162
    %v2195 = vrsqrt.pop %v2163
    %v2196 = vrsqrt.pop %v2164
    %v2197 = vrsqrt.pop %v2165
    %v2198 = vrsqrt.pop %v2166
    %v2199 = vrsqrt.pop %v2167
    %v2200 = vrsqrt.pop %v2168
    %v2201 = vrsqrt.pop %v2169
    %v2202 = vrsqrt.pop %v2170
    %v2203 = vrsqrt.pop %v2171
    %v2204 = vrsqrt.pop %v2172
    %v2237 = vcombine.low %v2173, %v2174
    %v2238 = vcombine.low %v2175, %v2176
    %v2240 = vunpack.c.l.s4 1983009808
    %v2241 = vunpack.c.0.s8 %v2240
    %v2242 = vlaneseq
    %v2243 = vshrl.u32 %v2242, 7
    %v2244 = vsub.s32 %v2241, %v2243
    %v2245 = vrot.slane %v2237, %v2244
    %v2247 = vunpack.c.l.s4 1983009808
    %v2248 = vunpack.c.0.s8 %v2247
    %v2249 = vlaneseq
    %v2250 = vshrl.u32 %v2249, 7
    %v2251 = vsub.s32 %v2248, %v2250
    %v2252 = vrot.slane %v2238, %v2251
    %v2253 = vcombine.low %v2245, %v2252
    %v2254 = vcombine.low %v2177, %v2178
    %v2255 = vcombine.low %v2179, %v2180
    %v2257 = vunpack.c.l.s4 1983009808
    %v2258 = vunpack.c.0.s8 %v2257
    %v2259 = vlaneseq
    %v2260 = vshrl.u32 %v2259, 7
    %v2261 = vsub.s32 %v2258, %v2260
    %v2262 = vrot.slane %v2254, %v2261
    %v2264 = vunpack.c.l.s4 1983009808
    %v2265 = vunpack.c.0.s8 %v2264
    %v2266 = vlaneseq
    %v2267 = vshrl.u32 %v2266, 7
    %v2268 = vsub.s32 %v2265, %v2267
    %v2269 = vrot.slane %v2255, %v2268
    %v2270 = vcombine.low %v2262, %v2269
    %v2271 = vcombine.low %v2181, %v2182
    %v2272 = vcombine.low %v2183, %v2184
    %v2274 = vunpack.c.l.s4 1983009808
    %v2275 = vunpack.c.0.s8 %v2274
    %v2276 = vlaneseq
    %v2277 = vshrl.u32 %v2276, 7
    %v2278 = vsub.s32 %v2275, %v2277
    %v2279 = vrot.slane %v2271, %v2278
    %v2281 = vunpack.c.l.s4 1983009808
    %v2282 = vunpack.c.0.s8 %v2281
    %v2283 = vlaneseq
    %v2284 = vshrl.u32 %v2283, 7
    %v2285 = vsub.s32 %v2282, %v2284
    %v2286 = vrot.slane %v2272, %v2285
    %v2287 = vcombine.low %v2279, %v2286
    %v2288 = vcombine.low %v2185, %v2186
    %v2289 = vcombine.low %v2187, %v2188
    %v2291 = vunpack.c.l.s4 1983009808
    %v2292 = vunpack.c.0.s8 %v2291
    %v2293 = vlaneseq
    %v2294 = vshrl.u32 %v2293, 7
    %v2295 = vsub.s32 %v2292, %v2294
    %v2296 = vrot.slane %v2288, %v2295
    %v2298 = vunpack.c.l.s4 1983009808
    %v2299 = vunpack.c.0.s8 %v2298
    %v2300 = vlaneseq
    %v2301 = vshrl.u32 %v2300, 7
    %v2302 = vsub.s32 %v2299, %v2301
    %v2303 = vrot.slane %v2289, %v2302
    %v2304 = vcombine.low %v2296, %v2303
    %v2305 = vcombine.low %v2189, %v2190
    %v2306 = vcombine.low %v2191, %v2192
    %v2308 = vunpack.c.l.s4 1983009808
    %v2309 = vunpack.c.0.s8 %v2308
    %v2310 = vlaneseq
    %v2311 = vshrl.u32 %v2310, 7
    %v2312 = vsub.s32 %v2309, %v2311
    %v2313 = vrot.slane %v2305, %v2312
    %v2315 = vunpack.c.l.s4 1983009808
    %v2316 = vunpack.c.0.s8 %v2315
    %v2317 = vlaneseq
    %v2318 = vshrl.u32 %v2317, 7
    %v2319 = vsub.s32 %v2316, %v2318
    %v2320 = vrot.slane %v2306, %v2319
    %v2321 = vcombine.low %v2313, %v2320
    %v2322 = vcombine.low %v2193, %v2194
    %v2323 = vcombine.low %v2195, %v2196
    %v2325 = vunpack.c.l.s4 1983009808
    %v2326 = vunpack.c.0.s8 %v2325
    %v2327 = vlaneseq
    %v2328 = vshrl.u32 %v2327, 7
    %v2329 = vsub.s32 %v2326, %v2328
    %v2330 = vrot.slane %v2322, %v2329
    %v2332 = vunpack.c.l.s4 1983009808
    %v2333 = vunpack.c.0.s8 %v2332
    %v2334 = vlaneseq
    %v2335 = vshrl.u32 %v2334, 7
    %v2336 = vsub.s32 %v2333, %v2335
    %v2337 = vrot.slane %v2323, %v2336
    %v2338 = vcombine.low %v2330, %v2337
    %v2339 = vcombine.low %v2197, %v2198
    %v2340 = vcombine.low %v2199, %v2200
    %v2342 = vunpack.c.l.s4 1983009808
    %v2343 = vunpack.c.0.s8 %v2342
    %v2344 = vlaneseq
    %v2345 = vshrl.u32 %v2344, 7
    %v2346 = vsub.s32 %v2343, %v2345
    %v2347 = vrot.slane %v2339, %v2346
    %v2349 = vunpack.c.l.s4 1983009808
    %v2350 = vunpack.c.0.s8 %v2349
    %v2351 = vlaneseq
    %v2352 = vshrl.u32 %v2351, 7
    %v2353 = vsub.s32 %v2350, %v2352
    %v2354 = vrot.slane %v2340, %v2353
    %v2355 = vcombine.low %v2347, %v2354
    %v2356 = vcombine.low %v2201, %v2202
    %v2357 = vcombine.low %v2203, %v2204
    %v2359 = vunpack.c.l.s4 1983009808
    %v2360 = vunpack.c.0.s8 %v2359
    %v2361 = vlaneseq
    %v2362 = vshrl.u32 %v2361, 7
    %v2363 = vsub.s32 %v2360, %v2362
    %v2364 = vrot.slane %v2356, %v2363
    %v2366 = vunpack.c.l.s4 1983009808
    %v2367 = vunpack.c.0.s8 %v2366
    %v2368 = vlaneseq
    %v2369 = vshrl.u32 %v2368, 7
    %v2370 = vsub.s32 %v2367, %v2369
    %v2371 = vrot.slane %v2357, %v2370
    %v2372 = vcombine.low %v2364, %v2371
    %v2381 = vmul.f32 %v2133, %v2253
    %v2382 = vmul.f32 %v2134, %v2270
    %v2383 = vmul.f32 %v2135, %v2287
    %v2384 = vmul.f32 %v2136, %v2304
    %v2385 = vmul.f32 %v2137, %v2321
    %v2386 = vmul.f32 %v2138, %v2338
    %v2387 = vmul.f32 %v2139, %v2355
    %v2388 = vmul.f32 %v2140, %v2372
    %v2397 = vlaneseq
    %v2398 = vshrl.u32 %v2397, 7
    %v2399 = vsub.s32 0, %v2398
    %v2400 = vrot.slane %v2381, %v2399
    %v2401 = vlaneseq
    %v2402 = vshrl.u32 %v2401, 7
    %v2403 = vsub.s32 2, %v2402
    %v2404 = vrot.slane %v2381, %v2403
    %v2405 = vlaneseq
    %v2406 = vshrl.u32 %v2405, 7
    %v2407 = vsub.s32 4, %v2406
    %v2408 = vrot.slane %v2381, %v2407
    %v2409 = vlaneseq
    %v2410 = vshrl.u32 %v2409, 7
    %v2411 = vsub.s32 6, %v2410
    %v2412 = vrot.slane %v2381, %v2411
    %v2413 = vlaneseq
    %v2414 = vshrl.u32 %v2413, 7
    %v2415 = vsub.s32 0, %v2414
    %v2416 = vrot.slane %v2382, %v2415
    %v2417 = vlaneseq
    %v2418 = vshrl.u32 %v2417, 7
    %v2419 = vsub.s32 2, %v2418
    %v2420 = vrot.slane %v2382, %v2419
    %v2421 = vlaneseq
    %v2422 = vshrl.u32 %v2421, 7
    %v2423 = vsub.s32 4, %v2422
    %v2424 = vrot.slane %v2382, %v2423
    %v2425 = vlaneseq
    %v2426 = vshrl.u32 %v2425, 7
    %v2427 = vsub.s32 6, %v2426
    %v2428 = vrot.slane %v2382, %v2427
    %v2429 = vlaneseq
    %v2430 = vshrl.u32 %v2429, 7
    %v2431 = vsub.s32 0, %v2430
    %v2432 = vrot.slane %v2383, %v2431
    %v2433 = vlaneseq
    %v2434 = vshrl.u32 %v2433, 7
    %v2435 = vsub.s32 2, %v2434
    %v2436 = vrot.slane %v2383, %v2435
    %v2437 = vlaneseq
    %v2438 = vshrl.u32 %v2437, 7
    %v2439 = vsub.s32 4, %v2438
    %v2440 = vrot.slane %v2383, %v2439
    %v2441 = vlaneseq
    %v2442 = vshrl.u32 %v2441, 7
    %v2443 = vsub.s32 6, %v2442
    %v2444 = vrot.slane %v2383, %v2443
    %v2445 = vlaneseq
    %v2446 = vshrl.u32 %v2445, 7
    %v2447 = vsub.s32 0, %v2446
    %v2448 = vrot.slane %v2384, %v2447
    %v2449 = vlaneseq
    %v2450 = vshrl.u32 %v2449, 7
    %v2451 = vsub.s32 2, %v2450
    %v2452 = vrot.slane %v2384, %v2451
    %v2453 = vlaneseq
    %v2454 = vshrl.u32 %v2453, 7
    %v2455 = vsub.s32 4, %v2454
    %v2456 = vrot.slane %v2384, %v2455
    %v2457 = vlaneseq
    %v2458 = vshrl.u32 %v2457, 7
    %v2459 = vsub.s32 6, %v2458
    %v2460 = vrot.slane %v2384, %v2459
    %v2461 = vlaneseq
    %v2462 = vshrl.u32 %v2461, 7
    %v2463 = vsub.s32 0, %v2462
    %v2464 = vrot.slane %v2385, %v2463
    %v2465 = vlaneseq
    %v2466 = vshrl.u32 %v2465, 7
    %v2467 = vsub.s32 2, %v2466
    %v2468 = vrot.slane %v2385, %v2467
    %v2469 = vlaneseq
    %v2470 = vshrl.u32 %v2469, 7
    %v2471 = vsub.s32 4, %v2470
    %v2472 = vrot.slane %v2385, %v2471
    %v2473 = vlaneseq
    %v2474 = vshrl.u32 %v2473, 7
    %v2475 = vsub.s32 6, %v2474
    %v2476 = vrot.slane %v2385, %v2475
    %v2477 = vlaneseq
    %v2478 = vshrl.u32 %v2477, 7
    %v2479 = vsub.s32 0, %v2478
    %v2480 = vrot.slane %v2386, %v2479
    %v2481 = vlaneseq
    %v2482 = vshrl.u32 %v2481, 7
    %v2483 = vsub.s32 2, %v2482
    %v2484 = vrot.slane %v2386, %v2483
    %v2485 = vlaneseq
    %v2486 = vshrl.u32 %v2485, 7
    %v2487 = vsub.s32 4, %v2486
    %v2488 = vrot.slane %v2386, %v2487
    %v2489 = vlaneseq
    %v2490 = vshrl.u32 %v2489, 7
    %v2491 = vsub.s32 6, %v2490
    %v2492 = vrot.slane %v2386, %v2491
    %v2493 = vlaneseq
    %v2494 = vshrl.u32 %v2493, 7
    %v2495 = vsub.s32 0, %v2494
    %v2496 = vrot.slane %v2387, %v2495
    %v2497 = vlaneseq
    %v2498 = vshrl.u32 %v2497, 7
    %v2499 = vsub.s32 2, %v2498
    %v2500 = vrot.slane %v2387, %v2499
    %v2501 = vlaneseq
    %v2502 = vshrl.u32 %v2501, 7
    %v2503 = vsub.s32 4, %v2502
    %v2504 = vrot.slane %v2387, %v2503
    %v2505 = vlaneseq
    %v2506 = vshrl.u32 %v2505, 7
    %v2507 = vsub.s32 6, %v2506
    %v2508 = vrot.slane %v2387, %v2507
    %v2509 = vlaneseq
    %v2510 = vshrl.u32 %v2509, 7
    %v2511 = vsub.s32 0, %v2510
    %v2512 = vrot.slane %v2388, %v2511
    %v2513 = vlaneseq
    %v2514 = vshrl.u32 %v2513, 7
    %v2515 = vsub.s32 2, %v2514
    %v2516 = vrot.slane %v2388, %v2515
    %v2517 = vlaneseq
    %v2518 = vshrl.u32 %v2517, 7
    %v2519 = vsub.s32 4, %v2518
    %v2520 = vrot.slane %v2388, %v2519
    %v2521 = vlaneseq
    %v2522 = vshrl.u32 %v2521, 7
    %v2523 = vsub.s32 6, %v2522
    %v2524 = vrot.slane %v2388, %v2523
    %v2557 = vmul.f32 %v1749, %v2400
    %v2558 = vmul.f32 %v1750, %v2404
    %v2559 = vmul.f32 %v1751, %v2408
    %v2560 = vmul.f32 %v1752, %v2412
    %v2561 = vmul.f32 %v1753, %v2416
    %v2562 = vmul.f32 %v1754, %v2420
    %v2563 = vmul.f32 %v1755, %v2424
    %v2564 = vmul.f32 %v1756, %v2428
    %v2565 = vmul.f32 %v1757, %v2432
    %v2566 = vmul.f32 %v1758, %v2436
    %v2567 = vmul.f32 %v1759, %v2440
    %v2568 = vmul.f32 %v1760, %v2444
    %v2569 = vmul.f32 %v1761, %v2448
    %v2570 = vmul.f32 %v1762, %v2452
    %v2571 = vmul.f32 %v1763, %v2456
    %v2572 = vmul.f32 %v1764, %v2460
    %v2573 = vmul.f32 %v1765, %v2464
    %v2574 = vmul.f32 %v1766, %v2468
    %v2575 = vmul.f32 %v1767, %v2472
    %v2576 = vmul.f32 %v1768, %v2476
    %v2577 = vmul.f32 %v1769, %v2480
    %v2578 = vmul.f32 %v1770, %v2484
    %v2579 = vmul.f32 %v1771, %v2488
    %v2580 = vmul.f32 %v1772, %v2492
    %v2581 = vmul.f32 %v1773, %v2496
    %v2582 = vmul.f32 %v1774, %v2500
    %v2583 = vmul.f32 %v1775, %v2504
    %v2584 = vmul.f32 %v1776, %v2508
    %v2585 = vmul.f32 %v1777, %v2512
    %v2586 = vmul.f32 %v1778, %v2516
    %v2587 = vmul.f32 %v1779, %v2520
    %v2588 = vmul.f32 %v1780, %v2524
    %v2621 = vcombine.low %v2557, %v2558
    %v2622 = vcombine.low %v2559, %v2560
    %v2624 = vunpack.c.l.s4 1983009808
    %v2625 = vunpack.c.0.s8 %v2624
    %v2626 = vlaneseq
    %v2627 = vshrl.u32 %v2626, 7
    %v2628 = vsub.s32 %v2625, %v2627
    %v2629 = vrot.slane %v2621, %v2628
    %v2631 = vunpack.c.l.s4 1983009808
    %v2632 = vunpack.c.0.s8 %v2631
    %v2633 = vlaneseq
    %v2634 = vshrl.u32 %v2633, 7
    %v2635 = vsub.s32 %v2632, %v2634
    %v2636 = vrot.slane %v2622, %v2635
    %v2637 = vcombine.low %v2629, %v2636
    %v2638 = vcombine.low %v2561, %v2562
    %v2639 = vcombine.low %v2563, %v2564
    %v2641 = vunpack.c.l.s4 1983009808
    %v2642 = vunpack.c.0.s8 %v2641
    %v2643 = vlaneseq
    %v2644 = vshrl.u32 %v2643, 7
    %v2645 = vsub.s32 %v2642, %v2644
    %v2646 = vrot.slane %v2638, %v2645
    %v2648 = vunpack.c.l.s4 1983009808
    %v2649 = vunpack.c.0.s8 %v2648
    %v2650 = vlaneseq
    %v2651 = vshrl.u32 %v2650, 7
    %v2652 = vsub.s32 %v2649, %v2651
    %v2653 = vrot.slane %v2639, %v2652
    %v2654 = vcombine.low %v2646, %v2653
    %v2655 = vcombine.low %v2565, %v2566
    %v2656 = vcombine.low %v2567, %v2568
    %v2658 = vunpack.c.l.s4 1983009808
    %v2659 = vunpack.c.0.s8 %v2658
    %v2660 = vlaneseq
    %v2661 = vshrl.u32 %v2660, 7
    %v2662 = vsub.s32 %v2659, %v2661
    %v2663 = vrot.slane %v2655, %v2662
    %v2665 = vunpack.c.l.s4 1983009808
    %v2666 = vunpack.c.0.s8 %v2665
    %v2667 = vlaneseq
    %v2668 = vshrl.u32 %v2667, 7
    %v2669 = vsub.s32 %v2666, %v2668
    %v2670 = vrot.slane %v2656, %v2669
    %v2671 = vcombine.low %v2663, %v2670
    %v2672 = vcombine.low %v2569, %v2570
    %v2673 = vcombine.low %v2571, %v2572
    %v2675 = vunpack.c.l.s4 1983009808
    %v2676 = vunpack.c.0.s8 %v2675
    %v2677 = vlaneseq
    %v2678 = vshrl.u32 %v2677, 7
    %v2679 = vsub.s32 %v2676, %v2678
    %v2680 = vrot.slane %v2672, %v2679
    %v2682 = vunpack.c.l.s4 1983009808
    %v2683 = vunpack.c.0.s8 %v2682
    %v2684 = vlaneseq
    %v2685 = vshrl.u32 %v2684, 7
    %v2686 = vsub.s32 %v2683, %v2685
    %v2687 = vrot.slane %v2673, %v2686
    %v2688 = vcombine.low %v2680, %v2687
    %v2689 = vcombine.low %v2573, %v2574
    %v2690 = vcombine.low %v2575, %v2576
    %v2692 = vunpack.c.l.s4 1983009808
    %v2693 = vunpack.c.0.s8 %v2692
    %v2694 = vlaneseq
    %v2695 = vshrl.u32 %v2694, 7
    %v2696 = vsub.s32 %v2693, %v2695
    %v2697 = vrot.slane %v2689, %v2696
    %v2699 = vunpack.c.l.s4 1983009808
    %v2700 = vunpack.c.0.s8 %v2699
    %v2701 = vlaneseq
    %v2702 = vshrl.u32 %v2701, 7
    %v2703 = vsub.s32 %v2700, %v2702
    %v2704 = vrot.slane %v2690, %v2703
    %v2705 = vcombine.low %v2697, %v2704
    %v2706 = vcombine.low %v2577, %v2578
    %v2707 = vcombine.low %v2579, %v2580
    %v2709 = vunpack.c.l.s4 1983009808
    %v2710 = vunpack.c.0.s8 %v2709
    %v2711 = vlaneseq
    %v2712 = vshrl.u32 %v2711, 7
    %v2713 = vsub.s32 %v2710, %v2712
    %v2714 = vrot.slane %v2706, %v2713
    %v2716 = vunpack.c.l.s4 1983009808
    %v2717 = vunpack.c.0.s8 %v2716
    %v2718 = vlaneseq
    %v2719 = vshrl.u32 %v2718, 7
    %v2720 = vsub.s32 %v2717, %v2719
    %v2721 = vrot.slane %v2707, %v2720
    %v2722 = vcombine.low %v2714, %v2721
    %v2723 = vcombine.low %v2581, %v2582
    %v2724 = vcombine.low %v2583, %v2584
    %v2726 = vunpack.c.l.s4 1983009808
    %v2727 = vunpack.c.0.s8 %v2726
    %v2728 = vlaneseq
    %v2729 = vshrl.u32 %v2728, 7
    %v2730 = vsub.s32 %v2727, %v2729
    %v2731 = vrot.slane %v2723, %v2730
    %v2733 = vunpack.c.l.s4 1983009808
    %v2734 = vunpack.c.0.s8 %v2733
    %v2735 = vlaneseq
    %v2736 = vshrl.u32 %v2735, 7
    %v2737 = vsub.s32 %v2734, %v2736
    %v2738 = vrot.slane %v2724, %v2737
    %v2739 = vcombine.low %v2731, %v2738
    %v2740 = vcombine.low %v2585, %v2586
    %v2741 = vcombine.low %v2587, %v2588
    %v2743 = vunpack.c.l.s4 1983009808
    %v2744 = vunpack.c.0.s8 %v2743
    %v2745 = vlaneseq
    %v2746 = vshrl.u32 %v2745, 7
    %v2747 = vsub.s32 %v2744, %v2746
    %v2748 = vrot.slane %v2740, %v2747
    %v2750 = vunpack.c.l.s4 1983009808
    %v2751 = vunpack.c.0.s8 %v2750
    %v2752 = vlaneseq
    %v2753 = vshrl.u32 %v2752, 7
    %v2754 = vsub.s32 %v2751, %v2753
    %v2755 = vrot.slane %v2741, %v2754
    %v2756 = vcombine.low %v2748, %v2755
    %v2757 = vrot.slane %v2637, 7
    %v2758 = vrot.slane %v2654, 7
    %v2759 = vrot.slane %v2671, 7
    %v2760 = vrot.slane %v2688, 7
    %v2761 = vrot.slane %v2705, 7
    %v2762 = vrot.slane %v2722, 7
    %v2763 = vrot.slane %v2739, 7
    %v2764 = vrot.slane %v2756, 7
    %v2773 = vsub.f32 %v2133, %v2757
    %v2774 = vsub.f32 %v2134, %v2758
    %v2775 = vsub.f32 %v2135, %v2759
    %v2776 = vsub.f32 %v2136, %v2760
    %v2777 = vsub.f32 %v2137, %v2761
    %v2778 = vsub.f32 %v2138, %v2762
    %v2779 = vsub.f32 %v2139, %v2763
    %v2780 = vsub.f32 %v2140, %v2764
    %v2781 = vlaneseq
    %v2782 = vshrl.u32 %v2781, 7
    %v2783 = vsub.s32 0, %v2782
    %v2784 = vrot.slane %v2400, %v2783
    %v2785 = vlaneseq
    %v2786 = vshrl.u32 %v2785, 7
    %v2787 = vsub.s32 0, %v2786
    %v2788 = vrot.slane %v2404, %v2787
    %v2789 = vlaneseq
    %v2790 = vshrl.u32 %v2789, 7
    %v2791 = vsub.s32 0, %v2790
    %v2792 = vrot.slane %v2408, %v2791
    %v2793 = vlaneseq
    %v2794 = vshrl.u32 %v2793, 7
    %v2795 = vsub.s32 0, %v2794
    %v2796 = vrot.slane %v2412, %v2795
    %v2797 = vlaneseq
    %v2798 = vshrl.u32 %v2797, 7
    %v2799 = vsub.s32 0, %v2798
    %v2800 = vrot.slane %v2416, %v2799
    %v2801 = vlaneseq
    %v2802 = vshrl.u32 %v2801, 7
    %v2803 = vsub.s32 0, %v2802
    %v2804 = vrot.slane %v2420, %v2803
    %v2805 = vlaneseq
    %v2806 = vshrl.u32 %v2805, 7
    %v2807 = vsub.s32 0, %v2806
    %v2808 = vrot.slane %v2424, %v2807
    %v2809 = vlaneseq
    %v2810 = vshrl.u32 %v2809, 7
    %v2811 = vsub.s32 0, %v2810
    %v2812 = vrot.slane %v2428, %v2811
    %v2813 = vlaneseq
    %v2814 = vshrl.u32 %v2813, 7
    %v2815 = vsub.s32 0, %v2814
    %v2816 = vrot.slane %v2432, %v2815
    %v2817 = vlaneseq
    %v2818 = vshrl.u32 %v2817, 7
    %v2819 = vsub.s32 0, %v2818
    %v2820 = vrot.slane %v2436, %v2819
    %v2821 = vlaneseq
    %v2822 = vshrl.u32 %v2821, 7
    %v2823 = vsub.s32 0, %v2822
    %v2824 = vrot.slane %v2440, %v2823
    %v2825 = vlaneseq
    %v2826 = vshrl.u32 %v2825, 7
    %v2827 = vsub.s32 0, %v2826
    %v2828 = vrot.slane %v2444, %v2827
    %v2829 = vlaneseq
    %v2830 = vshrl.u32 %v2829, 7
    %v2831 = vsub.s32 0, %v2830
    %v2832 = vrot.slane %v2448, %v2831
    %v2833 = vlaneseq
    %v2834 = vshrl.u32 %v2833, 7
    %v2835 = vsub.s32 0, %v2834
    %v2836 = vrot.slane %v2452, %v2835
    %v2837 = vlaneseq
    %v2838 = vshrl.u32 %v2837, 7
    %v2839 = vsub.s32 0, %v2838
    %v2840 = vrot.slane %v2456, %v2839
    %v2841 = vlaneseq
    %v2842 = vshrl.u32 %v2841, 7
    %v2843 = vsub.s32 0, %v2842
    %v2844 = vrot.slane %v2460, %v2843
    %v2845 = vlaneseq
    %v2846 = vshrl.u32 %v2845, 7
    %v2847 = vsub.s32 0, %v2846
    %v2848 = vrot.slane %v2464, %v2847
    %v2849 = vlaneseq
    %v2850 = vshrl.u32 %v2849, 7
    %v2851 = vsub.s32 0, %v2850
    %v2852 = vrot.slane %v2468, %v2851
    %v2853 = vlaneseq
    %v2854 = vshrl.u32 %v2853, 7
    %v2855 = vsub.s32 0, %v2854
    %v2856 = vrot.slane %v2472, %v2855
    %v2857 = vlaneseq
    %v2858 = vshrl.u32 %v2857, 7
    %v2859 = vsub.s32 0, %v2858
    %v2860 = vrot.slane %v2476, %v2859
    %v2861 = vlaneseq
    %v2862 = vshrl.u32 %v2861, 7
    %v2863 = vsub.s32 0, %v2862
    %v2864 = vrot.slane %v2480, %v2863
    %v2865 = vlaneseq
    %v2866 = vshrl.u32 %v2865, 7
    %v2867 = vsub.s32 0, %v2866
    %v2868 = vrot.slane %v2484, %v2867
    %v2869 = vlaneseq
    %v2870 = vshrl.u32 %v2869, 7
    %v2871 = vsub.s32 0, %v2870
    %v2872 = vrot.slane %v2488, %v2871
    %v2873 = vlaneseq
    %v2874 = vshrl.u32 %v2873, 7
    %v2875 = vsub.s32 0, %v2874
    %v2876 = vrot.slane %v2492, %v2875
    %v2877 = vlaneseq
    %v2878 = vshrl.u32 %v2877, 7
    %v2879 = vsub.s32 0, %v2878
    %v2880 = vrot.slane %v2496, %v2879
    %v2881 = vlaneseq
    %v2882 = vshrl.u32 %v2881, 7
    %v2883 = vsub.s32 0, %v2882
    %v2884 = vrot.slane %v2500, %v2883
    %v2885 = vlaneseq
    %v2886 = vshrl.u32 %v2885, 7
    %v2887 = vsub.s32 0, %v2886
    %v2888 = vrot.slane %v2504, %v2887
    %v2889 = vlaneseq
    %v2890 = vshrl.u32 %v2889, 7
    %v2891 = vsub.s32 0, %v2890
    %v2892 = vrot.slane %v2508, %v2891
    %v2893 = vlaneseq
    %v2894 = vshrl.u32 %v2893, 7
    %v2895 = vsub.s32 0, %v2894
    %v2896 = vrot.slane %v2512, %v2895
    %v2897 = vlaneseq
    %v2898 = vshrl.u32 %v2897, 7
    %v2899 = vsub.s32 0, %v2898
    %v2900 = vrot.slane %v2516, %v2899
    %v2901 = vlaneseq
    %v2902 = vshrl.u32 %v2901, 7
    %v2903 = vsub.s32 0, %v2902
    %v2904 = vrot.slane %v2520, %v2903
    %v2905 = vlaneseq
    %v2906 = vshrl.u32 %v2905, 7
    %v2907 = vsub.s32 0, %v2906
    %v2908 = vrot.slane %v2524, %v2907
    %v2909 = vmul.f32 %v935, %v2784
    %v2910 = vmul.f32 %v937, %v2788
    %v2911 = vmul.f32 %v976, %v2792
    %v2912 = vmul.f32 %v978, %v2796
    %v2913 = vmul.f32 %v1017, %v2800
    %v2914 = vmul.f32 %v1019, %v2804
    %v2915 = vmul.f32 %v1058, %v2808
    %v2916 = vmul.f32 %v1060, %v2812
    %v2917 = vmul.f32 %v1099, %v2816
    %v2918 = vmul.f32 %v1101, %v2820
    %v2919 = vmul.f32 %v1140, %v2824
    %v2920 = vmul.f32 %v1142, %v2828
    %v2921 = vmul.f32 %v1181, %v2832
    %v2922 = vmul.f32 %v1183, %v2836
    %v2923 = vmul.f32 %v1222, %v2840
    %v2924 = vmul.f32 %v1224, %v2844
    %v2925 = vmul.f32 %v1263, %v2848
    %v2926 = vmul.f32 %v1265, %v2852
    %v2927 = vmul.f32 %v1304, %v2856
    %v2928 = vmul.f32 %v1306, %v2860
    %v2929 = vmul.f32 %v1345, %v2864
    %v2930 = vmul.f32 %v1347, %v2868
    %v2931 = vmul.f32 %v1386, %v2872
    %v2932 = vmul.f32 %v1388, %v2876
    %v2933 = vmul.f32 %v1427, %v2880
    %v2934 = vmul.f32 %v1429, %v2884
    %v2935 = vmul.f32 %v1468, %v2888
    %v2936 = vmul.f32 %v1470, %v2892
    %v2937 = vmul.f32 %v1509, %v2896
    %v2938 = vmul.f32 %v1511, %v2900
    %v2939 = vmul.f32 %v1550, %v2904
    %v2940 = vmul.f32 %v1552, %v2908
    %v2949 = vlaneseq
    %v2950 = vshrl.u32 %v2949, 7
    %v2951 = vsub.s32 1, %v2950
    %v2952 = vrot.slane %v2773, %v2951
    %v2953 = vlaneseq
    %v2954 = vshrl.u32 %v2953, 7
    %v2955 = vsub.s32 3, %v2954
    %v2956 = vrot.slane %v2773, %v2955
    %v2957 = vlaneseq
    %v2958 = vshrl.u32 %v2957, 7
    %v2959 = vsub.s32 5, %v2958
    %v2960 = vrot.slane %v2773, %v2959
    %v2961 = vlaneseq
    %v2962 = vshrl.u32 %v2961, 7
    %v2963 = vsub.s32 7, %v2962
    %v2964 = vrot.slane %v2773, %v2963
    %v2965 = vlaneseq
    %v2966 = vshrl.u32 %v2965, 7
    %v2967 = vsub.s32 1, %v2966
    %v2968 = vrot.slane %v2774, %v2967
    %v2969 = vlaneseq
    %v2970 = vshrl.u32 %v2969, 7
    %v2971 = vsub.s32 3, %v2970
    %v2972 = vrot.slane %v2774, %v2971
    %v2973 = vlaneseq
    %v2974 = vshrl.u32 %v2973, 7
    %v2975 = vsub.s32 5, %v2974
    %v2976 = vrot.slane %v2774, %v2975
    %v2977 = vlaneseq
    %v2978 = vshrl.u32 %v2977, 7
    %v2979 = vsub.s32 7, %v2978
    %v2980 = vrot.slane %v2774, %v2979
    %v2981 = vlaneseq
    %v2982 = vshrl.u32 %v2981, 7
    %v2983 = vsub.s32 1, %v2982
    %v2984 = vrot.slane %v2775, %v2983
    %v2985 = vlaneseq
    %v2986 = vshrl.u32 %v2985, 7
    %v2987 = vsub.s32 3, %v2986
    %v2988 = vrot.slane %v2775, %v2987
    %v2989 = vlaneseq
    %v2990 = vshrl.u32 %v2989, 7
    %v2991 = vsub.s32 5, %v2990
    %v2992 = vrot.slane %v2775, %v2991
    %v2993 = vlaneseq
    %v2994 = vshrl.u32 %v2993, 7
    %v2995 = vsub.s32 7, %v2994
    %v2996 = vrot.slane %v2775, %v2995
    %v2997 = vlaneseq
    %v2998 = vshrl.u32 %v2997, 7
    %v2999 = vsub.s32 1, %v2998
    %v3000 = vrot.slane %v2776, %v2999
    %v3001 = vlaneseq
    %v3002 = vshrl.u32 %v3001, 7
    %v3003 = vsub.s32 3, %v3002
    %v3004 = vrot.slane %v2776, %v3003
    %v3005 = vlaneseq
    %v3006 = vshrl.u32 %v3005, 7
    %v3007 = vsub.s32 5, %v3006
    %v3008 = vrot.slane %v2776, %v3007
    %v3009 = vlaneseq
    %v3010 = vshrl.u32 %v3009, 7
    %v3011 = vsub.s32 7, %v3010
    %v3012 = vrot.slane %v2776, %v3011
    %v3013 = vlaneseq
    %v3014 = vshrl.u32 %v3013, 7
    %v3015 = vsub.s32 1, %v3014
    %v3016 = vrot.slane %v2777, %v3015
    %v3017 = vlaneseq
    %v3018 = vshrl.u32 %v3017, 7
    %v3019 = vsub.s32 3, %v3018
    %v3020 = vrot.slane %v2777, %v3019
    %v3021 = vlaneseq
    %v3022 = vshrl.u32 %v3021, 7
    %v3023 = vsub.s32 5, %v3022
    %v3024 = vrot.slane %v2777, %v3023
    %v3025 = vlaneseq
    %v3026 = vshrl.u32 %v3025, 7
    %v3027 = vsub.s32 7, %v3026
    %v3028 = vrot.slane %v2777, %v3027
    %v3029 = vlaneseq
    %v3030 = vshrl.u32 %v3029, 7
    %v3031 = vsub.s32 1, %v3030
    %v3032 = vrot.slane %v2778, %v3031
    %v3033 = vlaneseq
    %v3034 = vshrl.u32 %v3033, 7
    %v3035 = vsub.s32 3, %v3034
    %v3036 = vrot.slane %v2778, %v3035
    %v3037 = vlaneseq
    %v3038 = vshrl.u32 %v3037, 7
    %v3039 = vsub.s32 5, %v3038
    %v3040 = vrot.slane %v2778, %v3039
    %v3041 = vlaneseq
    %v3042 = vshrl.u32 %v3041, 7
    %v3043 = vsub.s32 7, %v3042
    %v3044 = vrot.slane %v2778, %v3043
    %v3045 = vlaneseq
    %v3046 = vshrl.u32 %v3045, 7
    %v3047 = vsub.s32 1, %v3046
    %v3048 = vrot.slane %v2779, %v3047
    %v3049 = vlaneseq
    %v3050 = vshrl.u32 %v3049, 7
    %v3051 = vsub.s32 3, %v3050
    %v3052 = vrot.slane %v2779, %v3051
    %v3053 = vlaneseq
    %v3054 = vshrl.u32 %v3053, 7
    %v3055 = vsub.s32 5, %v3054
    %v3056 = vrot.slane %v2779, %v3055
    %v3057 = vlaneseq
    %v3058 = vshrl.u32 %v3057, 7
    %v3059 = vsub.s32 7, %v3058
    %v3060 = vrot.slane %v2779, %v3059
    %v3061 = vlaneseq
    %v3062 = vshrl.u32 %v3061, 7
    %v3063 = vsub.s32 1, %v3062
    %v3064 = vrot.slane %v2780, %v3063
    %v3065 = vlaneseq
    %v3066 = vshrl.u32 %v3065, 7
    %v3067 = vsub.s32 3, %v3066
    %v3068 = vrot.slane %v2780, %v3067
    %v3069 = vlaneseq
    %v3070 = vshrl.u32 %v3069, 7
    %v3071 = vsub.s32 5, %v3070
    %v3072 = vrot.slane %v2780, %v3071
    %v3073 = vlaneseq
    %v3074 = vshrl.u32 %v3073, 7
    %v3075 = vsub.s32 7, %v3074
    %v3076 = vrot.slane %v2780, %v3075
    %v3109 = vlaneseq
    %v3110 = vshrl.u32 %v3109, 7
    %v3111 = vsub.s32 1, %v3110
    %v3112 = vrot.slane %v2952, %v3111
    %v3113 = vlaneseq
    %v3114 = vshrl.u32 %v3113, 7
    %v3115 = vsub.s32 1, %v3114
    %v3116 = vrot.slane %v2956, %v3115
    %v3117 = vlaneseq
    %v3118 = vshrl.u32 %v3117, 7
    %v3119 = vsub.s32 1, %v3118
    %v3120 = vrot.slane %v2960, %v3119
    %v3121 = vlaneseq
    %v3122 = vshrl.u32 %v3121, 7
    %v3123 = vsub.s32 1, %v3122
    %v3124 = vrot.slane %v2964, %v3123
    %v3125 = vlaneseq
    %v3126 = vshrl.u32 %v3125, 7
    %v3127 = vsub.s32 1, %v3126
    %v3128 = vrot.slane %v2968, %v3127
    %v3129 = vlaneseq
    %v3130 = vshrl.u32 %v3129, 7
    %v3131 = vsub.s32 1, %v3130
    %v3132 = vrot.slane %v2972, %v3131
    %v3133 = vlaneseq
    %v3134 = vshrl.u32 %v3133, 7
    %v3135 = vsub.s32 1, %v3134
    %v3136 = vrot.slane %v2976, %v3135
    %v3137 = vlaneseq
    %v3138 = vshrl.u32 %v3137, 7
    %v3139 = vsub.s32 1, %v3138
    %v3140 = vrot.slane %v2980, %v3139
    %v3141 = vlaneseq
    %v3142 = vshrl.u32 %v3141, 7
    %v3143 = vsub.s32 1, %v3142
    %v3144 = vrot.slane %v2984, %v3143
    %v3145 = vlaneseq
    %v3146 = vshrl.u32 %v3145, 7
    %v3147 = vsub.s32 1, %v3146
    %v3148 = vrot.slane %v2988, %v3147
    %v3149 = vlaneseq
    %v3150 = vshrl.u32 %v3149, 7
    %v3151 = vsub.s32 1, %v3150
    %v3152 = vrot.slane %v2992, %v3151
    %v3153 = vlaneseq
    %v3154 = vshrl.u32 %v3153, 7
    %v3155 = vsub.s32 1, %v3154
    %v3156 = vrot.slane %v2996, %v3155
    %v3157 = vlaneseq
    %v3158 = vshrl.u32 %v3157, 7
    %v3159 = vsub.s32 1, %v3158
    %v3160 = vrot.slane %v3000, %v3159
    %v3161 = vlaneseq
    %v3162 = vshrl.u32 %v3161, 7
    %v3163 = vsub.s32 1, %v3162
    %v3164 = vrot.slane %v3004, %v3163
    %v3165 = vlaneseq
    %v3166 = vshrl.u32 %v3165, 7
    %v3167 = vsub.s32 1, %v3166
    %v3168 = vrot.slane %v3008, %v3167
    %v3169 = vlaneseq
    %v3170 = vshrl.u32 %v3169, 7
    %v3171 = vsub.s32 1, %v3170
    %v3172 = vrot.slane %v3012, %v3171
    %v3173 = vlaneseq
    %v3174 = vshrl.u32 %v3173, 7
    %v3175 = vsub.s32 1, %v3174
    %v3176 = vrot.slane %v3016, %v3175
    %v3177 = vlaneseq
    %v3178 = vshrl.u32 %v3177, 7
    %v3179 = vsub.s32 1, %v3178
    %v3180 = vrot.slane %v3020, %v3179
    %v3181 = vlaneseq
    %v3182 = vshrl.u32 %v3181, 7
    %v3183 = vsub.s32 1, %v3182
    %v3184 = vrot.slane %v3024, %v3183
    %v3185 = vlaneseq
    %v3186 = vshrl.u32 %v3185, 7
    %v3187 = vsub.s32 1, %v3186
    %v3188 = vrot.slane %v3028, %v3187
    %v3189 = vlaneseq
    %v3190 = vshrl.u32 %v3189, 7
    %v3191 = vsub.s32 1, %v3190
    %v3192 = vrot.slane %v3032, %v3191
    %v3193 = vlaneseq
    %v3194 = vshrl.u32 %v3193, 7
    %v3195 = vsub.s32 1, %v3194
    %v3196 = vrot.slane %v3036, %v3195
    %v3197 = vlaneseq
    %v3198 = vshrl.u32 %v3197, 7
    %v3199 = vsub.s32 1, %v3198
    %v3200 = vrot.slane %v3040, %v3199
    %v3201 = vlaneseq
    %v3202 = vshrl.u32 %v3201, 7
    %v3203 = vsub.s32 1, %v3202
    %v3204 = vrot.slane %v3044, %v3203
    %v3205 = vlaneseq
    %v3206 = vshrl.u32 %v3205, 7
    %v3207 = vsub.s32 1, %v3206
    %v3208 = vrot.slane %v3048, %v3207
    %v3209 = vlaneseq
    %v3210 = vshrl.u32 %v3209, 7
    %v3211 = vsub.s32 1, %v3210
    %v3212 = vrot.slane %v3052, %v3211
    %v3213 = vlaneseq
    %v3214 = vshrl.u32 %v3213, 7
    %v3215 = vsub.s32 1, %v3214
    %v3216 = vrot.slane %v3056, %v3215
    %v3217 = vlaneseq
    %v3218 = vshrl.u32 %v3217, 7
    %v3219 = vsub.s32 1, %v3218
    %v3220 = vrot.slane %v3060, %v3219
    %v3221 = vlaneseq
    %v3222 = vshrl.u32 %v3221, 7
    %v3223 = vsub.s32 1, %v3222
    %v3224 = vrot.slane %v3064, %v3223
    %v3225 = vlaneseq
    %v3226 = vshrl.u32 %v3225, 7
    %v3227 = vsub.s32 1, %v3226
    %v3228 = vrot.slane %v3068, %v3227
    %v3229 = vlaneseq
    %v3230 = vshrl.u32 %v3229, 7
    %v3231 = vsub.s32 1, %v3230
    %v3232 = vrot.slane %v3072, %v3231
    %v3233 = vlaneseq
    %v3234 = vshrl.u32 %v3233, 7
    %v3235 = vsub.s32 1, %v3234
    %v3236 = vrot.slane %v3076, %v3235
    %v3237 = vadd.f32 %v2909, %v3112
    %v3238 = vadd.f32 %v2910, %v3116
    %v3239 = vadd.f32 %v2911, %v3120
    %v3240 = vadd.f32 %v2912, %v3124
    %v3241 = vadd.f32 %v2913, %v3128
    %v3242 = vadd.f32 %v2914, %v3132
    %v3243 = vadd.f32 %v2915, %v3136
    %v3244 = vadd.f32 %v2916, %v3140
    %v3245 = vadd.f32 %v2917, %v3144
    %v3246 = vadd.f32 %v2918, %v3148
    %v3247 = vadd.f32 %v2919, %v3152
    %v3248 = vadd.f32 %v2920, %v3156
    %v3249 = vadd.f32 %v2921, %v3160
    %v3250 = vadd.f32 %v2922, %v3164
    %v3251 = vadd.f32 %v2923, %v3168
    %v3252 = vadd.f32 %v2924, %v3172
    %v3253 = vadd.f32 %v2925, %v3176
    %v3254 = vadd.f32 %v2926, %v3180
    %v3255 = vadd.f32 %v2927, %v3184
    %v3256 = vadd.f32 %v2928, %v3188
    %v3257 = vadd.f32 %v2929, %v3192
    %v3258 = vadd.f32 %v2930, %v3196
    %v3259 = vadd.f32 %v2931, %v3200
    %v3260 = vadd.f32 %v2932, %v3204
    %v3261 = vadd.f32 %v2933, %v3208
    %v3262 = vadd.f32 %v2934, %v3212
    %v3263 = vadd.f32 %v2935, %v3216
    %v3264 = vadd.f32 %v2936, %v3220
    %v3265 = vadd.f32 %v2937, %v3224
    %v3266 = vadd.f32 %v2938, %v3228
    %v3267 = vadd.f32 %v2939, %v3232
    %v3268 = vadd.f32 %v2940, %v3236
    %v3269 = vmax.f32 %v3237, 0.0
    %v3270 = vmax.f32 %v3238, 0.0
    %v3271 = vmax.f32 %v3239, 0.0
    %v3272 = vmax.f32 %v3240, 0.0
    %v3273 = vmax.f32 %v3241, 0.0
    %v3274 = vmax.f32 %v3242, 0.0
    %v3275 = vmax.f32 %v3243, 0.0
    %v3276 = vmax.f32 %v3244, 0.0
    %v3277 = vmax.f32 %v3245, 0.0
    %v3278 = vmax.f32 %v3246, 0.0
    %v3279 = vmax.f32 %v3247, 0.0
    %v3280 = vmax.f32 %v3248, 0.0
    %v3281 = vmax.f32 %v3249, 0.0
    %v3282 = vmax.f32 %v3250, 0.0
    %v3283 = vmax.f32 %v3251, 0.0
    %v3284 = vmax.f32 %v3252, 0.0
    %v3285 = vmax.f32 %v3253, 0.0
    %v3286 = vmax.f32 %v3254, 0.0
    %v3287 = vmax.f32 %v3255, 0.0
    %v3288 = vmax.f32 %v3256, 0.0
    %v3289 = vmax.f32 %v3257, 0.0
    %v3290 = vmax.f32 %v3258, 0.0
    %v3291 = vmax.f32 %v3259, 0.0
    %v3292 = vmax.f32 %v3260, 0.0
    %v3293 = vmax.f32 %v3261, 0.0
    %v3294 = vmax.f32 %v3262, 0.0
    %v3295 = vmax.f32 %v3263, 0.0
    %v3296 = vmax.f32 %v3264, 0.0
    %v3297 = vmax.f32 %v3265, 0.0
    %v3298 = vmax.f32 %v3266, 0.0
    %v3299 = vmax.f32 %v3267, 0.0
    %v3300 = vmax.f32 %v3268, 0.0
    %v3301 = vpack.c.bf16 %v3269, %v3269
    %v3302 = vpack.c.bf16 %v3270, %v3270
    %v3303 = vpack.c.bf16 %v3271, %v3271
    %v3304 = vpack.c.bf16 %v3272, %v3272
    %v3305 = vpack.c.bf16 %v3273, %v3273
    %v3306 = vpack.c.bf16 %v3274, %v3274
    %v3307 = vpack.c.bf16 %v3275, %v3275
    %v3308 = vpack.c.bf16 %v3276, %v3276
    %v3309 = vpack.c.bf16 %v3277, %v3277
    %v3310 = vpack.c.bf16 %v3278, %v3278
    %v3311 = vpack.c.bf16 %v3279, %v3279
    %v3312 = vpack.c.bf16 %v3280, %v3280
    %v3313 = vpack.c.bf16 %v3281, %v3281
    %v3314 = vpack.c.bf16 %v3282, %v3282
    %v3315 = vpack.c.bf16 %v3283, %v3283
    %v3316 = vpack.c.bf16 %v3284, %v3284
    %v3317 = vpack.c.bf16 %v3285, %v3285
    %v3318 = vpack.c.bf16 %v3286, %v3286
    %v3319 = vpack.c.bf16 %v3287, %v3287
    %v3320 = vpack.c.bf16 %v3288, %v3288
    %v3321 = vpack.c.bf16 %v3289, %v3289
    %v3322 = vpack.c.bf16 %v3290, %v3290
    %v3323 = vpack.c.bf16 %v3291, %v3291
    %v3324 = vpack.c.bf16 %v3292, %v3292
    %v3325 = vpack.c.bf16 %v3293, %v3293
    %v3326 = vpack.c.bf16 %v3294, %v3294
    %v3327 = vpack.c.bf16 %v3295, %v3295
    %v3328 = vpack.c.bf16 %v3296, %v3296
    %v3329 = vpack.c.bf16 %v3297, %v3297
    %v3330 = vpack.c.bf16 %v3298, %v3298
    %v3331 = vpack.c.bf16 %v3299, %v3299
    %v3332 = vpack.c.bf16 %v3300, %v3300
    %v3333 = vld [vmem:[#allocation11] sm:$0xff]
    %v3334 = vld [vmem:[#allocation11 + $0x8] sm:$0xff]
    %v3335 = vld [vmem:[#allocation8] sm:$0xff]
    %v3336 = vld [vmem:[#allocation8 + $0x8] sm:$0xff]
    %v3337 = vld [vmem:[#allocation8 + $0x10] sm:$0xff]
    %v3338 = vld [vmem:[#allocation8 + $0x18] sm:$0xff]
    %v3339 = vld [vmem:[#allocation8 + $0x20] sm:$0xff]
    %v3340 = vld [vmem:[#allocation8 + $0x28] sm:$0xff]
    %v3341 = vld [vmem:[#allocation8 + $0x30] sm:$0xff]
    %v3342 = vld [vmem:[#allocation8 + $0x38] sm:$0xff]
    %v3343 = vld [vmem:[#allocation8 + $0x40] sm:$0xff]
    %v3344 = vld [vmem:[#allocation8 + $0x48] sm:$0xff]
    %v3345 = vld [vmem:[#allocation8 + $0x50] sm:$0xff]
    %v3346 = vld [vmem:[#allocation8 + $0x58] sm:$0xff]
    %v3347 = vld [vmem:[#allocation8 + $0x60] sm:$0xff]
    %v3348 = vld [vmem:[#allocation8 + $0x68] sm:$0xff]
    %v3349 = vld [vmem:[#allocation8 + $0x70] sm:$0xff]
    %v3350 = vld [vmem:[#allocation8 + $0x78] sm:$0xff]
    %v3351 = vld [vmem:[#allocation8 + $0x80] sm:$0xff]
    %v3352 = vld [vmem:[#allocation8 + $0x88] sm:$0xff]
    %v3353 = vld [vmem:[#allocation8 + $0x90] sm:$0xff]
    %v3354 = vld [vmem:[#allocation8 + $0x98] sm:$0xff]
    %v3355 = vld [vmem:[#allocation8 + $0xa0] sm:$0xff]
    %v3356 = vld [vmem:[#allocation8 + $0xa8] sm:$0xff]
    %v3357 = vld [vmem:[#allocation8 + $0xb0] sm:$0xff]
    %v3358 = vld [vmem:[#allocation8 + $0xb8] sm:$0xff]
    %v3359 = vld [vmem:[#allocation8 + $0xc0] sm:$0xff]
    %v3360 = vld [vmem:[#allocation8 + $0xc8] sm:$0xff]
    %v3361 = vld [vmem:[#allocation8 + $0xd0] sm:$0xff]
    %v3362 = vld [vmem:[#allocation8 + $0xd8] sm:$0xff]
    %v3363 = vld [vmem:[#allocation8 + $0xe0] sm:$0xff]
    %v3364 = vld [vmem:[#allocation8 + $0xe8] sm:$0xff]
    %v3365 = vld [vmem:[#allocation8 + $0xf0] sm:$0xff]
    %v3366 = vld [vmem:[#allocation8 + $0xf8] sm:$0xff]
    %v3367 = vld [vmem:[#allocation8 + $0x100] sm:$0xff]
    %v3368 = vld [vmem:[#allocation8 + $0x108] sm:$0xff]
    %v3369 = vld [vmem:[#allocation8 + $0x110] sm:$0xff]
    %v3370 = vld [vmem:[#allocation8 + $0x118] sm:$0xff]
    %v3371 = vld [vmem:[#allocation8 + $0x120] sm:$0xff]
    %v3372 = vld [vmem:[#allocation8 + $0x128] sm:$0xff]
    %v3373 = vld [vmem:[#allocation8 + $0x130] sm:$0xff]
    %v3374 = vld [vmem:[#allocation8 + $0x138] sm:$0xff]
    %v3375 = vld [vmem:[#allocation8 + $0x140] sm:$0xff]
    %v3376 = vld [vmem:[#allocation8 + $0x148] sm:$0xff]
    %v3377 = vld [vmem:[#allocation8 + $0x150] sm:$0xff]
    %v3378 = vld [vmem:[#allocation8 + $0x158] sm:$0xff]
    %v3379 = vld [vmem:[#allocation8 + $0x160] sm:$0xff]
    %v3380 = vld [vmem:[#allocation8 + $0x168] sm:$0xff]
    %v3381 = vld [vmem:[#allocation8 + $0x170] sm:$0xff]
    %v3382 = vld [vmem:[#allocation8 + $0x178] sm:$0xff]
    %v3383 = vld [vmem:[#allocation8 + $0x180] sm:$0xff]
    %v3384 = vld [vmem:[#allocation8 + $0x188] sm:$0xff]
    %v3385 = vld [vmem:[#allocation8 + $0x190] sm:$0xff]
    %v3386 = vld [vmem:[#allocation8 + $0x198] sm:$0xff]
    %v3387 = vld [vmem:[#allocation8 + $0x1a0] sm:$0xff]
    %v3388 = vld [vmem:[#allocation8 + $0x1a8] sm:$0xff]
    %v3389 = vld [vmem:[#allocation8 + $0x1b0] sm:$0xff]
    %v3390 = vld [vmem:[#allocation8 + $0x1b8] sm:$0xff]
    %v3391 = vld [vmem:[#allocation8 + $0x1c0] sm:$0xff]
    %v3392 = vld [vmem:[#allocation8 + $0x1c8] sm:$0xff]
    %v3393 = vld [vmem:[#allocation8 + $0x1d0] sm:$0xff]
    %v3394 = vld [vmem:[#allocation8 + $0x1d8] sm:$0xff]
    %v3395 = vld [vmem:[#allocation8 + $0x1e0] sm:$0xff]
    %v3396 = vld [vmem:[#allocation8 + $0x1e8] sm:$0xff]
    %v3397 = vld [vmem:[#allocation8 + $0x1f0] sm:$0xff]
    %v3398 = vld [vmem:[#allocation8 + $0x1f8] sm:$0xff]
    %v3399 = vld [vmem:[#allocation8 + $0x200] sm:$0xff]
    %v3400 = vld [vmem:[#allocation8 + $0x208] sm:$0xff]
    %v3401 = vld [vmem:[#allocation8 + $0x210] sm:$0xff]
    %v3402 = vld [vmem:[#allocation8 + $0x218] sm:$0xff]
    %v3403 = vld [vmem:[#allocation8 + $0x220] sm:$0xff]
    %v3404 = vld [vmem:[#allocation8 + $0x228] sm:$0xff]
    %v3405 = vld [vmem:[#allocation8 + $0x230] sm:$0xff]
    %v3406 = vld [vmem:[#allocation8 + $0x238] sm:$0xff]
    %v3407 = vld [vmem:[#allocation8 + $0x240] sm:$0xff]
    %v3408 = vld [vmem:[#allocation8 + $0x248] sm:$0xff]
    %v3409 = vld [vmem:[#allocation8 + $0x250] sm:$0xff]
    %v3410 = vld [vmem:[#allocation8 + $0x258] sm:$0xff]
    %v3411 = vld [vmem:[#allocation8 + $0x260] sm:$0xff]
    %v3412 = vld [vmem:[#allocation8 + $0x268] sm:$0xff]
    %v3413 = vld [vmem:[#allocation8 + $0x270] sm:$0xff]
    %v3414 = vld [vmem:[#allocation8 + $0x278] sm:$0xff]
    %v3415 = vld [vmem:[#allocation8 + $0x280] sm:$0xff]
    %v3416 = vld [vmem:[#allocation8 + $0x288] sm:$0xff]
    %v3417 = vld [vmem:[#allocation8 + $0x290] sm:$0xff]
    %v3418 = vld [vmem:[#allocation8 + $0x298] sm:$0xff]
    %v3419 = vld [vmem:[#allocation8 + $0x2a0] sm:$0xff]
    %v3420 = vld [vmem:[#allocation8 + $0x2a8] sm:$0xff]
    %v3421 = vld [vmem:[#allocation8 + $0x2b0] sm:$0xff]
    %v3422 = vld [vmem:[#allocation8 + $0x2b8] sm:$0xff]
    %v3423 = vld [vmem:[#allocation8 + $0x2c0] sm:$0xff]
    %v3424 = vld [vmem:[#allocation8 + $0x2c8] sm:$0xff]
    %v3425 = vld [vmem:[#allocation8 + $0x2d0] sm:$0xff]
    %v3426 = vld [vmem:[#allocation8 + $0x2d8] sm:$0xff]
    %v3427 = vld [vmem:[#allocation8 + $0x2e0] sm:$0xff]
    %v3428 = vld [vmem:[#allocation8 + $0x2e8] sm:$0xff]
    %v3429 = vld [vmem:[#allocation8 + $0x2f0] sm:$0xff]
    %v3430 = vld [vmem:[#allocation8 + $0x2f8] sm:$0xff]
    %v3431 = vld [vmem:[#allocation8 + $0x300] sm:$0xff]
    %v3432 = vld [vmem:[#allocation8 + $0x308] sm:$0xff]
    %v3433 = vld [vmem:[#allocation8 + $0x310] sm:$0xff]
    %v3434 = vld [vmem:[#allocation8 + $0x318] sm:$0xff]
    %v3435 = vld [vmem:[#allocation8 + $0x320] sm:$0xff]
    %v3436 = vld [vmem:[#allocation8 + $0x328] sm:$0xff]
    %v3437 = vld [vmem:[#allocation8 + $0x330] sm:$0xff]
    %v3438 = vld [vmem:[#allocation8 + $0x338] sm:$0xff]
    %v3439 = vld [vmem:[#allocation8 + $0x340] sm:$0xff]
    %v3440 = vld [vmem:[#allocation8 + $0x348] sm:$0xff]
    %v3441 = vld [vmem:[#allocation8 + $0x350] sm:$0xff]
    %v3442 = vld [vmem:[#allocation8 + $0x358] sm:$0xff]
    %v3443 = vld [vmem:[#allocation8 + $0x360] sm:$0xff]
    %v3444 = vld [vmem:[#allocation8 + $0x368] sm:$0xff]
    %v3445 = vld [vmem:[#allocation8 + $0x370] sm:$0xff]
    %v3446 = vld [vmem:[#allocation8 + $0x378] sm:$0xff]
    %v3447 = vld [vmem:[#allocation8 + $0x380] sm:$0xff]
    %v3448 = vld [vmem:[#allocation8 + $0x388] sm:$0xff]
    %v3449 = vld [vmem:[#allocation8 + $0x390] sm:$0xff]
    %v3450 = vld [vmem:[#allocation8 + $0x398] sm:$0xff]
    %v3451 = vld [vmem:[#allocation8 + $0x3a0] sm:$0xff]
    %v3452 = vld [vmem:[#allocation8 + $0x3a8] sm:$0xff]
    %v3453 = vld [vmem:[#allocation8 + $0x3b0] sm:$0xff]
    %v3454 = vld [vmem:[#allocation8 + $0x3b8] sm:$0xff]
    %v3455 = vld [vmem:[#allocation8 + $0x3c0] sm:$0xff]
    %v3456 = vld [vmem:[#allocation8 + $0x3c8] sm:$0xff]
    %v3457 = vld [vmem:[#allocation8 + $0x3d0] sm:$0xff]
    %v3458 = vld [vmem:[#allocation8 + $0x3d8] sm:$0xff]
    %v3459 = vld [vmem:[#allocation8 + $0x3e0] sm:$0xff]
    %v3460 = vld [vmem:[#allocation8 + $0x3e8] sm:$0xff]
    %v3461 = vld [vmem:[#allocation8 + $0x3f0] sm:$0xff]
    %v3462 = vld [vmem:[#allocation8 + $0x3f8] sm:$0xff]
    %v3463 = vld [vmem:[#allocation8 + $0x400] sm:$0xff]
    %v3464 = vld [vmem:[#allocation8 + $0x408] sm:$0xff]
    %v3465 = vld [vmem:[#allocation8 + $0x410] sm:$0xff]
    %v3466 = vld [vmem:[#allocation8 + $0x418] sm:$0xff]
    %v3467 = vld [vmem:[#allocation8 + $0x420] sm:$0xff]
    %v3468 = vld [vmem:[#allocation8 + $0x428] sm:$0xff]
    %v3469 = vld [vmem:[#allocation8 + $0x430] sm:$0xff]
    %v3470 = vld [vmem:[#allocation8 + $0x438] sm:$0xff]
    %v3471 = vld [vmem:[#allocation8 + $0x440] sm:$0xff]
    %v3472 = vld [vmem:[#allocation8 + $0x448] sm:$0xff]
    %v3473 = vld [vmem:[#allocation8 + $0x450] sm:$0xff]
    %v3474 = vld [vmem:[#allocation8 + $0x458] sm:$0xff]
    %v3475 = vld [vmem:[#allocation8 + $0x460] sm:$0xff]
    %v3476 = vld [vmem:[#allocation8 + $0x468] sm:$0xff]
    %v3477 = vld [vmem:[#allocation8 + $0x470] sm:$0xff]
    %v3478 = vld [vmem:[#allocation8 + $0x478] sm:$0xff]
    %v3479 = vld [vmem:[#allocation8 + $0x480] sm:$0xff]
    %v3480 = vld [vmem:[#allocation8 + $0x488] sm:$0xff]
    %v3481 = vld [vmem:[#allocation8 + $0x490] sm:$0xff]
    %v3482 = vld [vmem:[#allocation8 + $0x498] sm:$0xff]
    %v3483 = vld [vmem:[#allocation8 + $0x4a0] sm:$0xff]
    %v3484 = vld [vmem:[#allocation8 + $0x4a8] sm:$0xff]
    %v3485 = vld [vmem:[#allocation8 + $0x4b0] sm:$0xff]
    %v3486 = vld [vmem:[#allocation8 + $0x4b8] sm:$0xff]
    %v3487 = vld [vmem:[#allocation8 + $0x4c0] sm:$0xff]
    %v3488 = vld [vmem:[#allocation8 + $0x4c8] sm:$0xff]
    %v3489 = vld [vmem:[#allocation8 + $0x4d0] sm:$0xff]
    %v3490 = vld [vmem:[#allocation8 + $0x4d8] sm:$0xff]
    %v3491 = vld [vmem:[#allocation8 + $0x4e0] sm:$0xff]
    %v3492 = vld [vmem:[#allocation8 + $0x4e8] sm:$0xff]
    %v3493 = vld [vmem:[#allocation8 + $0x4f0] sm:$0xff]
    %v3494 = vld [vmem:[#allocation8 + $0x4f8] sm:$0xff]
    %v3495 = vld [vmem:[#allocation8 + $0x500] sm:$0xff]
    %v3496 = vld [vmem:[#allocation8 + $0x508] sm:$0xff]
    %v3497 = vld [vmem:[#allocation8 + $0x510] sm:$0xff]
    %v3498 = vld [vmem:[#allocation8 + $0x518] sm:$0xff]
    %v3499 = vld [vmem:[#allocation8 + $0x520] sm:$0xff]
    %v3500 = vld [vmem:[#allocation8 + $0x528] sm:$0xff]
    %v3501 = vld [vmem:[#allocation8 + $0x530] sm:$0xff]
    %v3502 = vld [vmem:[#allocation8 + $0x538] sm:$0xff]
    %v3503 = vld [vmem:[#allocation8 + $0x540] sm:$0xff]
    %v3504 = vld [vmem:[#allocation8 + $0x548] sm:$0xff]
    %v3505 = vld [vmem:[#allocation8 + $0x550] sm:$0xff]
    %v3506 = vld [vmem:[#allocation8 + $0x558] sm:$0xff]
    %v3507 = vld [vmem:[#allocation8 + $0x560] sm:$0xff]
    %v3508 = vld [vmem:[#allocation8 + $0x568] sm:$0xff]
    %v3509 = vld [vmem:[#allocation8 + $0x570] sm:$0xff]
    %v3510 = vld [vmem:[#allocation8 + $0x578] sm:$0xff]
    %v3511 = vld [vmem:[#allocation8 + $0x580] sm:$0xff]
    %v3512 = vld [vmem:[#allocation8 + $0x588] sm:$0xff]
    %v3513 = vld [vmem:[#allocation8 + $0x590] sm:$0xff]
    %v3514 = vld [vmem:[#allocation8 + $0x598] sm:$0xff]
    %v3515 = vld [vmem:[#allocation8 + $0x5a0] sm:$0xff]
    %v3516 = vld [vmem:[#allocation8 + $0x5a8] sm:$0xff]
    %v3517 = vld [vmem:[#allocation8 + $0x5b0] sm:$0xff]
    %v3518 = vld [vmem:[#allocation8 + $0x5b8] sm:$0xff]
    %v3519 = vld [vmem:[#allocation8 + $0x5c0] sm:$0xff]
    %v3520 = vld [vmem:[#allocation8 + $0x5c8] sm:$0xff]
    %v3521 = vld [vmem:[#allocation8 + $0x5d0] sm:$0xff]
    %v3522 = vld [vmem:[#allocation8 + $0x5d8] sm:$0xff]
    %v3523 = vld [vmem:[#allocation8 + $0x5e0] sm:$0xff]
    %v3524 = vld [vmem:[#allocation8 + $0x5e8] sm:$0xff]
    %v3525 = vld [vmem:[#allocation8 + $0x5f0] sm:$0xff]
    %v3526 = vld [vmem:[#allocation8 + $0x5f8] sm:$0xff]
    %v3527 = vld [vmem:[#allocation8 + $0x600] sm:$0xff]
    %v3528 = vld [vmem:[#allocation8 + $0x608] sm:$0xff]
    %v3529 = vld [vmem:[#allocation8 + $0x610] sm:$0xff]
    %v3530 = vld [vmem:[#allocation8 + $0x618] sm:$0xff]
    %v3531 = vld [vmem:[#allocation8 + $0x620] sm:$0xff]
    %v3532 = vld [vmem:[#allocation8 + $0x628] sm:$0xff]
    %v3533 = vld [vmem:[#allocation8 + $0x630] sm:$0xff]
    %v3534 = vld [vmem:[#allocation8 + $0x638] sm:$0xff]
    %v3535 = vld [vmem:[#allocation8 + $0x640] sm:$0xff]
    %v3536 = vld [vmem:[#allocation8 + $0x648] sm:$0xff]
    %v3537 = vld [vmem:[#allocation8 + $0x650] sm:$0xff]
    %v3538 = vld [vmem:[#allocation8 + $0x658] sm:$0xff]
    %v3539 = vld [vmem:[#allocation8 + $0x660] sm:$0xff]
    %v3540 = vld [vmem:[#allocation8 + $0x668] sm:$0xff]
    %v3541 = vld [vmem:[#allocation8 + $0x670] sm:$0xff]
    %v3542 = vld [vmem:[#allocation8 + $0x678] sm:$0xff]
    %v3543 = vld [vmem:[#allocation8 + $0x680] sm:$0xff]
    %v3544 = vld [vmem:[#allocation8 + $0x688] sm:$0xff]
    %v3545 = vld [vmem:[#allocation8 + $0x690] sm:$0xff]
    %v3546 = vld [vmem:[#allocation8 + $0x698] sm:$0xff]
    %v3547 = vld [vmem:[#allocation8 + $0x6a0] sm:$0xff]
    %v3548 = vld [vmem:[#allocation8 + $0x6a8] sm:$0xff]
    %v3549 = vld [vmem:[#allocation8 + $0x6b0] sm:$0xff]
    %v3550 = vld [vmem:[#allocation8 + $0x6b8] sm:$0xff]
    %v3551 = vld [vmem:[#allocation8 + $0x6c0] sm:$0xff]
    %v3552 = vld [vmem:[#allocation8 + $0x6c8] sm:$0xff]
    %v3553 = vld [vmem:[#allocation8 + $0x6d0] sm:$0xff]
    %v3554 = vld [vmem:[#allocation8 + $0x6d8] sm:$0xff]
    %v3555 = vld [vmem:[#allocation8 + $0x6e0] sm:$0xff]
    %v3556 = vld [vmem:[#allocation8 + $0x6e8] sm:$0xff]
    %v3557 = vld [vmem:[#allocation8 + $0x6f0] sm:$0xff]
    %v3558 = vld [vmem:[#allocation8 + $0x6f8] sm:$0xff]
    %v3559 = vld [vmem:[#allocation8 + $0x700] sm:$0xff]
    %v3560 = vld [vmem:[#allocation8 + $0x708] sm:$0xff]
    %v3561 = vld [vmem:[#allocation8 + $0x710] sm:$0xff]
    %v3562 = vld [vmem:[#allocation8 + $0x718] sm:$0xff]
    %v3563 = vld [vmem:[#allocation8 + $0x720] sm:$0xff]
    %v3564 = vld [vmem:[#allocation8 + $0x728] sm:$0xff]
    %v3565 = vld [vmem:[#allocation8 + $0x730] sm:$0xff]
    %v3566 = vld [vmem:[#allocation8 + $0x738] sm:$0xff]
    %v3567 = vld [vmem:[#allocation8 + $0x740] sm:$0xff]
    %v3568 = vld [vmem:[#allocation8 + $0x748] sm:$0xff]
    %v3569 = vld [vmem:[#allocation8 + $0x750] sm:$0xff]
    %v3570 = vld [vmem:[#allocation8 + $0x758] sm:$0xff]
    %v3571 = vld [vmem:[#allocation8 + $0x760] sm:$0xff]
    %v3572 = vld [vmem:[#allocation8 + $0x768] sm:$0xff]
    %v3573 = vld [vmem:[#allocation8 + $0x770] sm:$0xff]
    %v3574 = vld [vmem:[#allocation8 + $0x778] sm:$0xff]
    %v3575 = vld [vmem:[#allocation8 + $0x780] sm:$0xff]
    %v3576 = vld [vmem:[#allocation8 + $0x788] sm:$0xff]
    %v3577 = vld [vmem:[#allocation8 + $0x790] sm:$0xff]
    %v3578 = vld [vmem:[#allocation8 + $0x798] sm:$0xff]
    %v3579 = vld [vmem:[#allocation8 + $0x7a0] sm:$0xff]
    %v3580 = vld [vmem:[#allocation8 + $0x7a8] sm:$0xff]
    %v3581 = vld [vmem:[#allocation8 + $0x7b0] sm:$0xff]
    %v3582 = vld [vmem:[#allocation8 + $0x7b8] sm:$0xff]
    %v3583 = vld [vmem:[#allocation8 + $0x7c0] sm:$0xff]
    %v3584 = vld [vmem:[#allocation8 + $0x7c8] sm:$0xff]
    %v3585 = vld [vmem:[#allocation8 + $0x7d0] sm:$0xff]
    %v3586 = vld [vmem:[#allocation8 + $0x7d8] sm:$0xff]
    %v3587 = vld [vmem:[#allocation8 + $0x7e0] sm:$0xff]
    %v3588 = vld [vmem:[#allocation8 + $0x7e8] sm:$0xff]
    %v3589 = vld [vmem:[#allocation8 + $0x7f0] sm:$0xff]
    %v3590 = vld [vmem:[#allocation8 + $0x7f8] sm:$0xff]
    %v3591 = vld [vmem:[#allocation8 + $0x800] sm:$0xff]
    %v3592 = vld [vmem:[#allocation8 + $0x808] sm:$0xff]
    %v3593 = vld [vmem:[#allocation8 + $0x810] sm:$0xff]
    %v3594 = vld [vmem:[#allocation8 + $0x818] sm:$0xff]
    %v3595 = vld [vmem:[#allocation8 + $0x820] sm:$0xff]
    %v3596 = vld [vmem:[#allocation8 + $0x828] sm:$0xff]
    %v3597 = vld [vmem:[#allocation8 + $0x830] sm:$0xff]
    %v3598 = vld [vmem:[#allocation8 + $0x838] sm:$0xff]
    %v3599 = vld [vmem:[#allocation8 + $0x840] sm:$0xff]
    %v3600 = vld [vmem:[#allocation8 + $0x848] sm:$0xff]
    %v3601 = vld [vmem:[#allocation8 + $0x850] sm:$0xff]
    %v3602 = vld [vmem:[#allocation8 + $0x858] sm:$0xff]
    %v3603 = vld [vmem:[#allocation8 + $0x860] sm:$0xff]
    %v3604 = vld [vmem:[#allocation8 + $0x868] sm:$0xff]
    %v3605 = vld [vmem:[#allocation8 + $0x870] sm:$0xff]
    %v3606 = vld [vmem:[#allocation8 + $0x878] sm:$0xff]
    %v3607 = vld [vmem:[#allocation8 + $0x880] sm:$0xff]
    %v3608 = vld [vmem:[#allocation8 + $0x888] sm:$0xff]
    %v3609 = vld [vmem:[#allocation8 + $0x890] sm:$0xff]
    %v3610 = vld [vmem:[#allocation8 + $0x898] sm:$0xff]
    %v3611 = vld [vmem:[#allocation8 + $0x8a0] sm:$0xff]
    %v3612 = vld [vmem:[#allocation8 + $0x8a8] sm:$0xff]
    %v3613 = vld [vmem:[#allocation8 + $0x8b0] sm:$0xff]
    %v3614 = vld [vmem:[#allocation8 + $0x8b8] sm:$0xff]
    %v3615 = vld [vmem:[#allocation8 + $0x8c0] sm:$0xff]
    %v3616 = vld [vmem:[#allocation8 + $0x8c8] sm:$0xff]
    %v3617 = vld [vmem:[#allocation8 + $0x8d0] sm:$0xff]
    %v3618 = vld [vmem:[#allocation8 + $0x8d8] sm:$0xff]
    %v3619 = vld [vmem:[#allocation8 + $0x8e0] sm:$0xff]
    %v3620 = vld [vmem:[#allocation8 + $0x8e8] sm:$0xff]
    %v3621 = vld [vmem:[#allocation8 + $0x8f0] sm:$0xff]
    %v3622 = vld [vmem:[#allocation8 + $0x8f8] sm:$0xff]
    %v3623 = vld [vmem:[#allocation8 + $0x900] sm:$0xff]
    %v3624 = vld [vmem:[#allocation8 + $0x908] sm:$0xff]
    %v3625 = vld [vmem:[#allocation8 + $0x910] sm:$0xff]
    %v3626 = vld [vmem:[#allocation8 + $0x918] sm:$0xff]
    %v3627 = vld [vmem:[#allocation8 + $0x920] sm:$0xff]
    %v3628 = vld [vmem:[#allocation8 + $0x928] sm:$0xff]
    %v3629 = vld [vmem:[#allocation8 + $0x930] sm:$0xff]
    %v3630 = vld [vmem:[#allocation8 + $0x938] sm:$0xff]
    %v3631 = vld [vmem:[#allocation8 + $0x940] sm:$0xff]
    %v3632 = vld [vmem:[#allocation8 + $0x948] sm:$0xff]
    %v3633 = vld [vmem:[#allocation8 + $0x950] sm:$0xff]
    %v3634 = vld [vmem:[#allocation8 + $0x958] sm:$0xff]
    %v3635 = vld [vmem:[#allocation8 + $0x960] sm:$0xff]
    %v3636 = vld [vmem:[#allocation8 + $0x968] sm:$0xff]
    %v3637 = vld [vmem:[#allocation8 + $0x970] sm:$0xff]
    %v3638 = vld [vmem:[#allocation8 + $0x978] sm:$0xff]
    %v3639 = vld [vmem:[#allocation8 + $0x980] sm:$0xff]
    %v3640 = vld [vmem:[#allocation8 + $0x988] sm:$0xff]
    %v3641 = vld [vmem:[#allocation8 + $0x990] sm:$0xff]
    %v3642 = vld [vmem:[#allocation8 + $0x998] sm:$0xff]
    %v3643 = vld [vmem:[#allocation8 + $0x9a0] sm:$0xff]
    %v3644 = vld [vmem:[#allocation8 + $0x9a8] sm:$0xff]
    %v3645 = vld [vmem:[#allocation8 + $0x9b0] sm:$0xff]
    %v3646 = vld [vmem:[#allocation8 + $0x9b8] sm:$0xff]
    %v3647 = vld [vmem:[#allocation8 + $0x9c0] sm:$0xff]
    %v3648 = vld [vmem:[#allocation8 + $0x9c8] sm:$0xff]
    %v3649 = vld [vmem:[#allocation8 + $0x9d0] sm:$0xff]
    %v3650 = vld [vmem:[#allocation8 + $0x9d8] sm:$0xff]
    %v3651 = vld [vmem:[#allocation8 + $0x9e0] sm:$0xff]
    %v3652 = vld [vmem:[#allocation8 + $0x9e8] sm:$0xff]
    %v3653 = vld [vmem:[#allocation8 + $0x9f0] sm:$0xff]
    %v3654 = vld [vmem:[#allocation8 + $0x9f8] sm:$0xff]
    %v3655 = vld [vmem:[#allocation8 + $0xa00] sm:$0xff]
    %v3656 = vld [vmem:[#allocation8 + $0xa08] sm:$0xff]
    %v3657 = vld [vmem:[#allocation8 + $0xa10] sm:$0xff]
    %v3658 = vld [vmem:[#allocation8 + $0xa18] sm:$0xff]
    %v3659 = vld [vmem:[#allocation8 + $0xa20] sm:$0xff]
    %v3660 = vld [vmem:[#allocation8 + $0xa28] sm:$0xff]
    %v3661 = vld [vmem:[#allocation8 + $0xa30] sm:$0xff]
    %v3662 = vld [vmem:[#allocation8 + $0xa38] sm:$0xff]
    %v3663 = vld [vmem:[#allocation8 + $0xa40] sm:$0xff]
    %v3664 = vld [vmem:[#allocation8 + $0xa48] sm:$0xff]
    %v3665 = vld [vmem:[#allocation8 + $0xa50] sm:$0xff]
    %v3666 = vld [vmem:[#allocation8 + $0xa58] sm:$0xff]
    %v3667 = vld [vmem:[#allocation8 + $0xa60] sm:$0xff]
    %v3668 = vld [vmem:[#allocation8 + $0xa68] sm:$0xff]
    %v3669 = vld [vmem:[#allocation8 + $0xa70] sm:$0xff]
    %v3670 = vld [vmem:[#allocation8 + $0xa78] sm:$0xff]
    %v3671 = vld [vmem:[#allocation8 + $0xa80] sm:$0xff]
    %v3672 = vld [vmem:[#allocation8 + $0xa88] sm:$0xff]
    %v3673 = vld [vmem:[#allocation8 + $0xa90] sm:$0xff]
    %v3674 = vld [vmem:[#allocation8 + $0xa98] sm:$0xff]
    %v3675 = vld [vmem:[#allocation8 + $0xaa0] sm:$0xff]
    %v3676 = vld [vmem:[#allocation8 + $0xaa8] sm:$0xff]
    %v3677 = vld [vmem:[#allocation8 + $0xab0] sm:$0xff]
    %v3678 = vld [vmem:[#allocation8 + $0xab8] sm:$0xff]
    %v3679 = vld [vmem:[#allocation8 + $0xac0] sm:$0xff]
    %v3680 = vld [vmem:[#allocation8 + $0xac8] sm:$0xff]
    %v3681 = vld [vmem:[#allocation8 + $0xad0] sm:$0xff]
    %v3682 = vld [vmem:[#allocation8 + $0xad8] sm:$0xff]
    %v3683 = vld [vmem:[#allocation8 + $0xae0] sm:$0xff]
    %v3684 = vld [vmem:[#allocation8 + $0xae8] sm:$0xff]
    %v3685 = vld [vmem:[#allocation8 + $0xaf0] sm:$0xff]
    %v3686 = vld [vmem:[#allocation8 + $0xaf8] sm:$0xff]
    %v3687 = vld [vmem:[#allocation8 + $0xb00] sm:$0xff]
    %v3688 = vld [vmem:[#allocation8 + $0xb08] sm:$0xff]
    %v3689 = vld [vmem:[#allocation8 + $0xb10] sm:$0xff]
    %v3690 = vld [vmem:[#allocation8 + $0xb18] sm:$0xff]
    %v3691 = vld [vmem:[#allocation8 + $0xb20] sm:$0xff]
    %v3692 = vld [vmem:[#allocation8 + $0xb28] sm:$0xff]
    %v3693 = vld [vmem:[#allocation8 + $0xb30] sm:$0xff]
    %v3694 = vld [vmem:[#allocation8 + $0xb38] sm:$0xff]
    %v3695 = vld [vmem:[#allocation8 + $0xb40] sm:$0xff]
    %v3696 = vld [vmem:[#allocation8 + $0xb48] sm:$0xff]
    %v3697 = vld [vmem:[#allocation8 + $0xb50] sm:$0xff]
    %v3698 = vld [vmem:[#allocation8 + $0xb58] sm:$0xff]
    %v3699 = vld [vmem:[#allocation8 + $0xb60] sm:$0xff]
    %v3700 = vld [vmem:[#allocation8 + $0xb68] sm:$0xff]
    %v3701 = vld [vmem:[#allocation8 + $0xb70] sm:$0xff]
    %v3702 = vld [vmem:[#allocation8 + $0xb78] sm:$0xff]
    %v3703 = vld [vmem:[#allocation8 + $0xb80] sm:$0xff]
    %v3704 = vld [vmem:[#allocation8 + $0xb88] sm:$0xff]
    %v3705 = vld [vmem:[#allocation8 + $0xb90] sm:$0xff]
    %v3706 = vld [vmem:[#allocation8 + $0xb98] sm:$0xff]
    %v3707 = vld [vmem:[#allocation8 + $0xba0] sm:$0xff]
    %v3708 = vld [vmem:[#allocation8 + $0xba8] sm:$0xff]
    %v3709 = vld [vmem:[#allocation8 + $0xbb0] sm:$0xff]
    %v3710 = vld [vmem:[#allocation8 + $0xbb8] sm:$0xff]
    %v3711 = vld [vmem:[#allocation8 + $0xbc0] sm:$0xff]
    %v3712 = vld [vmem:[#allocation8 + $0xbc8] sm:$0xff]
    %v3713 = vld [vmem:[#allocation8 + $0xbd0] sm:$0xff]
    %v3714 = vld [vmem:[#allocation8 + $0xbd8] sm:$0xff]
    %v3715 = vld [vmem:[#allocation8 + $0xbe0] sm:$0xff]
    %v3716 = vld [vmem:[#allocation8 + $0xbe8] sm:$0xff]
    %v3717 = vld [vmem:[#allocation8 + $0xbf0] sm:$0xff]
    %v3718 = vld [vmem:[#allocation8 + $0xbf8] sm:$0xff]
    %v3719 = vld [vmem:[#allocation8 + $0xc00] sm:$0xff]
    %v3720 = vld [vmem:[#allocation8 + $0xc08] sm:$0xff]
    %v3721 = vld [vmem:[#allocation8 + $0xc10] sm:$0xff]
    %v3722 = vld [vmem:[#allocation8 + $0xc18] sm:$0xff]
    %v3723 = vld [vmem:[#allocation8 + $0xc20] sm:$0xff]
    %v3724 = vld [vmem:[#allocation8 + $0xc28] sm:$0xff]
    %v3725 = vld [vmem:[#allocation8 + $0xc30] sm:$0xff]
    %v3726 = vld [vmem:[#allocation8 + $0xc38] sm:$0xff]
    %v3727 = vld [vmem:[#allocation8 + $0xc40] sm:$0xff]
    %v3728 = vld [vmem:[#allocation8 + $0xc48] sm:$0xff]
    %v3729 = vld [vmem:[#allocation8 + $0xc50] sm:$0xff]
    %v3730 = vld [vmem:[#allocation8 + $0xc58] sm:$0xff]
    %v3731 = vld [vmem:[#allocation8 + $0xc60] sm:$0xff]
    %v3732 = vld [vmem:[#allocation8 + $0xc68] sm:$0xff]
    %v3733 = vld [vmem:[#allocation8 + $0xc70] sm:$0xff]
    %v3734 = vld [vmem:[#allocation8 + $0xc78] sm:$0xff]
    %v3735 = vld [vmem:[#allocation8 + $0xc80] sm:$0xff]
    %v3736 = vld [vmem:[#allocation8 + $0xc88] sm:$0xff]
    %v3737 = vld [vmem:[#allocation8 + $0xc90] sm:$0xff]
    %v3738 = vld [vmem:[#allocation8 + $0xc98] sm:$0xff]
    %v3739 = vld [vmem:[#allocation8 + $0xca0] sm:$0xff]
    %v3740 = vld [vmem:[#allocation8 + $0xca8] sm:$0xff]
    %v3741 = vld [vmem:[#allocation8 + $0xcb0] sm:$0xff]
    %v3742 = vld [vmem:[#allocation8 + $0xcb8] sm:$0xff]
    %v3743 = vld [vmem:[#allocation8 + $0xcc0] sm:$0xff]
    %v3744 = vld [vmem:[#allocation8 + $0xcc8] sm:$0xff]
    %v3745 = vld [vmem:[#allocation8 + $0xcd0] sm:$0xff]
    %v3746 = vld [vmem:[#allocation8 + $0xcd8] sm:$0xff]
    %v3747 = vld [vmem:[#allocation8 + $0xce0] sm:$0xff]
    %v3748 = vld [vmem:[#allocation8 + $0xce8] sm:$0xff]
    %v3749 = vld [vmem:[#allocation8 + $0xcf0] sm:$0xff]
    %v3750 = vld [vmem:[#allocation8 + $0xcf8] sm:$0xff]
    %v3751 = vld [vmem:[#allocation8 + $0xd00] sm:$0xff]
    %v3752 = vld [vmem:[#allocation8 + $0xd08] sm:$0xff]
    %v3753 = vld [vmem:[#allocation8 + $0xd10] sm:$0xff]
    %v3754 = vld [vmem:[#allocation8 + $0xd18] sm:$0xff]
    %v3755 = vld [vmem:[#allocation8 + $0xd20] sm:$0xff]
    %v3756 = vld [vmem:[#allocation8 + $0xd28] sm:$0xff]
    %v3757 = vld [vmem:[#allocation8 + $0xd30] sm:$0xff]
    %v3758 = vld [vmem:[#allocation8 + $0xd38] sm:$0xff]
    %v3759 = vld [vmem:[#allocation8 + $0xd40] sm:$0xff]
    %v3760 = vld [vmem:[#allocation8 + $0xd48] sm:$0xff]
    %v3761 = vld [vmem:[#allocation8 + $0xd50] sm:$0xff]
    %v3762 = vld [vmem:[#allocation8 + $0xd58] sm:$0xff]
    %v3763 = vld [vmem:[#allocation8 + $0xd60] sm:$0xff]
    %v3764 = vld [vmem:[#allocation8 + $0xd68] sm:$0xff]
    %v3765 = vld [vmem:[#allocation8 + $0xd70] sm:$0xff]
    %v3766 = vld [vmem:[#allocation8 + $0xd78] sm:$0xff]
    %v3767 = vld [vmem:[#allocation8 + $0xd80] sm:$0xff]
    %v3768 = vld [vmem:[#allocation8 + $0xd88] sm:$0xff]
    %v3769 = vld [vmem:[#allocation8 + $0xd90] sm:$0xff]
    %v3770 = vld [vmem:[#allocation8 + $0xd98] sm:$0xff]
    %v3771 = vld [vmem:[#allocation8 + $0xda0] sm:$0xff]
    %v3772 = vld [vmem:[#allocation8 + $0xda8] sm:$0xff]
    %v3773 = vld [vmem:[#allocation8 + $0xdb0] sm:$0xff]
    %v3774 = vld [vmem:[#allocation8 + $0xdb8] sm:$0xff]
    %v3775 = vld [vmem:[#allocation8 + $0xdc0] sm:$0xff]
    %v3776 = vld [vmem:[#allocation8 + $0xdc8] sm:$0xff]
    %v3777 = vld [vmem:[#allocation8 + $0xdd0] sm:$0xff]
    %v3778 = vld [vmem:[#allocation8 + $0xdd8] sm:$0xff]
    %v3779 = vld [vmem:[#allocation8 + $0xde0] sm:$0xff]
    %v3780 = vld [vmem:[#allocation8 + $0xde8] sm:$0xff]
    %v3781 = vld [vmem:[#allocation8 + $0xdf0] sm:$0xff]
    %v3782 = vld [vmem:[#allocation8 + $0xdf8] sm:$0xff]
    %v3783 = vld [vmem:[#allocation8 + $0xe00] sm:$0xff]
    %v3784 = vld [vmem:[#allocation8 + $0xe08] sm:$0xff]
    %v3785 = vld [vmem:[#allocation8 + $0xe10] sm:$0xff]
    %v3786 = vld [vmem:[#allocation8 + $0xe18] sm:$0xff]
    %v3787 = vld [vmem:[#allocation8 + $0xe20] sm:$0xff]
    %v3788 = vld [vmem:[#allocation8 + $0xe28] sm:$0xff]
    %v3789 = vld [vmem:[#allocation8 + $0xe30] sm:$0xff]
    %v3790 = vld [vmem:[#allocation8 + $0xe38] sm:$0xff]
    %v3791 = vld [vmem:[#allocation8 + $0xe40] sm:$0xff]
    %v3792 = vld [vmem:[#allocation8 + $0xe48] sm:$0xff]
    %v3793 = vld [vmem:[#allocation8 + $0xe50] sm:$0xff]
    %v3794 = vld [vmem:[#allocation8 + $0xe58] sm:$0xff]
    %v3795 = vld [vmem:[#allocation8 + $0xe60] sm:$0xff]
    %v3796 = vld [vmem:[#allocation8 + $0xe68] sm:$0xff]
    %v3797 = vld [vmem:[#allocation8 + $0xe70] sm:$0xff]
    %v3798 = vld [vmem:[#allocation8 + $0xe78] sm:$0xff]
    %v3799 = vld [vmem:[#allocation8 + $0xe80] sm:$0xff]
    %v3800 = vld [vmem:[#allocation8 + $0xe88] sm:$0xff]
    %v3801 = vld [vmem:[#allocation8 + $0xe90] sm:$0xff]
    %v3802 = vld [vmem:[#allocation8 + $0xe98] sm:$0xff]
    %v3803 = vld [vmem:[#allocation8 + $0xea0] sm:$0xff]
    %v3804 = vld [vmem:[#allocation8 + $0xea8] sm:$0xff]
    %v3805 = vld [vmem:[#allocation8 + $0xeb0] sm:$0xff]
    %v3806 = vld [vmem:[#allocation8 + $0xeb8] sm:$0xff]
    %v3807 = vld [vmem:[#allocation8 + $0xec0] sm:$0xff]
    %v3808 = vld [vmem:[#allocation8 + $0xec8] sm:$0xff]
    %v3809 = vld [vmem:[#allocation8 + $0xed0] sm:$0xff]
    %v3810 = vld [vmem:[#allocation8 + $0xed8] sm:$0xff]
    %v3811 = vld [vmem:[#allocation8 + $0xee0] sm:$0xff]
    %v3812 = vld [vmem:[#allocation8 + $0xee8] sm:$0xff]
    %v3813 = vld [vmem:[#allocation8 + $0xef0] sm:$0xff]
    %v3814 = vld [vmem:[#allocation8 + $0xef8] sm:$0xff]
    %v3815 = vld [vmem:[#allocation8 + $0xf00] sm:$0xff]
    %v3816 = vld [vmem:[#allocation8 + $0xf08] sm:$0xff]
    %v3817 = vld [vmem:[#allocation8 + $0xf10] sm:$0xff]
    %v3818 = vld [vmem:[#allocation8 + $0xf18] sm:$0xff]
    %v3819 = vld [vmem:[#allocation8 + $0xf20] sm:$0xff]
    %v3820 = vld [vmem:[#allocation8 + $0xf28] sm:$0xff]
    %v3821 = vld [vmem:[#allocation8 + $0xf30] sm:$0xff]
    %v3822 = vld [vmem:[#allocation8 + $0xf38] sm:$0xff]
    %v3823 = vld [vmem:[#allocation8 + $0xf40] sm:$0xff]
    %v3824 = vld [vmem:[#allocation8 + $0xf48] sm:$0xff]
    %v3825 = vld [vmem:[#allocation8 + $0xf50] sm:$0xff]
    %v3826 = vld [vmem:[#allocation8 + $0xf58] sm:$0xff]
    %v3827 = vld [vmem:[#allocation8 + $0xf60] sm:$0xff]
    %v3828 = vld [vmem:[#allocation8 + $0xf68] sm:$0xff]
    %v3829 = vld [vmem:[#allocation8 + $0xf70] sm:$0xff]
    %v3830 = vld [vmem:[#allocation8 + $0xf78] sm:$0xff]
    %v3831 = vld [vmem:[#allocation8 + $0xf80] sm:$0xff]
    %v3832 = vld [vmem:[#allocation8 + $0xf88] sm:$0xff]
    %v3833 = vld [vmem:[#allocation8 + $0xf90] sm:$0xff]
    %v3834 = vld [vmem:[#allocation8 + $0xf98] sm:$0xff]
    %v3835 = vld [vmem:[#allocation8 + $0xfa0] sm:$0xff]
    %v3836 = vld [vmem:[#allocation8 + $0xfa8] sm:$0xff]
    %v3837 = vld [vmem:[#allocation8 + $0xfb0] sm:$0xff]
    %v3838 = vld [vmem:[#allocation8 + $0xfb8] sm:$0xff]
    %v3839 = vld [vmem:[#allocation8 + $0xfc0] sm:$0xff]
    %v3840 = vld [vmem:[#allocation8 + $0xfc8] sm:$0xff]
    %v3841 = vld [vmem:[#allocation8 + $0xfd0] sm:$0xff]
    %v3842 = vld [vmem:[#allocation8 + $0xfd8] sm:$0xff]
    %v3843 = vld [vmem:[#allocation8 + $0xfe0] sm:$0xff]
    %v3844 = vld [vmem:[#allocation8 + $0xfe8] sm:$0xff]
    %v3845 = vld [vmem:[#allocation8 + $0xff0] sm:$0xff]
    %v3846 = vld [vmem:[#allocation8 + $0xff8] sm:$0xff]
    %v4359 = vunpack.c.l.b16 %v3335
    %v4360 = vunpack.c.h.b16 %v3335
    %v4361 = vunpack.c.l.b16 %v3336
    %v4362 = vunpack.c.h.b16 %v3336
    %v4363 = vunpack.c.l.b16 %v3337
    %v4364 = vunpack.c.h.b16 %v3337
    %v4365 = vunpack.c.l.b16 %v3338
    %v4366 = vunpack.c.h.b16 %v3338
    %v4367 = vunpack.c.l.b16 %v3339
    %v4368 = vunpack.c.h.b16 %v3339
    %v4369 = vunpack.c.l.b16 %v3340
    %v4370 = vunpack.c.h.b16 %v3340
    %v4371 = vunpack.c.l.b16 %v3341
    %v4372 = vunpack.c.h.b16 %v3341
    %v4373 = vunpack.c.l.b16 %v3342
    %v4374 = vunpack.c.h.b16 %v3342
    %v4375 = vunpack.c.l.b16 %v3343
    %v4376 = vunpack.c.h.b16 %v3343
    %v4377 = vunpack.c.l.b16 %v3344
    %v4378 = vunpack.c.h.b16 %v3344
    %v4379 = vunpack.c.l.b16 %v3345
    %v4380 = vunpack.c.h.b16 %v3345
    %v4381 = vunpack.c.l.b16 %v3346
    %v4382 = vunpack.c.h.b16 %v3346
    %v4383 = vunpack.c.l.b16 %v3347
    %v4384 = vunpack.c.h.b16 %v3347
    %v4385 = vunpack.c.l.b16 %v3348
    %v4386 = vunpack.c.h.b16 %v3348
    %v4387 = vunpack.c.l.b16 %v3349
    %v4388 = vunpack.c.h.b16 %v3349
    %v4389 = vunpack.c.l.b16 %v3350
    %v4390 = vunpack.c.h.b16 %v3350
    %v4391 = vunpack.c.l.b16 %v3351
    %v4392 = vunpack.c.h.b16 %v3351
    %v4393 = vunpack.c.l.b16 %v3352
    %v4394 = vunpack.c.h.b16 %v3352
    %v4395 = vunpack.c.l.b16 %v3353
    %v4396 = vunpack.c.h.b16 %v3353
    %v4397 = vunpack.c.l.b16 %v3354
    %v4398 = vunpack.c.h.b16 %v3354
    %v4399 = vunpack.c.l.b16 %v3355
    %v4400 = vunpack.c.h.b16 %v3355
    %v4401 = vunpack.c.l.b16 %v3356
    %v4402 = vunpack.c.h.b16 %v3356
    %v4403 = vunpack.c.l.b16 %v3357
    %v4404 = vunpack.c.h.b16 %v3357
    %v4405 = vunpack.c.l.b16 %v3358
    %v4406 = vunpack.c.h.b16 %v3358
    %v4407 = vunpack.c.l.b16 %v3359
    %v4408 = vunpack.c.h.b16 %v3359
    %v4409 = vunpack.c.l.b16 %v3360
    %v4410 = vunpack.c.h.b16 %v3360
    %v4411 = vunpack.c.l.b16 %v3361
    %v4412 = vunpack.c.h.b16 %v3361
    %v4413 = vunpack.c.l.b16 %v3362
    %v4414 = vunpack.c.h.b16 %v3362
    %v4415 = vunpack.c.l.b16 %v3363
    %v4416 = vunpack.c.h.b16 %v3363
    %v4417 = vunpack.c.l.b16 %v3364
    %v4418 = vunpack.c.h.b16 %v3364
    %v4419 = vunpack.c.l.b16 %v3365
    %v4420 = vunpack.c.h.b16 %v3365
    %v4421 = vunpack.c.l.b16 %v3366
    %v4422 = vunpack.c.h.b16 %v3366
    %v4423 = vunpack.c.l.b16 %v3367
    %v4424 = vunpack.c.h.b16 %v3367
    %v4425 = vunpack.c.l.b16 %v3368
    %v4426 = vunpack.c.h.b16 %v3368
    %v4427 = vunpack.c.l.b16 %v3369
    %v4428 = vunpack.c.h.b16 %v3369
    %v4429 = vunpack.c.l.b16 %v3370
    %v4430 = vunpack.c.h.b16 %v3370
    %v4431 = vunpack.c.l.b16 %v3371
    %v4432 = vunpack.c.h.b16 %v3371
    %v4433 = vunpack.c.l.b16 %v3372
    %v4434 = vunpack.c.h.b16 %v3372
    %v4435 = vunpack.c.l.b16 %v3373
    %v4436 = vunpack.c.h.b16 %v3373
    %v4437 = vunpack.c.l.b16 %v3374
    %v4438 = vunpack.c.h.b16 %v3374
    %v4439 = vunpack.c.l.b16 %v3375
    %v4440 = vunpack.c.h.b16 %v3375
    %v4441 = vunpack.c.l.b16 %v3376
    %v4442 = vunpack.c.h.b16 %v3376
    %v4443 = vunpack.c.l.b16 %v3377
    %v4444 = vunpack.c.h.b16 %v3377
    %v4445 = vunpack.c.l.b16 %v3378
    %v4446 = vunpack.c.h.b16 %v3378
    %v4447 = vunpack.c.l.b16 %v3379
    %v4448 = vunpack.c.h.b16 %v3379
    %v4449 = vunpack.c.l.b16 %v3380
    %v4450 = vunpack.c.h.b16 %v3380
    %v4451 = vunpack.c.l.b16 %v3381
    %v4452 = vunpack.c.h.b16 %v3381
    %v4453 = vunpack.c.l.b16 %v3382
    %v4454 = vunpack.c.h.b16 %v3382
    %v4455 = vunpack.c.l.b16 %v3383
    %v4456 = vunpack.c.h.b16 %v3383
    %v4457 = vunpack.c.l.b16 %v3384
    %v4458 = vunpack.c.h.b16 %v3384
    %v4459 = vunpack.c.l.b16 %v3385
    %v4460 = vunpack.c.h.b16 %v3385
    %v4461 = vunpack.c.l.b16 %v3386
    %v4462 = vunpack.c.h.b16 %v3386
    %v4463 = vunpack.c.l.b16 %v3387
    %v4464 = vunpack.c.h.b16 %v3387
    %v4465 = vunpack.c.l.b16 %v3388
    %v4466 = vunpack.c.h.b16 %v3388
    %v4467 = vunpack.c.l.b16 %v3389
    %v4468 = vunpack.c.h.b16 %v3389
    %v4469 = vunpack.c.l.b16 %v3390
    %v4470 = vunpack.c.h.b16 %v3390
    %v4471 = vunpack.c.l.b16 %v3391
    %v4472 = vunpack.c.h.b16 %v3391
    %v4473 = vunpack.c.l.b16 %v3392
    %v4474 = vunpack.c.h.b16 %v3392
    %v4475 = vunpack.c.l.b16 %v3393
    %v4476 = vunpack.c.h.b16 %v3393
    %v4477 = vunpack.c.l.b16 %v3394
    %v4478 = vunpack.c.h.b16 %v3394
    %v4479 = vunpack.c.l.b16 %v3395
    %v4480 = vunpack.c.h.b16 %v3395
    %v4481 = vunpack.c.l.b16 %v3396
    %v4482 = vunpack.c.h.b16 %v3396
    %v4483 = vunpack.c.l.b16 %v3397
    %v4484 = vunpack.c.h.b16 %v3397
    %v4485 = vunpack.c.l.b16 %v3398
    %v4486 = vunpack.c.h.b16 %v3398
    %v4487 = vunpack.c.l.b16 %v3399
    %v4488 = vunpack.c.h.b16 %v3399
    %v4489 = vunpack.c.l.b16 %v3400
    %v4490 = vunpack.c.h.b16 %v3400
    %v4491 = vunpack.c.l.b16 %v3401
    %v4492 = vunpack.c.h.b16 %v3401
    %v4493 = vunpack.c.l.b16 %v3402
    %v4494 = vunpack.c.h.b16 %v3402
    %v4495 = vunpack.c.l.b16 %v3403
    %v4496 = vunpack.c.h.b16 %v3403
    %v4497 = vunpack.c.l.b16 %v3404
    %v4498 = vunpack.c.h.b16 %v3404
    %v4499 = vunpack.c.l.b16 %v3405
    %v4500 = vunpack.c.h.b16 %v3405
    %v4501 = vunpack.c.l.b16 %v3406
    %v4502 = vunpack.c.h.b16 %v3406
    %v4503 = vunpack.c.l.b16 %v3407
    %v4504 = vunpack.c.h.b16 %v3407
    %v4505 = vunpack.c.l.b16 %v3408
    %v4506 = vunpack.c.h.b16 %v3408
    %v4507 = vunpack.c.l.b16 %v3409
    %v4508 = vunpack.c.h.b16 %v3409
    %v4509 = vunpack.c.l.b16 %v3410
    %v4510 = vunpack.c.h.b16 %v3410
    %v4511 = vunpack.c.l.b16 %v3411
    %v4512 = vunpack.c.h.b16 %v3411
    %v4513 = vunpack.c.l.b16 %v3412
    %v4514 = vunpack.c.h.b16 %v3412
    %v4515 = vunpack.c.l.b16 %v3413
    %v4516 = vunpack.c.h.b16 %v3413
    %v4517 = vunpack.c.l.b16 %v3414
    %v4518 = vunpack.c.h.b16 %v3414
    %v4519 = vunpack.c.l.b16 %v3415
    %v4520 = vunpack.c.h.b16 %v3415
    %v4521 = vunpack.c.l.b16 %v3416
    %v4522 = vunpack.c.h.b16 %v3416
    %v4523 = vunpack.c.l.b16 %v3417
    %v4524 = vunpack.c.h.b16 %v3417
    %v4525 = vunpack.c.l.b16 %v3418
    %v4526 = vunpack.c.h.b16 %v3418
    %v4527 = vunpack.c.l.b16 %v3419
    %v4528 = vunpack.c.h.b16 %v3419
    %v4529 = vunpack.c.l.b16 %v3420
    %v4530 = vunpack.c.h.b16 %v3420
    %v4531 = vunpack.c.l.b16 %v3421
    %v4532 = vunpack.c.h.b16 %v3421
    %v4533 = vunpack.c.l.b16 %v3422
    %v4534 = vunpack.c.h.b16 %v3422
    %v4535 = vunpack.c.l.b16 %v3423
    %v4536 = vunpack.c.h.b16 %v3423
    %v4537 = vunpack.c.l.b16 %v3424
    %v4538 = vunpack.c.h.b16 %v3424
    %v4539 = vunpack.c.l.b16 %v3425
    %v4540 = vunpack.c.h.b16 %v3425
    %v4541 = vunpack.c.l.b16 %v3426
    %v4542 = vunpack.c.h.b16 %v3426
    %v4543 = vunpack.c.l.b16 %v3427
    %v4544 = vunpack.c.h.b16 %v3427
    %v4545 = vunpack.c.l.b16 %v3428
    %v4546 = vunpack.c.h.b16 %v3428
    %v4547 = vunpack.c.l.b16 %v3429
    %v4548 = vunpack.c.h.b16 %v3429
    %v4549 = vunpack.c.l.b16 %v3430
    %v4550 = vunpack.c.h.b16 %v3430
    %v4551 = vunpack.c.l.b16 %v3431
    %v4552 = vunpack.c.h.b16 %v3431
    %v4553 = vunpack.c.l.b16 %v3432
    %v4554 = vunpack.c.h.b16 %v3432
    %v4555 = vunpack.c.l.b16 %v3433
    %v4556 = vunpack.c.h.b16 %v3433
    %v4557 = vunpack.c.l.b16 %v3434
    %v4558 = vunpack.c.h.b16 %v3434
    %v4559 = vunpack.c.l.b16 %v3435
    %v4560 = vunpack.c.h.b16 %v3435
    %v4561 = vunpack.c.l.b16 %v3436
    %v4562 = vunpack.c.h.b16 %v3436
    %v4563 = vunpack.c.l.b16 %v3437
    %v4564 = vunpack.c.h.b16 %v3437
    %v4565 = vunpack.c.l.b16 %v3438
    %v4566 = vunpack.c.h.b16 %v3438
    %v4567 = vunpack.c.l.b16 %v3439
    %v4568 = vunpack.c.h.b16 %v3439
    %v4569 = vunpack.c.l.b16 %v3440
    %v4570 = vunpack.c.h.b16 %v3440
    %v4571 = vunpack.c.l.b16 %v3441
    %v4572 = vunpack.c.h.b16 %v3441
    %v4573 = vunpack.c.l.b16 %v3442
    %v4574 = vunpack.c.h.b16 %v3442
    %v4575 = vunpack.c.l.b16 %v3443
    %v4576 = vunpack.c.h.b16 %v3443
    %v4577 = vunpack.c.l.b16 %v3444
    %v4578 = vunpack.c.h.b16 %v3444
    %v4579 = vunpack.c.l.b16 %v3445
    %v4580 = vunpack.c.h.b16 %v3445
    %v4581 = vunpack.c.l.b16 %v3446
    %v4582 = vunpack.c.h.b16 %v3446
    %v4583 = vunpack.c.l.b16 %v3447
    %v4584 = vunpack.c.h.b16 %v3447
    %v4585 = vunpack.c.l.b16 %v3448
    %v4586 = vunpack.c.h.b16 %v3448
    %v4587 = vunpack.c.l.b16 %v3449
    %v4588 = vunpack.c.h.b16 %v3449
    %v4589 = vunpack.c.l.b16 %v3450
    %v4590 = vunpack.c.h.b16 %v3450
    %v4591 = vunpack.c.l.b16 %v3451
    %v4592 = vunpack.c.h.b16 %v3451
    %v4593 = vunpack.c.l.b16 %v3452
    %v4594 = vunpack.c.h.b16 %v3452
    %v4595 = vunpack.c.l.b16 %v3453
    %v4596 = vunpack.c.h.b16 %v3453
    %v4597 = vunpack.c.l.b16 %v3454
    %v4598 = vunpack.c.h.b16 %v3454
    %v4599 = vunpack.c.l.b16 %v3455
    %v4600 = vunpack.c.h.b16 %v3455
    %v4601 = vunpack.c.l.b16 %v3456
    %v4602 = vunpack.c.h.b16 %v3456
    %v4603 = vunpack.c.l.b16 %v3457
    %v4604 = vunpack.c.h.b16 %v3457
    %v4605 = vunpack.c.l.b16 %v3458
    %v4606 = vunpack.c.h.b16 %v3458
    %v4607 = vunpack.c.l.b16 %v3459
    %v4608 = vunpack.c.h.b16 %v3459
    %v4609 = vunpack.c.l.b16 %v3460
    %v4610 = vunpack.c.h.b16 %v3460
    %v4611 = vunpack.c.l.b16 %v3461
    %v4612 = vunpack.c.h.b16 %v3461
    %v4613 = vunpack.c.l.b16 %v3462
    %v4614 = vunpack.c.h.b16 %v3462
    %v4615 = vunpack.c.l.b16 %v3463
    %v4616 = vunpack.c.h.b16 %v3463
    %v4617 = vunpack.c.l.b16 %v3464
    %v4618 = vunpack.c.h.b16 %v3464
    %v4619 = vunpack.c.l.b16 %v3465
    %v4620 = vunpack.c.h.b16 %v3465
    %v4621 = vunpack.c.l.b16 %v3466
    %v4622 = vunpack.c.h.b16 %v3466
    %v4623 = vunpack.c.l.b16 %v3467
    %v4624 = vunpack.c.h.b16 %v3467
    %v4625 = vunpack.c.l.b16 %v3468
    %v4626 = vunpack.c.h.b16 %v3468
    %v4627 = vunpack.c.l.b16 %v3469
    %v4628 = vunpack.c.h.b16 %v3469
    %v4629 = vunpack.c.l.b16 %v3470
    %v4630 = vunpack.c.h.b16 %v3470
    %v4631 = vunpack.c.l.b16 %v3471
    %v4632 = vunpack.c.h.b16 %v3471
    %v4633 = vunpack.c.l.b16 %v3472
    %v4634 = vunpack.c.h.b16 %v3472
    %v4635 = vunpack.c.l.b16 %v3473
    %v4636 = vunpack.c.h.b16 %v3473
    %v4637 = vunpack.c.l.b16 %v3474
    %v4638 = vunpack.c.h.b16 %v3474
    %v4639 = vunpack.c.l.b16 %v3475
    %v4640 = vunpack.c.h.b16 %v3475
    %v4641 = vunpack.c.l.b16 %v3476
    %v4642 = vunpack.c.h.b16 %v3476
    %v4643 = vunpack.c.l.b16 %v3477
    %v4644 = vunpack.c.h.b16 %v3477
    %v4645 = vunpack.c.l.b16 %v3478
    %v4646 = vunpack.c.h.b16 %v3478
    %v4647 = vunpack.c.l.b16 %v3479
    %v4648 = vunpack.c.h.b16 %v3479
    %v4649 = vunpack.c.l.b16 %v3480
    %v4650 = vunpack.c.h.b16 %v3480
    %v4651 = vunpack.c.l.b16 %v3481
    %v4652 = vunpack.c.h.b16 %v3481
    %v4653 = vunpack.c.l.b16 %v3482
    %v4654 = vunpack.c.h.b16 %v3482
    %v4655 = vunpack.c.l.b16 %v3483
    %v4656 = vunpack.c.h.b16 %v3483
    %v4657 = vunpack.c.l.b16 %v3484
    %v4658 = vunpack.c.h.b16 %v3484
    %v4659 = vunpack.c.l.b16 %v3485
    %v4660 = vunpack.c.h.b16 %v3485
    %v4661 = vunpack.c.l.b16 %v3486
    %v4662 = vunpack.c.h.b16 %v3486
    %v4663 = vunpack.c.l.b16 %v3487
    %v4664 = vunpack.c.h.b16 %v3487
    %v4665 = vunpack.c.l.b16 %v3488
    %v4666 = vunpack.c.h.b16 %v3488
    %v4667 = vunpack.c.l.b16 %v3489
    %v4668 = vunpack.c.h.b16 %v3489
    %v4669 = vunpack.c.l.b16 %v3490
    %v4670 = vunpack.c.h.b16 %v3490
    %v4671 = vunpack.c.l.b16 %v3491
    %v4672 = vunpack.c.h.b16 %v3491
    %v4673 = vunpack.c.l.b16 %v3492
    %v4674 = vunpack.c.h.b16 %v3492
    %v4675 = vunpack.c.l.b16 %v3493
    %v4676 = vunpack.c.h.b16 %v3493
    %v4677 = vunpack.c.l.b16 %v3494
    %v4678 = vunpack.c.h.b16 %v3494
    %v4679 = vunpack.c.l.b16 %v3495
    %v4680 = vunpack.c.h.b16 %v3495
    %v4681 = vunpack.c.l.b16 %v3496
    %v4682 = vunpack.c.h.b16 %v3496
    %v4683 = vunpack.c.l.b16 %v3497
    %v4684 = vunpack.c.h.b16 %v3497
    %v4685 = vunpack.c.l.b16 %v3498
    %v4686 = vunpack.c.h.b16 %v3498
    %v4687 = vunpack.c.l.b16 %v3499
    %v4688 = vunpack.c.h.b16 %v3499
    %v4689 = vunpack.c.l.b16 %v3500
    %v4690 = vunpack.c.h.b16 %v3500
    %v4691 = vunpack.c.l.b16 %v3501
    %v4692 = vunpack.c.h.b16 %v3501
    %v4693 = vunpack.c.l.b16 %v3502
    %v4694 = vunpack.c.h.b16 %v3502
    %v4695 = vunpack.c.l.b16 %v3503
    %v4696 = vunpack.c.h.b16 %v3503
    %v4697 = vunpack.c.l.b16 %v3504
    %v4698 = vunpack.c.h.b16 %v3504
    %v4699 = vunpack.c.l.b16 %v3505
    %v4700 = vunpack.c.h.b16 %v3505
    %v4701 = vunpack.c.l.b16 %v3506
    %v4702 = vunpack.c.h.b16 %v3506
    %v4703 = vunpack.c.l.b16 %v3507
    %v4704 = vunpack.c.h.b16 %v3507
    %v4705 = vunpack.c.l.b16 %v3508
    %v4706 = vunpack.c.h.b16 %v3508
    %v4707 = vunpack.c.l.b16 %v3509
    %v4708 = vunpack.c.h.b16 %v3509
    %v4709 = vunpack.c.l.b16 %v3510
    %v4710 = vunpack.c.h.b16 %v3510
    %v4711 = vunpack.c.l.b16 %v3511
    %v4712 = vunpack.c.h.b16 %v3511
    %v4713 = vunpack.c.l.b16 %v3512
    %v4714 = vunpack.c.h.b16 %v3512
    %v4715 = vunpack.c.l.b16 %v3513
    %v4716 = vunpack.c.h.b16 %v3513
    %v4717 = vunpack.c.l.b16 %v3514
    %v4718 = vunpack.c.h.b16 %v3514
    %v4719 = vunpack.c.l.b16 %v3515
    %v4720 = vunpack.c.h.b16 %v3515
    %v4721 = vunpack.c.l.b16 %v3516
    %v4722 = vunpack.c.h.b16 %v3516
    %v4723 = vunpack.c.l.b16 %v3517
    %v4724 = vunpack.c.h.b16 %v3517
    %v4725 = vunpack.c.l.b16 %v3518
    %v4726 = vunpack.c.h.b16 %v3518
    %v4727 = vunpack.c.l.b16 %v3519
    %v4728 = vunpack.c.h.b16 %v3519
    %v4729 = vunpack.c.l.b16 %v3520
    %v4730 = vunpack.c.h.b16 %v3520
    %v4731 = vunpack.c.l.b16 %v3521
    %v4732 = vunpack.c.h.b16 %v3521
    %v4733 = vunpack.c.l.b16 %v3522
    %v4734 = vunpack.c.h.b16 %v3522
    %v4735 = vunpack.c.l.b16 %v3523
    %v4736 = vunpack.c.h.b16 %v3523
    %v4737 = vunpack.c.l.b16 %v3524
    %v4738 = vunpack.c.h.b16 %v3524
    %v4739 = vunpack.c.l.b16 %v3525
    %v4740 = vunpack.c.h.b16 %v3525
    %v4741 = vunpack.c.l.b16 %v3526
    %v4742 = vunpack.c.h.b16 %v3526
    %v4743 = vunpack.c.l.b16 %v3527
    %v4744 = vunpack.c.h.b16 %v3527
    %v4745 = vunpack.c.l.b16 %v3528
    %v4746 = vunpack.c.h.b16 %v3528
    %v4747 = vunpack.c.l.b16 %v3529
    %v4748 = vunpack.c.h.b16 %v3529
    %v4749 = vunpack.c.l.b16 %v3530
    %v4750 = vunpack.c.h.b16 %v3530
    %v4751 = vunpack.c.l.b16 %v3531
    %v4752 = vunpack.c.h.b16 %v3531
    %v4753 = vunpack.c.l.b16 %v3532
    %v4754 = vunpack.c.h.b16 %v3532
    %v4755 = vunpack.c.l.b16 %v3533
    %v4756 = vunpack.c.h.b16 %v3533
    %v4757 = vunpack.c.l.b16 %v3534
    %v4758 = vunpack.c.h.b16 %v3534
    %v4759 = vunpack.c.l.b16 %v3535
    %v4760 = vunpack.c.h.b16 %v3535
    %v4761 = vunpack.c.l.b16 %v3536
    %v4762 = vunpack.c.h.b16 %v3536
    %v4763 = vunpack.c.l.b16 %v3537
    %v4764 = vunpack.c.h.b16 %v3537
    %v4765 = vunpack.c.l.b16 %v3538
    %v4766 = vunpack.c.h.b16 %v3538
    %v4767 = vunpack.c.l.b16 %v3539
    %v4768 = vunpack.c.h.b16 %v3539
    %v4769 = vunpack.c.l.b16 %v3540
    %v4770 = vunpack.c.h.b16 %v3540
    %v4771 = vunpack.c.l.b16 %v3541
    %v4772 = vunpack.c.h.b16 %v3541
    %v4773 = vunpack.c.l.b16 %v3542
    %v4774 = vunpack.c.h.b16 %v3542
    %v4775 = vunpack.c.l.b16 %v3543
    %v4776 = vunpack.c.h.b16 %v3543
    %v4777 = vunpack.c.l.b16 %v3544
    %v4778 = vunpack.c.h.b16 %v3544
    %v4779 = vunpack.c.l.b16 %v3545
    %v4780 = vunpack.c.h.b16 %v3545
    %v4781 = vunpack.c.l.b16 %v3546
    %v4782 = vunpack.c.h.b16 %v3546
    %v4783 = vunpack.c.l.b16 %v3547
    %v4784 = vunpack.c.h.b16 %v3547
    %v4785 = vunpack.c.l.b16 %v3548
    %v4786 = vunpack.c.h.b16 %v3548
    %v4787 = vunpack.c.l.b16 %v3549
    %v4788 = vunpack.c.h.b16 %v3549
    %v4789 = vunpack.c.l.b16 %v3550
    %v4790 = vunpack.c.h.b16 %v3550
    %v4791 = vunpack.c.l.b16 %v3551
    %v4792 = vunpack.c.h.b16 %v3551
    %v4793 = vunpack.c.l.b16 %v3552
    %v4794 = vunpack.c.h.b16 %v3552
    %v4795 = vunpack.c.l.b16 %v3553
    %v4796 = vunpack.c.h.b16 %v3553
    %v4797 = vunpack.c.l.b16 %v3554
    %v4798 = vunpack.c.h.b16 %v3554
    %v4799 = vunpack.c.l.b16 %v3555
    %v4800 = vunpack.c.h.b16 %v3555
    %v4801 = vunpack.c.l.b16 %v3556
    %v4802 = vunpack.c.h.b16 %v3556
    %v4803 = vunpack.c.l.b16 %v3557
    %v4804 = vunpack.c.h.b16 %v3557
    %v4805 = vunpack.c.l.b16 %v3558
    %v4806 = vunpack.c.h.b16 %v3558
    %v4807 = vunpack.c.l.b16 %v3559
    %v4808 = vunpack.c.h.b16 %v3559
    %v4809 = vunpack.c.l.b16 %v3560
    %v4810 = vunpack.c.h.b16 %v3560
    %v4811 = vunpack.c.l.b16 %v3561
    %v4812 = vunpack.c.h.b16 %v3561
    %v4813 = vunpack.c.l.b16 %v3562
    %v4814 = vunpack.c.h.b16 %v3562
    %v4815 = vunpack.c.l.b16 %v3563
    %v4816 = vunpack.c.h.b16 %v3563
    %v4817 = vunpack.c.l.b16 %v3564
    %v4818 = vunpack.c.h.b16 %v3564
    %v4819 = vunpack.c.l.b16 %v3565
    %v4820 = vunpack.c.h.b16 %v3565
    %v4821 = vunpack.c.l.b16 %v3566
    %v4822 = vunpack.c.h.b16 %v3566
    %v4823 = vunpack.c.l.b16 %v3567
    %v4824 = vunpack.c.h.b16 %v3567
    %v4825 = vunpack.c.l.b16 %v3568
    %v4826 = vunpack.c.h.b16 %v3568
    %v4827 = vunpack.c.l.b16 %v3569
    %v4828 = vunpack.c.h.b16 %v3569
    %v4829 = vunpack.c.l.b16 %v3570
    %v4830 = vunpack.c.h.b16 %v3570
    %v4831 = vunpack.c.l.b16 %v3571
    %v4832 = vunpack.c.h.b16 %v3571
    %v4833 = vunpack.c.l.b16 %v3572
    %v4834 = vunpack.c.h.b16 %v3572
    %v4835 = vunpack.c.l.b16 %v3573
    %v4836 = vunpack.c.h.b16 %v3573
    %v4837 = vunpack.c.l.b16 %v3574
    %v4838 = vunpack.c.h.b16 %v3574
    %v4839 = vunpack.c.l.b16 %v3575
    %v4840 = vunpack.c.h.b16 %v3575
    %v4841 = vunpack.c.l.b16 %v3576
    %v4842 = vunpack.c.h.b16 %v3576
    %v4843 = vunpack.c.l.b16 %v3577
    %v4844 = vunpack.c.h.b16 %v3577
    %v4845 = vunpack.c.l.b16 %v3578
    %v4846 = vunpack.c.h.b16 %v3578
    %v4847 = vunpack.c.l.b16 %v3579
    %v4848 = vunpack.c.h.b16 %v3579
    %v4849 = vunpack.c.l.b16 %v3580
    %v4850 = vunpack.c.h.b16 %v3580
    %v4851 = vunpack.c.l.b16 %v3581
    %v4852 = vunpack.c.h.b16 %v3581
    %v4853 = vunpack.c.l.b16 %v3582
    %v4854 = vunpack.c.h.b16 %v3582
    %v4855 = vunpack.c.l.b16 %v3583
    %v4856 = vunpack.c.h.b16 %v3583
    %v4857 = vunpack.c.l.b16 %v3584
    %v4858 = vunpack.c.h.b16 %v3584
    %v4859 = vunpack.c.l.b16 %v3585
    %v4860 = vunpack.c.h.b16 %v3585
    %v4861 = vunpack.c.l.b16 %v3586
    %v4862 = vunpack.c.h.b16 %v3586
    %v4863 = vunpack.c.l.b16 %v3587
    %v4864 = vunpack.c.h.b16 %v3587
    %v4865 = vunpack.c.l.b16 %v3588
    %v4866 = vunpack.c.h.b16 %v3588
    %v4867 = vunpack.c.l.b16 %v3589
    %v4868 = vunpack.c.h.b16 %v3589
    %v4869 = vunpack.c.l.b16 %v3590
    %v4870 = vunpack.c.h.b16 %v3590
    %v4871 = vunpack.c.l.b16 %v3591
    %v4872 = vunpack.c.h.b16 %v3591
    %v4873 = vunpack.c.l.b16 %v3592
    %v4874 = vunpack.c.h.b16 %v3592
    %v4875 = vunpack.c.l.b16 %v3593
    %v4876 = vunpack.c.h.b16 %v3593
    %v4877 = vunpack.c.l.b16 %v3594
    %v4878 = vunpack.c.h.b16 %v3594
    %v4879 = vunpack.c.l.b16 %v3595
    %v4880 = vunpack.c.h.b16 %v3595
    %v4881 = vunpack.c.l.b16 %v3596
    %v4882 = vunpack.c.h.b16 %v3596
    %v4883 = vunpack.c.l.b16 %v3597
    %v4884 = vunpack.c.h.b16 %v3597
    %v4885 = vunpack.c.l.b16 %v3598
    %v4886 = vunpack.c.h.b16 %v3598
    %v4887 = vunpack.c.l.b16 %v3599
    %v4888 = vunpack.c.h.b16 %v3599
    %v4889 = vunpack.c.l.b16 %v3600
    %v4890 = vunpack.c.h.b16 %v3600
    %v4891 = vunpack.c.l.b16 %v3601
    %v4892 = vunpack.c.h.b16 %v3601
    %v4893 = vunpack.c.l.b16 %v3602
    %v4894 = vunpack.c.h.b16 %v3602
    %v4895 = vunpack.c.l.b16 %v3603
    %v4896 = vunpack.c.h.b16 %v3603
    %v4897 = vunpack.c.l.b16 %v3604
    %v4898 = vunpack.c.h.b16 %v3604
    %v4899 = vunpack.c.l.b16 %v3605
    %v4900 = vunpack.c.h.b16 %v3605
    %v4901 = vunpack.c.l.b16 %v3606
    %v4902 = vunpack.c.h.b16 %v3606
    %v4903 = vunpack.c.l.b16 %v3607
    %v4904 = vunpack.c.h.b16 %v3607
    %v4905 = vunpack.c.l.b16 %v3608
    %v4906 = vunpack.c.h.b16 %v3608
    %v4907 = vunpack.c.l.b16 %v3609
    %v4908 = vunpack.c.h.b16 %v3609
    %v4909 = vunpack.c.l.b16 %v3610
    %v4910 = vunpack.c.h.b16 %v3610
    %v4911 = vunpack.c.l.b16 %v3611
    %v4912 = vunpack.c.h.b16 %v3611
    %v4913 = vunpack.c.l.b16 %v3612
    %v4914 = vunpack.c.h.b16 %v3612
    %v4915 = vunpack.c.l.b16 %v3613
    %v4916 = vunpack.c.h.b16 %v3613
    %v4917 = vunpack.c.l.b16 %v3614
    %v4918 = vunpack.c.h.b16 %v3614
    %v4919 = vunpack.c.l.b16 %v3615
    %v4920 = vunpack.c.h.b16 %v3615
    %v4921 = vunpack.c.l.b16 %v3616
    %v4922 = vunpack.c.h.b16 %v3616
    %v4923 = vunpack.c.l.b16 %v3617
    %v4924 = vunpack.c.h.b16 %v3617
    %v4925 = vunpack.c.l.b16 %v3618
    %v4926 = vunpack.c.h.b16 %v3618
    %v4927 = vunpack.c.l.b16 %v3619
    %v4928 = vunpack.c.h.b16 %v3619
    %v4929 = vunpack.c.l.b16 %v3620
    %v4930 = vunpack.c.h.b16 %v3620
    %v4931 = vunpack.c.l.b16 %v3621
    %v4932 = vunpack.c.h.b16 %v3621
    %v4933 = vunpack.c.l.b16 %v3622
    %v4934 = vunpack.c.h.b16 %v3622
    %v4935 = vunpack.c.l.b16 %v3623
    %v4936 = vunpack.c.h.b16 %v3623
    %v4937 = vunpack.c.l.b16 %v3624
    %v4938 = vunpack.c.h.b16 %v3624
    %v4939 = vunpack.c.l.b16 %v3625
    %v4940 = vunpack.c.h.b16 %v3625
    %v4941 = vunpack.c.l.b16 %v3626
    %v4942 = vunpack.c.h.b16 %v3626
    %v4943 = vunpack.c.l.b16 %v3627
    %v4944 = vunpack.c.h.b16 %v3627
    %v4945 = vunpack.c.l.b16 %v3628
    %v4946 = vunpack.c.h.b16 %v3628
    %v4947 = vunpack.c.l.b16 %v3629
    %v4948 = vunpack.c.h.b16 %v3629
    %v4949 = vunpack.c.l.b16 %v3630
    %v4950 = vunpack.c.h.b16 %v3630
    %v4951 = vunpack.c.l.b16 %v3631
    %v4952 = vunpack.c.h.b16 %v3631
    %v4953 = vunpack.c.l.b16 %v3632
    %v4954 = vunpack.c.h.b16 %v3632
    %v4955 = vunpack.c.l.b16 %v3633
    %v4956 = vunpack.c.h.b16 %v3633
    %v4957 = vunpack.c.l.b16 %v3634
    %v4958 = vunpack.c.h.b16 %v3634
    %v4959 = vunpack.c.l.b16 %v3635
    %v4960 = vunpack.c.h.b16 %v3635
    %v4961 = vunpack.c.l.b16 %v3636
    %v4962 = vunpack.c.h.b16 %v3636
    %v4963 = vunpack.c.l.b16 %v3637
    %v4964 = vunpack.c.h.b16 %v3637
    %v4965 = vunpack.c.l.b16 %v3638
    %v4966 = vunpack.c.h.b16 %v3638
    %v4967 = vunpack.c.l.b16 %v3639
    %v4968 = vunpack.c.h.b16 %v3639
    %v4969 = vunpack.c.l.b16 %v3640
    %v4970 = vunpack.c.h.b16 %v3640
    %v4971 = vunpack.c.l.b16 %v3641
    %v4972 = vunpack.c.h.b16 %v3641
    %v4973 = vunpack.c.l.b16 %v3642
    %v4974 = vunpack.c.h.b16 %v3642
    %v4975 = vunpack.c.l.b16 %v3643
    %v4976 = vunpack.c.h.b16 %v3643
    %v4977 = vunpack.c.l.b16 %v3644
    %v4978 = vunpack.c.h.b16 %v3644
    %v4979 = vunpack.c.l.b16 %v3645
    %v4980 = vunpack.c.h.b16 %v3645
    %v4981 = vunpack.c.l.b16 %v3646
    %v4982 = vunpack.c.h.b16 %v3646
    %v4983 = vunpack.c.l.b16 %v3647
    %v4984 = vunpack.c.h.b16 %v3647
    %v4985 = vunpack.c.l.b16 %v3648
    %v4986 = vunpack.c.h.b16 %v3648
    %v4987 = vunpack.c.l.b16 %v3649
    %v4988 = vunpack.c.h.b16 %v3649
    %v4989 = vunpack.c.l.b16 %v3650
    %v4990 = vunpack.c.h.b16 %v3650
    %v4991 = vunpack.c.l.b16 %v3651
    %v4992 = vunpack.c.h.b16 %v3651
    %v4993 = vunpack.c.l.b16 %v3652
    %v4994 = vunpack.c.h.b16 %v3652
    %v4995 = vunpack.c.l.b16 %v3653
    %v4996 = vunpack.c.h.b16 %v3653
    %v4997 = vunpack.c.l.b16 %v3654
    %v4998 = vunpack.c.h.b16 %v3654
    %v4999 = vunpack.c.l.b16 %v3655
    %v5000 = vunpack.c.h.b16 %v3655
    %v5001 = vunpack.c.l.b16 %v3656
    %v5002 = vunpack.c.h.b16 %v3656
    %v5003 = vunpack.c.l.b16 %v3657
    %v5004 = vunpack.c.h.b16 %v3657
    %v5005 = vunpack.c.l.b16 %v3658
    %v5006 = vunpack.c.h.b16 %v3658
    %v5007 = vunpack.c.l.b16 %v3659
    %v5008 = vunpack.c.h.b16 %v3659
    %v5009 = vunpack.c.l.b16 %v3660
    %v5010 = vunpack.c.h.b16 %v3660
    %v5011 = vunpack.c.l.b16 %v3661
    %v5012 = vunpack.c.h.b16 %v3661
    %v5013 = vunpack.c.l.b16 %v3662
    %v5014 = vunpack.c.h.b16 %v3662
    %v5015 = vunpack.c.l.b16 %v3663
    %v5016 = vunpack.c.h.b16 %v3663
    %v5017 = vunpack.c.l.b16 %v3664
    %v5018 = vunpack.c.h.b16 %v3664
    %v5019 = vunpack.c.l.b16 %v3665
    %v5020 = vunpack.c.h.b16 %v3665
    %v5021 = vunpack.c.l.b16 %v3666
    %v5022 = vunpack.c.h.b16 %v3666
    %v5023 = vunpack.c.l.b16 %v3667
    %v5024 = vunpack.c.h.b16 %v3667
    %v5025 = vunpack.c.l.b16 %v3668
    %v5026 = vunpack.c.h.b16 %v3668
    %v5027 = vunpack.c.l.b16 %v3669
    %v5028 = vunpack.c.h.b16 %v3669
    %v5029 = vunpack.c.l.b16 %v3670
    %v5030 = vunpack.c.h.b16 %v3670
    %v5031 = vunpack.c.l.b16 %v3671
    %v5032 = vunpack.c.h.b16 %v3671
    %v5033 = vunpack.c.l.b16 %v3672
    %v5034 = vunpack.c.h.b16 %v3672
    %v5035 = vunpack.c.l.b16 %v3673
    %v5036 = vunpack.c.h.b16 %v3673
    %v5037 = vunpack.c.l.b16 %v3674
    %v5038 = vunpack.c.h.b16 %v3674
    %v5039 = vunpack.c.l.b16 %v3675
    %v5040 = vunpack.c.h.b16 %v3675
    %v5041 = vunpack.c.l.b16 %v3676
    %v5042 = vunpack.c.h.b16 %v3676
    %v5043 = vunpack.c.l.b16 %v3677
    %v5044 = vunpack.c.h.b16 %v3677
    %v5045 = vunpack.c.l.b16 %v3678
    %v5046 = vunpack.c.h.b16 %v3678
    %v5047 = vunpack.c.l.b16 %v3679
    %v5048 = vunpack.c.h.b16 %v3679
    %v5049 = vunpack.c.l.b16 %v3680
    %v5050 = vunpack.c.h.b16 %v3680
    %v5051 = vunpack.c.l.b16 %v3681
    %v5052 = vunpack.c.h.b16 %v3681
    %v5053 = vunpack.c.l.b16 %v3682
    %v5054 = vunpack.c.h.b16 %v3682
    %v5055 = vunpack.c.l.b16 %v3683
    %v5056 = vunpack.c.h.b16 %v3683
    %v5057 = vunpack.c.l.b16 %v3684
    %v5058 = vunpack.c.h.b16 %v3684
    %v5059 = vunpack.c.l.b16 %v3685
    %v5060 = vunpack.c.h.b16 %v3685
    %v5061 = vunpack.c.l.b16 %v3686
    %v5062 = vunpack.c.h.b16 %v3686
    %v5063 = vunpack.c.l.b16 %v3687
    %v5064 = vunpack.c.h.b16 %v3687
    %v5065 = vunpack.c.l.b16 %v3688
    %v5066 = vunpack.c.h.b16 %v3688
    %v5067 = vunpack.c.l.b16 %v3689
    %v5068 = vunpack.c.h.b16 %v3689
    %v5069 = vunpack.c.l.b16 %v3690
    %v5070 = vunpack.c.h.b16 %v3690
    %v5071 = vunpack.c.l.b16 %v3691
    %v5072 = vunpack.c.h.b16 %v3691
    %v5073 = vunpack.c.l.b16 %v3692
    %v5074 = vunpack.c.h.b16 %v3692
    %v5075 = vunpack.c.l.b16 %v3693
    %v5076 = vunpack.c.h.b16 %v3693
    %v5077 = vunpack.c.l.b16 %v3694
    %v5078 = vunpack.c.h.b16 %v3694
    %v5079 = vunpack.c.l.b16 %v3695
    %v5080 = vunpack.c.h.b16 %v3695
    %v5081 = vunpack.c.l.b16 %v3696
    %v5082 = vunpack.c.h.b16 %v3696
    %v5083 = vunpack.c.l.b16 %v3697
    %v5084 = vunpack.c.h.b16 %v3697
    %v5085 = vunpack.c.l.b16 %v3698
    %v5086 = vunpack.c.h.b16 %v3698
    %v5087 = vunpack.c.l.b16 %v3699
    %v5088 = vunpack.c.h.b16 %v3699
    %v5089 = vunpack.c.l.b16 %v3700
    %v5090 = vunpack.c.h.b16 %v3700
    %v5091 = vunpack.c.l.b16 %v3701
    %v5092 = vunpack.c.h.b16 %v3701
    %v5093 = vunpack.c.l.b16 %v3702
    %v5094 = vunpack.c.h.b16 %v3702
    %v5095 = vunpack.c.l.b16 %v3703
    %v5096 = vunpack.c.h.b16 %v3703
    %v5097 = vunpack.c.l.b16 %v3704
    %v5098 = vunpack.c.h.b16 %v3704
    %v5099 = vunpack.c.l.b16 %v3705
    %v5100 = vunpack.c.h.b16 %v3705
    %v5101 = vunpack.c.l.b16 %v3706
    %v5102 = vunpack.c.h.b16 %v3706
    %v5103 = vunpack.c.l.b16 %v3707
    %v5104 = vunpack.c.h.b16 %v3707
    %v5105 = vunpack.c.l.b16 %v3708
    %v5106 = vunpack.c.h.b16 %v3708
    %v5107 = vunpack.c.l.b16 %v3709
    %v5108 = vunpack.c.h.b16 %v3709
    %v5109 = vunpack.c.l.b16 %v3710
    %v5110 = vunpack.c.h.b16 %v3710
    %v5111 = vunpack.c.l.b16 %v3711
    %v5112 = vunpack.c.h.b16 %v3711
    %v5113 = vunpack.c.l.b16 %v3712
    %v5114 = vunpack.c.h.b16 %v3712
    %v5115 = vunpack.c.l.b16 %v3713
    %v5116 = vunpack.c.h.b16 %v3713
    %v5117 = vunpack.c.l.b16 %v3714
    %v5118 = vunpack.c.h.b16 %v3714
    %v5119 = vunpack.c.l.b16 %v3715
    %v5120 = vunpack.c.h.b16 %v3715
    %v5121 = vunpack.c.l.b16 %v3716
    %v5122 = vunpack.c.h.b16 %v3716
    %v5123 = vunpack.c.l.b16 %v3717
    %v5124 = vunpack.c.h.b16 %v3717
    %v5125 = vunpack.c.l.b16 %v3718
    %v5126 = vunpack.c.h.b16 %v3718
    %v5127 = vunpack.c.l.b16 %v3719
    %v5128 = vunpack.c.h.b16 %v3719
    %v5129 = vunpack.c.l.b16 %v3720
    %v5130 = vunpack.c.h.b16 %v3720
    %v5131 = vunpack.c.l.b16 %v3721
    %v5132 = vunpack.c.h.b16 %v3721
    %v5133 = vunpack.c.l.b16 %v3722
    %v5134 = vunpack.c.h.b16 %v3722
    %v5135 = vunpack.c.l.b16 %v3723
    %v5136 = vunpack.c.h.b16 %v3723
    %v5137 = vunpack.c.l.b16 %v3724
    %v5138 = vunpack.c.h.b16 %v3724
    %v5139 = vunpack.c.l.b16 %v3725
    %v5140 = vunpack.c.h.b16 %v3725
    %v5141 = vunpack.c.l.b16 %v3726
    %v5142 = vunpack.c.h.b16 %v3726
    %v5143 = vunpack.c.l.b16 %v3727
    %v5144 = vunpack.c.h.b16 %v3727
    %v5145 = vunpack.c.l.b16 %v3728
    %v5146 = vunpack.c.h.b16 %v3728
    %v5147 = vunpack.c.l.b16 %v3729
    %v5148 = vunpack.c.h.b16 %v3729
    %v5149 = vunpack.c.l.b16 %v3730
    %v5150 = vunpack.c.h.b16 %v3730
    %v5151 = vunpack.c.l.b16 %v3731
    %v5152 = vunpack.c.h.b16 %v3731
    %v5153 = vunpack.c.l.b16 %v3732
    %v5154 = vunpack.c.h.b16 %v3732
    %v5155 = vunpack.c.l.b16 %v3733
    %v5156 = vunpack.c.h.b16 %v3733
    %v5157 = vunpack.c.l.b16 %v3734
    %v5158 = vunpack.c.h.b16 %v3734
    %v5159 = vunpack.c.l.b16 %v3735
    %v5160 = vunpack.c.h.b16 %v3735
    %v5161 = vunpack.c.l.b16 %v3736
    %v5162 = vunpack.c.h.b16 %v3736
    %v5163 = vunpack.c.l.b16 %v3737
    %v5164 = vunpack.c.h.b16 %v3737
    %v5165 = vunpack.c.l.b16 %v3738
    %v5166 = vunpack.c.h.b16 %v3738
    %v5167 = vunpack.c.l.b16 %v3739
    %v5168 = vunpack.c.h.b16 %v3739
    %v5169 = vunpack.c.l.b16 %v3740
    %v5170 = vunpack.c.h.b16 %v3740
    %v5171 = vunpack.c.l.b16 %v3741
    %v5172 = vunpack.c.h.b16 %v3741
    %v5173 = vunpack.c.l.b16 %v3742
    %v5174 = vunpack.c.h.b16 %v3742
    %v5175 = vunpack.c.l.b16 %v3743
    %v5176 = vunpack.c.h.b16 %v3743
    %v5177 = vunpack.c.l.b16 %v3744
    %v5178 = vunpack.c.h.b16 %v3744
    %v5179 = vunpack.c.l.b16 %v3745
    %v5180 = vunpack.c.h.b16 %v3745
    %v5181 = vunpack.c.l.b16 %v3746
    %v5182 = vunpack.c.h.b16 %v3746
    %v5183 = vunpack.c.l.b16 %v3747
    %v5184 = vunpack.c.h.b16 %v3747
    %v5185 = vunpack.c.l.b16 %v3748
    %v5186 = vunpack.c.h.b16 %v3748
    %v5187 = vunpack.c.l.b16 %v3749
    %v5188 = vunpack.c.h.b16 %v3749
    %v5189 = vunpack.c.l.b16 %v3750
    %v5190 = vunpack.c.h.b16 %v3750
    %v5191 = vunpack.c.l.b16 %v3751
    %v5192 = vunpack.c.h.b16 %v3751
    %v5193 = vunpack.c.l.b16 %v3752
    %v5194 = vunpack.c.h.b16 %v3752
    %v5195 = vunpack.c.l.b16 %v3753
    %v5196 = vunpack.c.h.b16 %v3753
    %v5197 = vunpack.c.l.b16 %v3754
    %v5198 = vunpack.c.h.b16 %v3754
    %v5199 = vunpack.c.l.b16 %v3755
    %v5200 = vunpack.c.h.b16 %v3755
    %v5201 = vunpack.c.l.b16 %v3756
    %v5202 = vunpack.c.h.b16 %v3756
    %v5203 = vunpack.c.l.b16 %v3757
    %v5204 = vunpack.c.h.b16 %v3757
    %v5205 = vunpack.c.l.b16 %v3758
    %v5206 = vunpack.c.h.b16 %v3758
    %v5207 = vunpack.c.l.b16 %v3759
    %v5208 = vunpack.c.h.b16 %v3759
    %v5209 = vunpack.c.l.b16 %v3760
    %v5210 = vunpack.c.h.b16 %v3760
    %v5211 = vunpack.c.l.b16 %v3761
    %v5212 = vunpack.c.h.b16 %v3761
    %v5213 = vunpack.c.l.b16 %v3762
    %v5214 = vunpack.c.h.b16 %v3762
    %v5215 = vunpack.c.l.b16 %v3763
    %v5216 = vunpack.c.h.b16 %v3763
    %v5217 = vunpack.c.l.b16 %v3764
    %v5218 = vunpack.c.h.b16 %v3764
    %v5219 = vunpack.c.l.b16 %v3765
    %v5220 = vunpack.c.h.b16 %v3765
    %v5221 = vunpack.c.l.b16 %v3766
    %v5222 = vunpack.c.h.b16 %v3766
    %v5223 = vunpack.c.l.b16 %v3767
    %v5224 = vunpack.c.h.b16 %v3767
    %v5225 = vunpack.c.l.b16 %v3768
    %v5226 = vunpack.c.h.b16 %v3768
    %v5227 = vunpack.c.l.b16 %v3769
    %v5228 = vunpack.c.h.b16 %v3769
    %v5229 = vunpack.c.l.b16 %v3770
    %v5230 = vunpack.c.h.b16 %v3770
    %v5231 = vunpack.c.l.b16 %v3771
    %v5232 = vunpack.c.h.b16 %v3771
    %v5233 = vunpack.c.l.b16 %v3772
    %v5234 = vunpack.c.h.b16 %v3772
    %v5235 = vunpack.c.l.b16 %v3773
    %v5236 = vunpack.c.h.b16 %v3773
    %v5237 = vunpack.c.l.b16 %v3774
    %v5238 = vunpack.c.h.b16 %v3774
    %v5239 = vunpack.c.l.b16 %v3775
    %v5240 = vunpack.c.h.b16 %v3775
    %v5241 = vunpack.c.l.b16 %v3776
    %v5242 = vunpack.c.h.b16 %v3776
    %v5243 = vunpack.c.l.b16 %v3777
    %v5244 = vunpack.c.h.b16 %v3777
    %v5245 = vunpack.c.l.b16 %v3778
    %v5246 = vunpack.c.h.b16 %v3778
    %v5247 = vunpack.c.l.b16 %v3779
    %v5248 = vunpack.c.h.b16 %v3779
    %v5249 = vunpack.c.l.b16 %v3780
    %v5250 = vunpack.c.h.b16 %v3780
    %v5251 = vunpack.c.l.b16 %v3781
    %v5252 = vunpack.c.h.b16 %v3781
    %v5253 = vunpack.c.l.b16 %v3782
    %v5254 = vunpack.c.h.b16 %v3782
    %v5255 = vunpack.c.l.b16 %v3783
    %v5256 = vunpack.c.h.b16 %v3783
    %v5257 = vunpack.c.l.b16 %v3784
    %v5258 = vunpack.c.h.b16 %v3784
    %v5259 = vunpack.c.l.b16 %v3785
    %v5260 = vunpack.c.h.b16 %v3785
    %v5261 = vunpack.c.l.b16 %v3786
    %v5262 = vunpack.c.h.b16 %v3786
    %v5263 = vunpack.c.l.b16 %v3787
    %v5264 = vunpack.c.h.b16 %v3787
    %v5265 = vunpack.c.l.b16 %v3788
    %v5266 = vunpack.c.h.b16 %v3788
    %v5267 = vunpack.c.l.b16 %v3789
    %v5268 = vunpack.c.h.b16 %v3789
    %v5269 = vunpack.c.l.b16 %v3790
    %v5270 = vunpack.c.h.b16 %v3790
    %v5271 = vunpack.c.l.b16 %v3791
    %v5272 = vunpack.c.h.b16 %v3791
    %v5273 = vunpack.c.l.b16 %v3792
    %v5274 = vunpack.c.h.b16 %v3792
    %v5275 = vunpack.c.l.b16 %v3793
    %v5276 = vunpack.c.h.b16 %v3793
    %v5277 = vunpack.c.l.b16 %v3794
    %v5278 = vunpack.c.h.b16 %v3794
    %v5279 = vunpack.c.l.b16 %v3795
    %v5280 = vunpack.c.h.b16 %v3795
    %v5281 = vunpack.c.l.b16 %v3796
    %v5282 = vunpack.c.h.b16 %v3796
    %v5283 = vunpack.c.l.b16 %v3797
    %v5284 = vunpack.c.h.b16 %v3797
    %v5285 = vunpack.c.l.b16 %v3798
    %v5286 = vunpack.c.h.b16 %v3798
    %v5287 = vunpack.c.l.b16 %v3799
    %v5288 = vunpack.c.h.b16 %v3799
    %v5289 = vunpack.c.l.b16 %v3800
    %v5290 = vunpack.c.h.b16 %v3800
    %v5291 = vunpack.c.l.b16 %v3801
    %v5292 = vunpack.c.h.b16 %v3801
    %v5293 = vunpack.c.l.b16 %v3802
    %v5294 = vunpack.c.h.b16 %v3802
    %v5295 = vunpack.c.l.b16 %v3803
    %v5296 = vunpack.c.h.b16 %v3803
    %v5297 = vunpack.c.l.b16 %v3804
    %v5298 = vunpack.c.h.b16 %v3804
    %v5299 = vunpack.c.l.b16 %v3805
    %v5300 = vunpack.c.h.b16 %v3805
    %v5301 = vunpack.c.l.b16 %v3806
    %v5302 = vunpack.c.h.b16 %v3806
    %v5303 = vunpack.c.l.b16 %v3807
    %v5304 = vunpack.c.h.b16 %v3807
    %v5305 = vunpack.c.l.b16 %v3808
    %v5306 = vunpack.c.h.b16 %v3808
    %v5307 = vunpack.c.l.b16 %v3809
    %v5308 = vunpack.c.h.b16 %v3809
    %v5309 = vunpack.c.l.b16 %v3810
    %v5310 = vunpack.c.h.b16 %v3810
    %v5311 = vunpack.c.l.b16 %v3811
    %v5312 = vunpack.c.h.b16 %v3811
    %v5313 = vunpack.c.l.b16 %v3812
    %v5314 = vunpack.c.h.b16 %v3812
    %v5315 = vunpack.c.l.b16 %v3813
    %v5316 = vunpack.c.h.b16 %v3813
    %v5317 = vunpack.c.l.b16 %v3814
    %v5318 = vunpack.c.h.b16 %v3814
    %v5319 = vunpack.c.l.b16 %v3815
    %v5320 = vunpack.c.h.b16 %v3815
    %v5321 = vunpack.c.l.b16 %v3816
    %v5322 = vunpack.c.h.b16 %v3816
    %v5323 = vunpack.c.l.b16 %v3817
    %v5324 = vunpack.c.h.b16 %v3817
    %v5325 = vunpack.c.l.b16 %v3818
    %v5326 = vunpack.c.h.b16 %v3818
    %v5327 = vunpack.c.l.b16 %v3819
    %v5328 = vunpack.c.h.b16 %v3819
    %v5329 = vunpack.c.l.b16 %v3820
    %v5330 = vunpack.c.h.b16 %v3820
    %v5331 = vunpack.c.l.b16 %v3821
    %v5332 = vunpack.c.h.b16 %v3821
    %v5333 = vunpack.c.l.b16 %v3822
    %v5334 = vunpack.c.h.b16 %v3822
    %v5335 = vunpack.c.l.b16 %v3823
    %v5336 = vunpack.c.h.b16 %v3823
    %v5337 = vunpack.c.l.b16 %v3824
    %v5338 = vunpack.c.h.b16 %v3824
    %v5339 = vunpack.c.l.b16 %v3825
    %v5340 = vunpack.c.h.b16 %v3825
    %v5341 = vunpack.c.l.b16 %v3826
    %v5342 = vunpack.c.h.b16 %v3826
    %v5343 = vunpack.c.l.b16 %v3827
    %v5344 = vunpack.c.h.b16 %v3827
    %v5345 = vunpack.c.l.b16 %v3828
    %v5346 = vunpack.c.h.b16 %v3828
    %v5347 = vunpack.c.l.b16 %v3829
    %v5348 = vunpack.c.h.b16 %v3829
    %v5349 = vunpack.c.l.b16 %v3830
    %v5350 = vunpack.c.h.b16 %v3830
    %v5351 = vunpack.c.l.b16 %v3831
    %v5352 = vunpack.c.h.b16 %v3831
    %v5353 = vunpack.c.l.b16 %v3832
    %v5354 = vunpack.c.h.b16 %v3832
    %v5355 = vunpack.c.l.b16 %v3833
    %v5356 = vunpack.c.h.b16 %v3833
    %v5357 = vunpack.c.l.b16 %v3834
    %v5358 = vunpack.c.h.b16 %v3834
    %v5359 = vunpack.c.l.b16 %v3835
    %v5360 = vunpack.c.h.b16 %v3835
    %v5361 = vunpack.c.l.b16 %v3836
    %v5362 = vunpack.c.h.b16 %v3836
    %v5363 = vunpack.c.l.b16 %v3837
    %v5364 = vunpack.c.h.b16 %v3837
    %v5365 = vunpack.c.l.b16 %v3838
    %v5366 = vunpack.c.h.b16 %v3838
    %v5367 = vunpack.c.l.b16 %v3839
    %v5368 = vunpack.c.h.b16 %v3839
    %v5369 = vunpack.c.l.b16 %v3840
    %v5370 = vunpack.c.h.b16 %v3840
    %v5371 = vunpack.c.l.b16 %v3841
    %v5372 = vunpack.c.h.b16 %v3841
    %v5373 = vunpack.c.l.b16 %v3842
    %v5374 = vunpack.c.h.b16 %v3842
    %v5375 = vunpack.c.l.b16 %v3843
    %v5376 = vunpack.c.h.b16 %v3843
    %v5377 = vunpack.c.l.b16 %v3844
    %v5378 = vunpack.c.h.b16 %v3844
    %v5379 = vunpack.c.l.b16 %v3845
    %v5380 = vunpack.c.h.b16 %v3845
    %v5381 = vunpack.c.l.b16 %v3846
    %v5382 = vunpack.c.h.b16 %v3846
    %v5383 = vpack.c.b16 %v4361, %v4359
    %v5384 = vpack.c.b16 %v4362, %v4360
    %v5385 = vpack.c.b16 %v4365, %v4363
    %v5386 = vpack.c.b16 %v4366, %v4364
    %v5387 = vpack.c.b16 %v4369, %v4367
    %v5388 = vpack.c.b16 %v4370, %v4368
    %v5389 = vpack.c.b16 %v4373, %v4371
    %v5390 = vpack.c.b16 %v4374, %v4372
    %v5391 = vpack.c.b16 %v4377, %v4375
    %v5392 = vpack.c.b16 %v4378, %v4376
    %v5393 = vpack.c.b16 %v4381, %v4379
    %v5394 = vpack.c.b16 %v4382, %v4380
    %v5395 = vpack.c.b16 %v4385, %v4383
    %v5396 = vpack.c.b16 %v4386, %v4384
    %v5397 = vpack.c.b16 %v4389, %v4387
    %v5398 = vpack.c.b16 %v4390, %v4388
    %v5399 = vpack.c.b16 %v4393, %v4391
    %v5400 = vpack.c.b16 %v4394, %v4392
    %v5401 = vpack.c.b16 %v4397, %v4395
    %v5402 = vpack.c.b16 %v4398, %v4396
    %v5403 = vpack.c.b16 %v4401, %v4399
    %v5404 = vpack.c.b16 %v4402, %v4400
    %v5405 = vpack.c.b16 %v4405, %v4403
    %v5406 = vpack.c.b16 %v4406, %v4404
    %v5407 = vpack.c.b16 %v4409, %v4407
    %v5408 = vpack.c.b16 %v4410, %v4408
    %v5409 = vpack.c.b16 %v4413, %v4411
    %v5410 = vpack.c.b16 %v4414, %v4412
    %v5411 = vpack.c.b16 %v4417, %v4415
    %v5412 = vpack.c.b16 %v4418, %v4416
    %v5413 = vpack.c.b16 %v4421, %v4419
    %v5414 = vpack.c.b16 %v4422, %v4420
    %v5415 = vpack.c.b16 %v4425, %v4423
    %v5416 = vpack.c.b16 %v4426, %v4424
    %v5417 = vpack.c.b16 %v4429, %v4427
    %v5418 = vpack.c.b16 %v4430, %v4428
    %v5419 = vpack.c.b16 %v4433, %v4431
    %v5420 = vpack.c.b16 %v4434, %v4432
    %v5421 = vpack.c.b16 %v4437, %v4435
    %v5422 = vpack.c.b16 %v4438, %v4436
    %v5423 = vpack.c.b16 %v4441, %v4439
    %v5424 = vpack.c.b16 %v4442, %v4440
    %v5425 = vpack.c.b16 %v4445, %v4443
    %v5426 = vpack.c.b16 %v4446, %v4444
    %v5427 = vpack.c.b16 %v4449, %v4447
    %v5428 = vpack.c.b16 %v4450, %v4448
    %v5429 = vpack.c.b16 %v4453, %v4451
    %v5430 = vpack.c.b16 %v4454, %v4452
    %v5431 = vpack.c.b16 %v4457, %v4455
    %v5432 = vpack.c.b16 %v4458, %v4456
    %v5433 = vpack.c.b16 %v4461, %v4459
    %v5434 = vpack.c.b16 %v4462, %v4460
    %v5435 = vpack.c.b16 %v4465, %v4463
    %v5436 = vpack.c.b16 %v4466, %v4464
    %v5437 = vpack.c.b16 %v4469, %v4467
    %v5438 = vpack.c.b16 %v4470, %v4468
    %v5439 = vpack.c.b16 %v4473, %v4471
    %v5440 = vpack.c.b16 %v4474, %v4472
    %v5441 = vpack.c.b16 %v4477, %v4475
    %v5442 = vpack.c.b16 %v4478, %v4476
    %v5443 = vpack.c.b16 %v4481, %v4479
    %v5444 = vpack.c.b16 %v4482, %v4480
    %v5445 = vpack.c.b16 %v4485, %v4483
    %v5446 = vpack.c.b16 %v4486, %v4484
    %v5447 = vpack.c.b16 %v4489, %v4487
    %v5448 = vpack.c.b16 %v4490, %v4488
    %v5449 = vpack.c.b16 %v4493, %v4491
    %v5450 = vpack.c.b16 %v4494, %v4492
    %v5451 = vpack.c.b16 %v4497, %v4495
    %v5452 = vpack.c.b16 %v4498, %v4496
    %v5453 = vpack.c.b16 %v4501, %v4499
    %v5454 = vpack.c.b16 %v4502, %v4500
    %v5455 = vpack.c.b16 %v4505, %v4503
    %v5456 = vpack.c.b16 %v4506, %v4504
    %v5457 = vpack.c.b16 %v4509, %v4507
    %v5458 = vpack.c.b16 %v4510, %v4508
    %v5459 = vpack.c.b16 %v4513, %v4511
    %v5460 = vpack.c.b16 %v4514, %v4512
    %v5461 = vpack.c.b16 %v4517, %v4515
    %v5462 = vpack.c.b16 %v4518, %v4516
    %v5463 = vpack.c.b16 %v4521, %v4519
    %v5464 = vpack.c.b16 %v4522, %v4520
    %v5465 = vpack.c.b16 %v4525, %v4523
    %v5466 = vpack.c.b16 %v4526, %v4524
    %v5467 = vpack.c.b16 %v4529, %v4527
    %v5468 = vpack.c.b16 %v4530, %v4528
    %v5469 = vpack.c.b16 %v4533, %v4531
    %v5470 = vpack.c.b16 %v4534, %v4532
    %v5471 = vpack.c.b16 %v4537, %v4535
    %v5472 = vpack.c.b16 %v4538, %v4536
    %v5473 = vpack.c.b16 %v4541, %v4539
    %v5474 = vpack.c.b16 %v4542, %v4540
    %v5475 = vpack.c.b16 %v4545, %v4543
    %v5476 = vpack.c.b16 %v4546, %v4544
    %v5477 = vpack.c.b16 %v4549, %v4547
    %v5478 = vpack.c.b16 %v4550, %v4548
    %v5479 = vpack.c.b16 %v4553, %v4551
    %v5480 = vpack.c.b16 %v4554, %v4552
    %v5481 = vpack.c.b16 %v4557, %v4555
    %v5482 = vpack.c.b16 %v4558, %v4556
    %v5483 = vpack.c.b16 %v4561, %v4559
    %v5484 = vpack.c.b16 %v4562, %v4560
    %v5485 = vpack.c.b16 %v4565, %v4563
    %v5486 = vpack.c.b16 %v4566, %v4564
    %v5487 = vpack.c.b16 %v4569, %v4567
    %v5488 = vpack.c.b16 %v4570, %v4568
    %v5489 = vpack.c.b16 %v4573, %v4571
    %v5490 = vpack.c.b16 %v4574, %v4572
    %v5491 = vpack.c.b16 %v4577, %v4575
    %v5492 = vpack.c.b16 %v4578, %v4576
    %v5493 = vpack.c.b16 %v4581, %v4579
    %v5494 = vpack.c.b16 %v4582, %v4580
    %v5495 = vpack.c.b16 %v4585, %v4583
    %v5496 = vpack.c.b16 %v4586, %v4584
    %v5497 = vpack.c.b16 %v4589, %v4587
    %v5498 = vpack.c.b16 %v4590, %v4588
    %v5499 = vpack.c.b16 %v4593, %v4591
    %v5500 = vpack.c.b16 %v4594, %v4592
    %v5501 = vpack.c.b16 %v4597, %v4595
    %v5502 = vpack.c.b16 %v4598, %v4596
    %v5503 = vpack.c.b16 %v4601, %v4599
    %v5504 = vpack.c.b16 %v4602, %v4600
    %v5505 = vpack.c.b16 %v4605, %v4603
    %v5506 = vpack.c.b16 %v4606, %v4604
    %v5507 = vpack.c.b16 %v4609, %v4607
    %v5508 = vpack.c.b16 %v4610, %v4608
    %v5509 = vpack.c.b16 %v4613, %v4611
    %v5510 = vpack.c.b16 %v4614, %v4612
    %v5511 = vpack.c.b16 %v4617, %v4615
    %v5512 = vpack.c.b16 %v4618, %v4616
    %v5513 = vpack.c.b16 %v4621, %v4619
    %v5514 = vpack.c.b16 %v4622, %v4620
    %v5515 = vpack.c.b16 %v4625, %v4623
    %v5516 = vpack.c.b16 %v4626, %v4624
    %v5517 = vpack.c.b16 %v4629, %v4627
    %v5518 = vpack.c.b16 %v4630, %v4628
    %v5519 = vpack.c.b16 %v4633, %v4631
    %v5520 = vpack.c.b16 %v4634, %v4632
    %v5521 = vpack.c.b16 %v4637, %v4635
    %v5522 = vpack.c.b16 %v4638, %v4636
    %v5523 = vpack.c.b16 %v4641, %v4639
    %v5524 = vpack.c.b16 %v4642, %v4640
    %v5525 = vpack.c.b16 %v4645, %v4643
    %v5526 = vpack.c.b16 %v4646, %v4644
    %v5527 = vpack.c.b16 %v4649, %v4647
    %v5528 = vpack.c.b16 %v4650, %v4648
    %v5529 = vpack.c.b16 %v4653, %v4651
    %v5530 = vpack.c.b16 %v4654, %v4652
    %v5531 = vpack.c.b16 %v4657, %v4655
    %v5532 = vpack.c.b16 %v4658, %v4656
    %v5533 = vpack.c.b16 %v4661, %v4659
    %v5534 = vpack.c.b16 %v4662, %v4660
    %v5535 = vpack.c.b16 %v4665, %v4663
    %v5536 = vpack.c.b16 %v4666, %v4664
    %v5537 = vpack.c.b16 %v4669, %v4667
    %v5538 = vpack.c.b16 %v4670, %v4668
    %v5539 = vpack.c.b16 %v4673, %v4671
    %v5540 = vpack.c.b16 %v4674, %v4672
    %v5541 = vpack.c.b16 %v4677, %v4675
    %v5542 = vpack.c.b16 %v4678, %v4676
    %v5543 = vpack.c.b16 %v4681, %v4679
    %v5544 = vpack.c.b16 %v4682, %v4680
    %v5545 = vpack.c.b16 %v4685, %v4683
    %v5546 = vpack.c.b16 %v4686, %v4684
    %v5547 = vpack.c.b16 %v4689, %v4687
    %v5548 = vpack.c.b16 %v4690, %v4688
    %v5549 = vpack.c.b16 %v4693, %v4691
    %v5550 = vpack.c.b16 %v4694, %v4692
    %v5551 = vpack.c.b16 %v4697, %v4695
    %v5552 = vpack.c.b16 %v4698, %v4696
    %v5553 = vpack.c.b16 %v4701, %v4699
    %v5554 = vpack.c.b16 %v4702, %v4700
    %v5555 = vpack.c.b16 %v4705, %v4703
    %v5556 = vpack.c.b16 %v4706, %v4704
    %v5557 = vpack.c.b16 %v4709, %v4707
    %v5558 = vpack.c.b16 %v4710, %v4708
    %v5559 = vpack.c.b16 %v4713, %v4711
    %v5560 = vpack.c.b16 %v4714, %v4712
    %v5561 = vpack.c.b16 %v4717, %v4715
    %v5562 = vpack.c.b16 %v4718, %v4716
    %v5563 = vpack.c.b16 %v4721, %v4719
    %v5564 = vpack.c.b16 %v4722, %v4720
    %v5565 = vpack.c.b16 %v4725, %v4723
    %v5566 = vpack.c.b16 %v4726, %v4724
    %v5567 = vpack.c.b16 %v4729, %v4727
    %v5568 = vpack.c.b16 %v4730, %v4728
    %v5569 = vpack.c.b16 %v4733, %v4731
    %v5570 = vpack.c.b16 %v4734, %v4732
    %v5571 = vpack.c.b16 %v4737, %v4735
    %v5572 = vpack.c.b16 %v4738, %v4736
    %v5573 = vpack.c.b16 %v4741, %v4739
    %v5574 = vpack.c.b16 %v4742, %v4740
    %v5575 = vpack.c.b16 %v4745, %v4743
    %v5576 = vpack.c.b16 %v4746, %v4744
    %v5577 = vpack.c.b16 %v4749, %v4747
    %v5578 = vpack.c.b16 %v4750, %v4748
    %v5579 = vpack.c.b16 %v4753, %v4751
    %v5580 = vpack.c.b16 %v4754, %v4752
    %v5581 = vpack.c.b16 %v4757, %v4755
    %v5582 = vpack.c.b16 %v4758, %v4756
    %v5583 = vpack.c.b16 %v4761, %v4759
    %v5584 = vpack.c.b16 %v4762, %v4760
    %v5585 = vpack.c.b16 %v4765, %v4763
    %v5586 = vpack.c.b16 %v4766, %v4764
    %v5587 = vpack.c.b16 %v4769, %v4767
    %v5588 = vpack.c.b16 %v4770, %v4768
    %v5589 = vpack.c.b16 %v4773, %v4771
    %v5590 = vpack.c.b16 %v4774, %v4772
    %v5591 = vpack.c.b16 %v4777, %v4775
    %v5592 = vpack.c.b16 %v4778, %v4776
    %v5593 = vpack.c.b16 %v4781, %v4779
    %v5594 = vpack.c.b16 %v4782, %v4780
    %v5595 = vpack.c.b16 %v4785, %v4783
    %v5596 = vpack.c.b16 %v4786, %v4784
    %v5597 = vpack.c.b16 %v4789, %v4787
    %v5598 = vpack.c.b16 %v4790, %v4788
    %v5599 = vpack.c.b16 %v4793, %v4791
    %v5600 = vpack.c.b16 %v4794, %v4792
    %v5601 = vpack.c.b16 %v4797, %v4795
    %v5602 = vpack.c.b16 %v4798, %v4796
    %v5603 = vpack.c.b16 %v4801, %v4799
    %v5604 = vpack.c.b16 %v4802, %v4800
    %v5605 = vpack.c.b16 %v4805, %v4803
    %v5606 = vpack.c.b16 %v4806, %v4804
    %v5607 = vpack.c.b16 %v4809, %v4807
    %v5608 = vpack.c.b16 %v4810, %v4808
    %v5609 = vpack.c.b16 %v4813, %v4811
    %v5610 = vpack.c.b16 %v4814, %v4812
    %v5611 = vpack.c.b16 %v4817, %v4815
    %v5612 = vpack.c.b16 %v4818, %v4816
    %v5613 = vpack.c.b16 %v4821, %v4819
    %v5614 = vpack.c.b16 %v4822, %v4820
    %v5615 = vpack.c.b16 %v4825, %v4823
    %v5616 = vpack.c.b16 %v4826, %v4824
    %v5617 = vpack.c.b16 %v4829, %v4827
    %v5618 = vpack.c.b16 %v4830, %v4828
    %v5619 = vpack.c.b16 %v4833, %v4831
    %v5620 = vpack.c.b16 %v4834, %v4832
    %v5621 = vpack.c.b16 %v4837, %v4835
    %v5622 = vpack.c.b16 %v4838, %v4836
    %v5623 = vpack.c.b16 %v4841, %v4839
    %v5624 = vpack.c.b16 %v4842, %v4840
    %v5625 = vpack.c.b16 %v4845, %v4843
    %v5626 = vpack.c.b16 %v4846, %v4844
    %v5627 = vpack.c.b16 %v4849, %v4847
    %v5628 = vpack.c.b16 %v4850, %v4848
    %v5629 = vpack.c.b16 %v4853, %v4851
    %v5630 = vpack.c.b16 %v4854, %v4852
    %v5631 = vpack.c.b16 %v4857, %v4855
    %v5632 = vpack.c.b16 %v4858, %v4856
    %v5633 = vpack.c.b16 %v4861, %v4859
    %v5634 = vpack.c.b16 %v4862, %v4860
    %v5635 = vpack.c.b16 %v4865, %v4863
    %v5636 = vpack.c.b16 %v4866, %v4864
    %v5637 = vpack.c.b16 %v4869, %v4867
    %v5638 = vpack.c.b16 %v4870, %v4868
    %v5639 = vpack.c.b16 %v4873, %v4871
    %v5640 = vpack.c.b16 %v4874, %v4872
    %v5641 = vpack.c.b16 %v4877, %v4875
    %v5642 = vpack.c.b16 %v4878, %v4876
    %v5643 = vpack.c.b16 %v4881, %v4879
    %v5644 = vpack.c.b16 %v4882, %v4880
    %v5645 = vpack.c.b16 %v4885, %v4883
    %v5646 = vpack.c.b16 %v4886, %v4884
    %v5647 = vpack.c.b16 %v4889, %v4887
    %v5648 = vpack.c.b16 %v4890, %v4888
    %v5649 = vpack.c.b16 %v4893, %v4891
    %v5650 = vpack.c.b16 %v4894, %v4892
    %v5651 = vpack.c.b16 %v4897, %v4895
    %v5652 = vpack.c.b16 %v4898, %v4896
    %v5653 = vpack.c.b16 %v4901, %v4899
    %v5654 = vpack.c.b16 %v4902, %v4900
    %v5655 = vpack.c.b16 %v4905, %v4903
    %v5656 = vpack.c.b16 %v4906, %v4904
    %v5657 = vpack.c.b16 %v4909, %v4907
    %v5658 = vpack.c.b16 %v4910, %v4908
    %v5659 = vpack.c.b16 %v4913, %v4911
    %v5660 = vpack.c.b16 %v4914, %v4912
    %v5661 = vpack.c.b16 %v4917, %v4915
    %v5662 = vpack.c.b16 %v4918, %v4916
    %v5663 = vpack.c.b16 %v4921, %v4919
    %v5664 = vpack.c.b16 %v4922, %v4920
    %v5665 = vpack.c.b16 %v4925, %v4923
    %v5666 = vpack.c.b16 %v4926, %v4924
    %v5667 = vpack.c.b16 %v4929, %v4927
    %v5668 = vpack.c.b16 %v4930, %v4928
    %v5669 = vpack.c.b16 %v4933, %v4931
    %v5670 = vpack.c.b16 %v4934, %v4932
    %v5671 = vpack.c.b16 %v4937, %v4935
    %v5672 = vpack.c.b16 %v4938, %v4936
    %v5673 = vpack.c.b16 %v4941, %v4939
    %v5674 = vpack.c.b16 %v4942, %v4940
    %v5675 = vpack.c.b16 %v4945, %v4943
    %v5676 = vpack.c.b16 %v4946, %v4944
    %v5677 = vpack.c.b16 %v4949, %v4947
    %v5678 = vpack.c.b16 %v4950, %v4948
    %v5679 = vpack.c.b16 %v4953, %v4951
    %v5680 = vpack.c.b16 %v4954, %v4952
    %v5681 = vpack.c.b16 %v4957, %v4955
    %v5682 = vpack.c.b16 %v4958, %v4956
    %v5683 = vpack.c.b16 %v4961, %v4959
    %v5684 = vpack.c.b16 %v4962, %v4960
    %v5685 = vpack.c.b16 %v4965, %v4963
    %v5686 = vpack.c.b16 %v4966, %v4964
    %v5687 = vpack.c.b16 %v4969, %v4967
    %v5688 = vpack.c.b16 %v4970, %v4968
    %v5689 = vpack.c.b16 %v4973, %v4971
    %v5690 = vpack.c.b16 %v4974, %v4972
    %v5691 = vpack.c.b16 %v4977, %v4975
    %v5692 = vpack.c.b16 %v4978, %v4976
    %v5693 = vpack.c.b16 %v4981, %v4979
    %v5694 = vpack.c.b16 %v4982, %v4980
    %v5695 = vpack.c.b16 %v4985, %v4983
    %v5696 = vpack.c.b16 %v4986, %v4984
    %v5697 = vpack.c.b16 %v4989, %v4987
    %v5698 = vpack.c.b16 %v4990, %v4988
    %v5699 = vpack.c.b16 %v4993, %v4991
    %v5700 = vpack.c.b16 %v4994, %v4992
    %v5701 = vpack.c.b16 %v4997, %v4995
    %v5702 = vpack.c.b16 %v4998, %v4996
    %v5703 = vpack.c.b16 %v5001, %v4999
    %v5704 = vpack.c.b16 %v5002, %v5000
    %v5705 = vpack.c.b16 %v5005, %v5003
    %v5706 = vpack.c.b16 %v5006, %v5004
    %v5707 = vpack.c.b16 %v5009, %v5007
    %v5708 = vpack.c.b16 %v5010, %v5008
    %v5709 = vpack.c.b16 %v5013, %v5011
    %v5710 = vpack.c.b16 %v5014, %v5012
    %v5711 = vpack.c.b16 %v5017, %v5015
    %v5712 = vpack.c.b16 %v5018, %v5016
    %v5713 = vpack.c.b16 %v5021, %v5019
    %v5714 = vpack.c.b16 %v5022, %v5020
    %v5715 = vpack.c.b16 %v5025, %v5023
    %v5716 = vpack.c.b16 %v5026, %v5024
    %v5717 = vpack.c.b16 %v5029, %v5027
    %v5718 = vpack.c.b16 %v5030, %v5028
    %v5719 = vpack.c.b16 %v5033, %v5031
    %v5720 = vpack.c.b16 %v5034, %v5032
    %v5721 = vpack.c.b16 %v5037, %v5035
    %v5722 = vpack.c.b16 %v5038, %v5036
    %v5723 = vpack.c.b16 %v5041, %v5039
    %v5724 = vpack.c.b16 %v5042, %v5040
    %v5725 = vpack.c.b16 %v5045, %v5043
    %v5726 = vpack.c.b16 %v5046, %v5044
    %v5727 = vpack.c.b16 %v5049, %v5047
    %v5728 = vpack.c.b16 %v5050, %v5048
    %v5729 = vpack.c.b16 %v5053, %v5051
    %v5730 = vpack.c.b16 %v5054, %v5052
    %v5731 = vpack.c.b16 %v5057, %v5055
    %v5732 = vpack.c.b16 %v5058, %v5056
    %v5733 = vpack.c.b16 %v5061, %v5059
    %v5734 = vpack.c.b16 %v5062, %v5060
    %v5735 = vpack.c.b16 %v5065, %v5063
    %v5736 = vpack.c.b16 %v5066, %v5064
    %v5737 = vpack.c.b16 %v5069, %v5067
    %v5738 = vpack.c.b16 %v5070, %v5068
    %v5739 = vpack.c.b16 %v5073, %v5071
    %v5740 = vpack.c.b16 %v5074, %v5072
    %v5741 = vpack.c.b16 %v5077, %v5075
    %v5742 = vpack.c.b16 %v5078, %v5076
    %v5743 = vpack.c.b16 %v5081, %v5079
    %v5744 = vpack.c.b16 %v5082, %v5080
    %v5745 = vpack.c.b16 %v5085, %v5083
    %v5746 = vpack.c.b16 %v5086, %v5084
    %v5747 = vpack.c.b16 %v5089, %v5087
    %v5748 = vpack.c.b16 %v5090, %v5088
    %v5749 = vpack.c.b16 %v5093, %v5091
    %v5750 = vpack.c.b16 %v5094, %v5092
    %v5751 = vpack.c.b16 %v5097, %v5095
    %v5752 = vpack.c.b16 %v5098, %v5096
    %v5753 = vpack.c.b16 %v5101, %v5099
    %v5754 = vpack.c.b16 %v5102, %v5100
    %v5755 = vpack.c.b16 %v5105, %v5103
    %v5756 = vpack.c.b16 %v5106, %v5104
    %v5757 = vpack.c.b16 %v5109, %v5107
    %v5758 = vpack.c.b16 %v5110, %v5108
    %v5759 = vpack.c.b16 %v5113, %v5111
    %v5760 = vpack.c.b16 %v5114, %v5112
    %v5761 = vpack.c.b16 %v5117, %v5115
    %v5762 = vpack.c.b16 %v5118, %v5116
    %v5763 = vpack.c.b16 %v5121, %v5119
    %v5764 = vpack.c.b16 %v5122, %v5120
    %v5765 = vpack.c.b16 %v5125, %v5123
    %v5766 = vpack.c.b16 %v5126, %v5124
    %v5767 = vpack.c.b16 %v5129, %v5127
    %v5768 = vpack.c.b16 %v5130, %v5128
    %v5769 = vpack.c.b16 %v5133, %v5131
    %v5770 = vpack.c.b16 %v5134, %v5132
    %v5771 = vpack.c.b16 %v5137, %v5135
    %v5772 = vpack.c.b16 %v5138, %v5136
    %v5773 = vpack.c.b16 %v5141, %v5139
    %v5774 = vpack.c.b16 %v5142, %v5140
    %v5775 = vpack.c.b16 %v5145, %v5143
    %v5776 = vpack.c.b16 %v5146, %v5144
    %v5777 = vpack.c.b16 %v5149, %v5147
    %v5778 = vpack.c.b16 %v5150, %v5148
    %v5779 = vpack.c.b16 %v5153, %v5151
    %v5780 = vpack.c.b16 %v5154, %v5152
    %v5781 = vpack.c.b16 %v5157, %v5155
    %v5782 = vpack.c.b16 %v5158, %v5156
    %v5783 = vpack.c.b16 %v5161, %v5159
    %v5784 = vpack.c.b16 %v5162, %v5160
    %v5785 = vpack.c.b16 %v5165, %v5163
    %v5786 = vpack.c.b16 %v5166, %v5164
    %v5787 = vpack.c.b16 %v5169, %v5167
    %v5788 = vpack.c.b16 %v5170, %v5168
    %v5789 = vpack.c.b16 %v5173, %v5171
    %v5790 = vpack.c.b16 %v5174, %v5172
    %v5791 = vpack.c.b16 %v5177, %v5175
    %v5792 = vpack.c.b16 %v5178, %v5176
    %v5793 = vpack.c.b16 %v5181, %v5179
    %v5794 = vpack.c.b16 %v5182, %v5180
    %v5795 = vpack.c.b16 %v5185, %v5183
    %v5796 = vpack.c.b16 %v5186, %v5184
    %v5797 = vpack.c.b16 %v5189, %v5187
    %v5798 = vpack.c.b16 %v5190, %v5188
    %v5799 = vpack.c.b16 %v5193, %v5191
    %v5800 = vpack.c.b16 %v5194, %v5192
    %v5801 = vpack.c.b16 %v5197, %v5195
    %v5802 = vpack.c.b16 %v5198, %v5196
    %v5803 = vpack.c.b16 %v5201, %v5199
    %v5804 = vpack.c.b16 %v5202, %v5200
    %v5805 = vpack.c.b16 %v5205, %v5203
    %v5806 = vpack.c.b16 %v5206, %v5204
    %v5807 = vpack.c.b16 %v5209, %v5207
    %v5808 = vpack.c.b16 %v5210, %v5208
    %v5809 = vpack.c.b16 %v5213, %v5211
    %v5810 = vpack.c.b16 %v5214, %v5212
    %v5811 = vpack.c.b16 %v5217, %v5215
    %v5812 = vpack.c.b16 %v5218, %v5216
    %v5813 = vpack.c.b16 %v5221, %v5219
    %v5814 = vpack.c.b16 %v5222, %v5220
    %v5815 = vpack.c.b16 %v5225, %v5223
    %v5816 = vpack.c.b16 %v5226, %v5224
    %v5817 = vpack.c.b16 %v5229, %v5227
    %v5818 = vpack.c.b16 %v5230, %v5228
    %v5819 = vpack.c.b16 %v5233, %v5231
    %v5820 = vpack.c.b16 %v5234, %v5232
    %v5821 = vpack.c.b16 %v5237, %v5235
    %v5822 = vpack.c.b16 %v5238, %v5236
    %v5823 = vpack.c.b16 %v5241, %v5239
    %v5824 = vpack.c.b16 %v5242, %v5240
    %v5825 = vpack.c.b16 %v5245, %v5243
    %v5826 = vpack.c.b16 %v5246, %v5244
    %v5827 = vpack.c.b16 %v5249, %v5247
    %v5828 = vpack.c.b16 %v5250, %v5248
    %v5829 = vpack.c.b16 %v5253, %v5251
    %v5830 = vpack.c.b16 %v5254, %v5252
    %v5831 = vpack.c.b16 %v5257, %v5255
    %v5832 = vpack.c.b16 %v5258, %v5256
    %v5833 = vpack.c.b16 %v5261, %v5259
    %v5834 = vpack.c.b16 %v5262, %v5260
    %v5835 = vpack.c.b16 %v5265, %v5263
    %v5836 = vpack.c.b16 %v5266, %v5264
    %v5837 = vpack.c.b16 %v5269, %v5267
    %v5838 = vpack.c.b16 %v5270, %v5268
    %v5839 = vpack.c.b16 %v5273, %v5271
    %v5840 = vpack.c.b16 %v5274, %v5272
    %v5841 = vpack.c.b16 %v5277, %v5275
    %v5842 = vpack.c.b16 %v5278, %v5276
    %v5843 = vpack.c.b16 %v5281, %v5279
    %v5844 = vpack.c.b16 %v5282, %v5280
    %v5845 = vpack.c.b16 %v5285, %v5283
    %v5846 = vpack.c.b16 %v5286, %v5284
    %v5847 = vpack.c.b16 %v5289, %v5287
    %v5848 = vpack.c.b16 %v5290, %v5288
    %v5849 = vpack.c.b16 %v5293, %v5291
    %v5850 = vpack.c.b16 %v5294, %v5292
    %v5851 = vpack.c.b16 %v5297, %v5295
    %v5852 = vpack.c.b16 %v5298, %v5296
    %v5853 = vpack.c.b16 %v5301, %v5299
    %v5854 = vpack.c.b16 %v5302, %v5300
    %v5855 = vpack.c.b16 %v5305, %v5303
    %v5856 = vpack.c.b16 %v5306, %v5304
    %v5857 = vpack.c.b16 %v5309, %v5307
    %v5858 = vpack.c.b16 %v5310, %v5308
    %v5859 = vpack.c.b16 %v5313, %v5311
    %v5860 = vpack.c.b16 %v5314, %v5312
    %v5861 = vpack.c.b16 %v5317, %v5315
    %v5862 = vpack.c.b16 %v5318, %v5316
    %v5863 = vpack.c.b16 %v5321, %v5319
    %v5864 = vpack.c.b16 %v5322, %v5320
    %v5865 = vpack.c.b16 %v5325, %v5323
    %v5866 = vpack.c.b16 %v5326, %v5324
    %v5867 = vpack.c.b16 %v5329, %v5327
    %v5868 = vpack.c.b16 %v5330, %v5328
    %v5869 = vpack.c.b16 %v5333, %v5331
    %v5870 = vpack.c.b16 %v5334, %v5332
    %v5871 = vpack.c.b16 %v5337, %v5335
    %v5872 = vpack.c.b16 %v5338, %v5336
    %v5873 = vpack.c.b16 %v5341, %v5339
    %v5874 = vpack.c.b16 %v5342, %v5340
    %v5875 = vpack.c.b16 %v5345, %v5343
    %v5876 = vpack.c.b16 %v5346, %v5344
    %v5877 = vpack.c.b16 %v5349, %v5347
    %v5878 = vpack.c.b16 %v5350, %v5348
    %v5879 = vpack.c.b16 %v5353, %v5351
    %v5880 = vpack.c.b16 %v5354, %v5352
    %v5881 = vpack.c.b16 %v5357, %v5355
    %v5882 = vpack.c.b16 %v5358, %v5356
    %v5883 = vpack.c.b16 %v5361, %v5359
    %v5884 = vpack.c.b16 %v5362, %v5360
    %v5885 = vpack.c.b16 %v5365, %v5363
    %v5886 = vpack.c.b16 %v5366, %v5364
    %v5887 = vpack.c.b16 %v5369, %v5367
    %v5888 = vpack.c.b16 %v5370, %v5368
    %v5889 = vpack.c.b16 %v5373, %v5371
    %v5890 = vpack.c.b16 %v5374, %v5372
    %v5891 = vpack.c.b16 %v5377, %v5375
    %v5892 = vpack.c.b16 %v5378, %v5376
    %v5893 = vpack.c.b16 %v5381, %v5379
    %v5894 = vpack.c.b16 %v5382, %v5380
    %6407 = vmatprep.subr.bf16.mxu0 %v5384
    %6408 = vmatpush1.bf16.msra.mxu0 %v5383
    %6409 = vmatprep.subr.bf16.mxu0 %v5386
    %6410 = vmatpush1.bf16.msra.mxu0 %v5385
    %6411 = vmatprep.subr.bf16.mxu0 %v5388
    %6412 = vmatpush1.bf16.msra.mxu0 %v5387
    %6413 = vmatprep.subr.bf16.mxu0 %v5390
    %6414 = vmatpush1.bf16.msra.mxu0 %v5389
    %6415 = vmatprep.subr.bf16.mxu0 %v5392
    %6416 = vmatpush1.bf16.msra.mxu0 %v5391
    %6417 = vmatprep.subr.bf16.mxu0 %v5394
    %6418 = vmatpush1.bf16.msra.mxu0 %v5393
    %6419 = vmatprep.subr.bf16.mxu0 %v5396
    %6420 = vmatpush1.bf16.msra.mxu0 %v5395
    %6421 = vmatprep.subr.bf16.mxu0 %v5398
    %6422 = vmatpush1.bf16.msra.mxu0 %v5397
    %6423 = vmatprep.subr.bf16.mxu0 %v5400
    %6424 = vmatpush1.bf16.msra.mxu0 %v5399
    %6425 = vmatprep.subr.bf16.mxu0 %v5402
    %6426 = vmatpush1.bf16.msra.mxu0 %v5401
    %6427 = vmatprep.subr.bf16.mxu0 %v5404
    %6428 = vmatpush1.bf16.msra.mxu0 %v5403
    %6429 = vmatprep.subr.bf16.mxu0 %v5406
    %6430 = vmatpush1.bf16.msra.mxu0 %v5405
    %6431 = vmatprep.subr.bf16.mxu0 %v5408
    %6432 = vmatpush1.bf16.msra.mxu0 %v5407
    %6433 = vmatprep.subr.bf16.mxu0 %v5410
    %6434 = vmatpush1.bf16.msra.mxu0 %v5409
    %6435 = vmatprep.subr.bf16.mxu0 %v5412
    %6436 = vmatpush1.bf16.msra.mxu0 %v5411
    %6437 = vmatprep.subr.bf16.mxu0 %v5414
    %6438 = vmatpush1.bf16.msra.mxu0 %v5413
    %6439 = vmatprep.mubr.bf16.mxu0 %v3302
    %6440 = vmatmul.mubr.bf16.gmra.mrb[0].mxu0 %v3301
    %v6441 = vpop.f32.mrb[0].mxu0
    %v6442 = vadd.f32 0.0, %v6441
    %v6443 = vpop.f32.mrb[0].mxu0
    %v6444 = vadd.f32 0.0, %v6443
    %v6445 = vpop.f32.mrb[0].mxu0
    %v6446 = vpop.f32.mrb[0].mxu0
    %6447 = vdwg.mxu0
    %6448 = vmatprep.subr.bf16.mxu0 %v5416
    %6449 = vmatpush1.bf16.msra.mxu0 %v5415
    %6450 = vmatprep.subr.bf16.mxu0 %v5418
    %6451 = vmatpush1.bf16.msra.mxu0 %v5417
    %6452 = vmatprep.subr.bf16.mxu0 %v5420
    %6453 = vmatpush1.bf16.msra.mxu0 %v5419
    %6454 = vmatprep.subr.bf16.mxu0 %v5422
    %6455 = vmatpush1.bf16.msra.mxu0 %v5421
    %6456 = vmatprep.subr.bf16.mxu0 %v5424
    %6457 = vmatpush1.bf16.msra.mxu0 %v5423
    %6458 = vmatprep.subr.bf16.mxu0 %v5426
    %6459 = vmatpush1.bf16.msra.mxu0 %v5425
    %6460 = vmatprep.subr.bf16.mxu0 %v5428
    %6461 = vmatpush1.bf16.msra.mxu0 %v5427
    %6462 = vmatprep.subr.bf16.mxu0 %v5430
    %6463 = vmatpush1.bf16.msra.mxu0 %v5429
    %6464 = vmatprep.subr.bf16.mxu0 %v5432
    %6465 = vmatpush1.bf16.msra.mxu0 %v5431
    %6466 = vmatprep.subr.bf16.mxu0 %v5434
    %6467 = vmatpush1.bf16.msra.mxu0 %v5433
    %6468 = vmatprep.subr.bf16.mxu0 %v5436
    %6469 = vmatpush1.bf16.msra.mxu0 %v5435
    %6470 = vmatprep.subr.bf16.mxu0 %v5438
    %6471 = vmatpush1.bf16.msra.mxu0 %v5437
    %6472 = vmatprep.subr.bf16.mxu0 %v5440
    %6473 = vmatpush1.bf16.msra.mxu0 %v5439
    %6474 = vmatprep.subr.bf16.mxu0 %v5442
    %6475 = vmatpush1.bf16.msra.mxu0 %v5441
    %6476 = vmatprep.subr.bf16.mxu0 %v5444
    %6477 = vmatpush1.bf16.msra.mxu0 %v5443
    %6478 = vmatprep.subr.bf16.mxu0 %v5446
    %6479 = vmatpush1.bf16.msra.mxu0 %v5445
    %6480 = vmatprep.mubr.bf16.mxu0 %v3304
    %6481 = vmatmul.mubr.bf16.gmra.mrb[0].mxu0 %v3303
    %v6482 = vpop.f32.mrb[0].mxu0
    %v6483 = vadd.f32 %v6442, %v6482
    %v6484 = vpop.f32.mrb[0].mxu0
    %v6485 = vadd.f32 %v6444, %v6484
    %v6486 = vpop.f32.mrb[0].mxu0
    %v6487 = vpop.f32.mrb[0].mxu0
    %6488 = vdwg.mxu0
    %6489 = vmatprep.subr.bf16.mxu0 %v5448
    %6490 = vmatpush1.bf16.msra.mxu0 %v5447
    %6491 = vmatprep.subr.bf16.mxu0 %v5450
    %6492 = vmatpush1.bf16.msra.mxu0 %v5449
    %6493 = vmatprep.subr.bf16.mxu0 %v5452
    %6494 = vmatpush1.bf16.msra.mxu0 %v5451
    %6495 = vmatprep.subr.bf16.mxu0 %v5454
    %6496 = vmatpush1.bf16.msra.mxu0 %v5453
    %6497 = vmatprep.subr.bf16.mxu0 %v5456
    %6498 = vmatpush1.bf16.msra.mxu0 %v5455
    %6499 = vmatprep.subr.bf16.mxu0 %v5458
    %6500 = vmatpush1.bf16.msra.mxu0 %v5457
    %6501 = vmatprep.subr.bf16.mxu0 %v5460
    %6502 = vmatpush1.bf16.msra.mxu0 %v5459
    %6503 = vmatprep.subr.bf16.mxu0 %v5462
    %6504 = vmatpush1.bf16.msra.mxu0 %v5461
    %6505 = vmatprep.subr.bf16.mxu0 %v5464
    %6506 = vmatpush1.bf16.msra.mxu0 %v5463
    %6507 = vmatprep.subr.bf16.mxu0 %v5466
    %6508 = vmatpush1.bf16.msra.mxu0 %v5465
    %6509 = vmatprep.subr.bf16.mxu0 %v5468
    %6510 = vmatpush1.bf16.msra.mxu0 %v5467
    %6511 = vmatprep.subr.bf16.mxu0 %v5470
    %6512 = vmatpush1.bf16.msra.mxu0 %v5469
    %6513 = vmatprep.subr.bf16.mxu0 %v5472
    %6514 = vmatpush1.bf16.msra.mxu0 %v5471
    %6515 = vmatprep.subr.bf16.mxu0 %v5474
    %6516 = vmatpush1.bf16.msra.mxu0 %v5473
    %6517 = vmatprep.subr.bf16.mxu0 %v5476
    %6518 = vmatpush1.bf16.msra.mxu0 %v5475
    %6519 = vmatprep.subr.bf16.mxu0 %v5478
    %6520 = vmatpush1.bf16.msra.mxu0 %v5477
    %6521 = vmatprep.mubr.bf16.mxu0 %v3306
    %6522 = vmatmul.mubr.bf16.gmra.mrb[0].mxu0 %v3305
    %v6523 = vpop.f32.mrb[0].mxu0
    %v6524 = vadd.f32 %v6483, %v6523
    %v6525 = vpop.f32.mrb[0].mxu0
    %v6526 = vadd.f32 %v6485, %v6525
    %v6527 = vpop.f32.mrb[0].mxu0
    %v6528 = vpop.f32.mrb[0].mxu0
    %6529 = vdwg.mxu0
    %6530 = vmatprep.subr.bf16.mxu0 %v5480
    %6531 = vmatpush1.bf16.msra.mxu0 %v5479
    %6532 = vmatprep.subr.bf16.mxu0 %v5482
    %6533 = vmatpush1.bf16.msra.mxu0 %v5481
    %6534 = vmatprep.subr.bf16.mxu0 %v5484
    %6535 = vmatpush1.bf16.msra.mxu0 %v5483
    %6536 = vmatprep.subr.bf16.mxu0 %v5486
    %6537 = vmatpush1.bf16.msra.mxu0 %v5485
    %6538 = vmatprep.subr.bf16.mxu0 %v5488
    %6539 = vmatpush1.bf16.msra.mxu0 %v5487
    %6540 = vmatprep.subr.bf16.mxu0 %v5490
    %6541 = vmatpush1.bf16.msra.mxu0 %v5489
    %6542 = vmatprep.subr.bf16.mxu0 %v5492
    %6543 = vmatpush1.bf16.msra.mxu0 %v5491
    %6544 = vmatprep.subr.bf16.mxu0 %v5494
    %6545 = vmatpush1.bf16.msra.mxu0 %v5493
    %6546 = vmatprep.subr.bf16.mxu0 %v5496
    %6547 = vmatpush1.bf16.msra.mxu0 %v5495
    %6548 = vmatprep.subr.bf16.mxu0 %v5498
    %6549 = vmatpush1.bf16.msra.mxu0 %v5497
    %6550 = vmatprep.subr.bf16.mxu0 %v5500
    %6551 = vmatpush1.bf16.msra.mxu0 %v5499
    %6552 = vmatprep.subr.bf16.mxu0 %v5502
    %6553 = vmatpush1.bf16.msra.mxu0 %v5501
    %6554 = vmatprep.subr.bf16.mxu0 %v5504
    %6555 = vmatpush1.bf16.msra.mxu0 %v5503
    %6556 = vmatprep.subr.bf16.mxu0 %v5506
    %6557 = vmatpush1.bf16.msra.mxu0 %v5505
    %6558 = vmatprep.subr.bf16.mxu0 %v5508
    %6559 = vmatpush1.bf16.msra.mxu0 %v5507
    %6560 = vmatprep.subr.bf16.mxu0 %v5510
    %6561 = vmatpush1.bf16.msra.mxu0 %v5509
    %6562 = vmatprep.mubr.bf16.mxu0 %v3308
    %6563 = vmatmul.mubr.bf16.gmra.mrb[0].mxu0 %v3307
    %v6564 = vpop.f32.mrb[0].mxu0
    %v6565 = vadd.f32 %v6524, %v6564
    %v6566 = vpop.f32.mrb[0].mxu0
    %v6567 = vadd.f32 %v6526, %v6566
    %v6568 = vpop.f32.mrb[0].mxu0
    %v6569 = vpop.f32.mrb[0].mxu0
    %6570 = vdwg.mxu0
    %6571 = vmatprep.subr.bf16.mxu0 %v5512
    %6572 = vmatpush1.bf16.msra.mxu0 %v5511
    %6573 = vmatprep.subr.bf16.mxu0 %v5514
    %6574 = vmatpush1.bf16.msra.mxu0 %v5513
    %6575 = vmatprep.subr.bf16.mxu0 %v5516
    %6576 = vmatpush1.bf16.msra.mxu0 %v5515
    %6577 = vmatprep.subr.bf16.mxu0 %v5518
    %6578 = vmatpush1.bf16.msra.mxu0 %v5517
    %6579 = vmatprep.subr.bf16.mxu0 %v5520
    %6580 = vmatpush1.bf16.msra.mxu0 %v5519
    %6581 = vmatprep.subr.bf16.mxu0 %v5522
    %6582 = vmatpush1.bf16.msra.mxu0 %v5521
    %6583 = vmatprep.subr.bf16.mxu0 %v5524
    %6584 = vmatpush1.bf16.msra.mxu0 %v5523
    %6585 = vmatprep.subr.bf16.mxu0 %v5526
    %6586 = vmatpush1.bf16.msra.mxu0 %v5525
    %6587 = vmatprep.subr.bf16.mxu0 %v5528
    %6588 = vmatpush1.bf16.msra.mxu0 %v5527
    %6589 = vmatprep.subr.bf16.mxu0 %v5530
    %6590 = vmatpush1.bf16.msra.mxu0 %v5529
    %6591 = vmatprep.subr.bf16.mxu0 %v5532
    %6592 = vmatpush1.bf16.msra.mxu0 %v5531
    %6593 = vmatprep.subr.bf16.mxu0 %v5534
    %6594 = vmatpush1.bf16.msra.mxu0 %v5533
    %6595 = vmatprep.subr.bf16.mxu0 %v5536
    %6596 = vmatpush1.bf16.msra.mxu0 %v5535
    %6597 = vmatprep.subr.bf16.mxu0 %v5538
    %6598 = vmatpush1.bf16.msra.mxu0 %v5537
    %6599 = vmatprep.subr.bf16.mxu0 %v5540
    %6600 = vmatpush1.bf16.msra.mxu0 %v5539
    %6601 = vmatprep.subr.bf16.mxu0 %v5542
    %6602 = vmatpush1.bf16.msra.mxu0 %v5541
    %6603 = vmatprep.mubr.bf16.mxu0 %v3310
    %6604 = vmatmul.mubr.bf16.gmra.mrb[0].mxu0 %v3309
    %v6605 = vpop.f32.mrb[0].mxu0
    %v6606 = vadd.f32 %v6565, %v6605
    %v6607 = vpop.f32.mrb[0].mxu0
    %v6608 = vadd.f32 %v6567, %v6607
    %v6609 = vpop.f32.mrb[0].mxu0
    %v6610 = vpop.f32.mrb[0].mxu0
    %6611 = vdwg.mxu0
    %6612 = vmatprep.subr.bf16.mxu0 %v5544
    %6613 = vmatpush1.bf16.msra.mxu0 %v5543
    %6614 = vmatprep.subr.bf16.mxu0 %v5546
    %6615 = vmatpush1.bf16.msra.mxu0 %v5545
    %6616 = vmatprep.subr.bf16.mxu0 %v5548
    %6617 = vmatpush1.bf16.msra.mxu0 %v5547
    %6618 = vmatprep.subr.bf16.mxu0 %v5550
    %6619 = vmatpush1.bf16.msra.mxu0 %v5549
    %6620 = vmatprep.subr.bf16.mxu0 %v5552
    %6621 = vmatpush1.bf16.msra.mxu0 %v5551
    %6622 = vmatprep.subr.bf16.mxu0 %v5554
    %6623 = vmatpush1.bf16.msra.mxu0 %v5553
    %6624 = vmatprep.subr.bf16.mxu0 %v5556
    %6625 = vmatpush1.bf16.msra.mxu0 %v5555
    %6626 = vmatprep.subr.bf16.mxu0 %v5558
    %6627 = vmatpush1.bf16.msra.mxu0 %v5557
    %6628 = vmatprep.subr.bf16.mxu0 %v5560
    %6629 = vmatpush1.bf16.msra.mxu0 %v5559
    %6630 = vmatprep.subr.bf16.mxu0 %v5562
    %6631 = vmatpush1.bf16.msra.mxu0 %v5561
    %6632 = vmatprep.subr.bf16.mxu0 %v5564
    %6633 = vmatpush1.bf16.msra.mxu0 %v5563
    %6634 = vmatprep.subr.bf16.mxu0 %v5566
    %6635 = vmatpush1.bf16.msra.mxu0 %v5565
    %6636 = vmatprep.subr.bf16.mxu0 %v5568
    %6637 = vmatpush1.bf16.msra.mxu0 %v5567
    %6638 = vmatprep.subr.bf16.mxu0 %v5570
    %6639 = vmatpush1.bf16.msra.mxu0 %v5569
    %6640 = vmatprep.subr.bf16.mxu0 %v5572
    %6641 = vmatpush1.bf16.msra.mxu0 %v5571
    %6642 = vmatprep.subr.bf16.mxu0 %v5574
    %6643 = vmatpush1.bf16.msra.mxu0 %v5573
    %6644 = vmatprep.mubr.bf16.mxu0 %v3312
    %6645 = vmatmul.mubr.bf16.gmra.mrb[0].mxu0 %v3311
    %v6646 = vpop.f32.mrb[0].mxu0
    %v6647 = vadd.f32 %v6606, %v6646
    %v6648 = vpop.f32.mrb[0].mxu0
    %v6649 = vadd.f32 %v6608, %v6648
    %v6650 = vpop.f32.mrb[0].mxu0
    %v6651 = vpop.f32.mrb[0].mxu0
    %6652 = vdwg.mxu0
    %6653 = vmatprep.subr.bf16.mxu0 %v5576
    %6654 = vmatpush1.bf16.msra.mxu0 %v5575
    %6655 = vmatprep.subr.bf16.mxu0 %v5578
    %6656 = vmatpush1.bf16.msra.mxu0 %v5577
    %6657 = vmatprep.subr.bf16.mxu0 %v5580
    %6658 = vmatpush1.bf16.msra.mxu0 %v5579
    %6659 = vmatprep.subr.bf16.mxu0 %v5582
    %6660 = vmatpush1.bf16.msra.mxu0 %v5581
    %6661 = vmatprep.subr.bf16.mxu0 %v5584
    %6662 = vmatpush1.bf16.msra.mxu0 %v5583
    %6663 = vmatprep.subr.bf16.mxu0 %v5586
    %6664 = vmatpush1.bf16.msra.mxu0 %v5585
    %6665 = vmatprep.subr.bf16.mxu0 %v5588
    %6666 = vmatpush1.bf16.msra.mxu0 %v5587
    %6667 = vmatprep.subr.bf16.mxu0 %v5590
    %6668 = vmatpush1.bf16.msra.mxu0 %v5589
    %6669 = vmatprep.subr.bf16.mxu0 %v5592
    %6670 = vmatpush1.bf16.msra.mxu0 %v5591
    %6671 = vmatprep.subr.bf16.mxu0 %v5594
    %6672 = vmatpush1.bf16.msra.mxu0 %v5593
    %6673 = vmatprep.subr.bf16.mxu0 %v5596
    %6674 = vmatpush1.bf16.msra.mxu0 %v5595
    %6675 = vmatprep.subr.bf16.mxu0 %v5598
    %6676 = vmatpush1.bf16.msra.mxu0 %v5597
    %6677 = vmatprep.subr.bf16.mxu0 %v5600
    %6678 = vmatpush1.bf16.msra.mxu0 %v5599
    %6679 = vmatprep.subr.bf16.mxu0 %v5602
    %6680 = vmatpush1.bf16.msra.mxu0 %v5601
    %6681 = vmatprep.subr.bf16.mxu0 %v5604
    %6682 = vmatpush1.bf16.msra.mxu0 %v5603
    %6683 = vmatprep.subr.bf16.mxu0 %v5606
    %6684 = vmatpush1.bf16.msra.mxu0 %v5605
    %6685 = vmatprep.mubr.bf16.mxu0 %v3314
    %6686 = vmatmul.mubr.bf16.gmra.mrb[0].mxu0 %v3313
    %v6687 = vpop.f32.mrb[0].mxu0
    %v6688 = vadd.f32 %v6647, %v6687
    %v6689 = vpop.f32.mrb[0].mxu0
    %v6690 = vadd.f32 %v6649, %v6689
    %v6691 = vpop.f32.mrb[0].mxu0
    %v6692 = vpop.f32.mrb[0].mxu0
    %6693 = vdwg.mxu0
    %6694 = vmatprep.subr.bf16.mxu0 %v5608
    %6695 = vmatpush1.bf16.msra.mxu0 %v5607
    %6696 = vmatprep.subr.bf16.mxu0 %v5610
    %6697 = vmatpush1.bf16.msra.mxu0 %v5609
    %6698 = vmatprep.subr.bf16.mxu0 %v5612
    %6699 = vmatpush1.bf16.msra.mxu0 %v5611
    %6700 = vmatprep.subr.bf16.mxu0 %v5614
    %6701 = vmatpush1.bf16.msra.mxu0 %v5613
    %6702 = vmatprep.subr.bf16.mxu0 %v5616
    %6703 = vmatpush1.bf16.msra.mxu0 %v5615
    %6704 = vmatprep.subr.bf16.mxu0 %v5618
    %6705 = vmatpush1.bf16.msra.mxu0 %v5617
    %6706 = vmatprep.subr.bf16.mxu0 %v5620
    %6707 = vmatpush1.bf16.msra.mxu0 %v5619
    %6708 = vmatprep.subr.bf16.mxu0 %v5622
    %6709 = vmatpush1.bf16.msra.mxu0 %v5621
    %6710 = vmatprep.subr.bf16.mxu0 %v5624
    %6711 = vmatpush1.bf16.msra.mxu0 %v5623
    %6712 = vmatprep.subr.bf16.mxu0 %v5626
    %6713 = vmatpush1.bf16.msra.mxu0 %v5625
    %6714 = vmatprep.subr.bf16.mxu0 %v5628
    %6715 = vmatpush1.bf16.msra.mxu0 %v5627
    %6716 = vmatprep.subr.bf16.mxu0 %v5630
    %6717 = vmatpush1.bf16.msra.mxu0 %v5629
    %6718 = vmatprep.subr.bf16.mxu0 %v5632
    %6719 = vmatpush1.bf16.msra.mxu0 %v5631
    %6720 = vmatprep.subr.bf16.mxu0 %v5634
    %6721 = vmatpush1.bf16.msra.mxu0 %v5633
    %6722 = vmatprep.subr.bf16.mxu0 %v5636
    %6723 = vmatpush1.bf16.msra.mxu0 %v5635
    %6724 = vmatprep.subr.bf16.mxu0 %v5638
    %6725 = vmatpush1.bf16.msra.mxu0 %v5637
    %6726 = vmatprep.mubr.bf16.mxu0 %v3316
    %6727 = vmatmul.mubr.bf16.gmra.mrb[0].mxu0 %v3315
    %v6728 = vpop.f32.mrb[0].mxu0
    %v6729 = vadd.f32 %v6688, %v6728
    %v6730 = vpop.f32.mrb[0].mxu0
    %v6731 = vadd.f32 %v6690, %v6730
    %v6732 = vpop.f32.mrb[0].mxu0
    %v6733 = vpop.f32.mrb[0].mxu0
    %6734 = vdwg.mxu0
    %6735 = vmatprep.subr.bf16.mxu0 %v5640
    %6736 = vmatpush1.bf16.msra.mxu0 %v5639
    %6737 = vmatprep.subr.bf16.mxu0 %v5642
    %6738 = vmatpush1.bf16.msra.mxu0 %v5641
    %6739 = vmatprep.subr.bf16.mxu0 %v5644
    %6740 = vmatpush1.bf16.msra.mxu0 %v5643
    %6741 = vmatprep.subr.bf16.mxu0 %v5646
    %6742 = vmatpush1.bf16.msra.mxu0 %v5645
    %6743 = vmatprep.subr.bf16.mxu0 %v5648
    %6744 = vmatpush1.bf16.msra.mxu0 %v5647
    %6745 = vmatprep.subr.bf16.mxu0 %v5650
    %6746 = vmatpush1.bf16.msra.mxu0 %v5649
    %6747 = vmatprep.subr.bf16.mxu0 %v5652
    %6748 = vmatpush1.bf16.msra.mxu0 %v5651
    %6749 = vmatprep.subr.bf16.mxu0 %v5654
    %6750 = vmatpush1.bf16.msra.mxu0 %v5653
    %6751 = vmatprep.subr.bf16.mxu0 %v5656
    %6752 = vmatpush1.bf16.msra.mxu0 %v5655
    %6753 = vmatprep.subr.bf16.mxu0 %v5658
    %6754 = vmatpush1.bf16.msra.mxu0 %v5657
    %6755 = vmatprep.subr.bf16.mxu0 %v5660
    %6756 = vmatpush1.bf16.msra.mxu0 %v5659
    %6757 = vmatprep.subr.bf16.mxu0 %v5662
    %6758 = vmatpush1.bf16.msra.mxu0 %v5661
    %6759 = vmatprep.subr.bf16.mxu0 %v5664
    %6760 = vmatpush1.bf16.msra.mxu0 %v5663
    %6761 = vmatprep.subr.bf16.mxu0 %v5666
    %6762 = vmatpush1.bf16.msra.mxu0 %v5665
    %6763 = vmatprep.subr.bf16.mxu0 %v5668
    %6764 = vmatpush1.bf16.msra.mxu0 %v5667
    %6765 = vmatprep.subr.bf16.mxu0 %v5670
    %6766 = vmatpush1.bf16.msra.mxu0 %v5669
    %6767 = vmatprep.mubr.bf16.mxu0 %v3318
    %6768 = vmatmul.mubr.bf16.gmra.mrb[0].mxu0 %v3317
    %v6769 = vpop.f32.mrb[0].mxu0
    %v6770 = vadd.f32 %v6729, %v6769
    %v6771 = vpop.f32.mrb[0].mxu0
    %v6772 = vadd.f32 %v6731, %v6771
    %v6773 = vpop.f32.mrb[0].mxu0
    %v6774 = vpop.f32.mrb[0].mxu0
    %6775 = vdwg.mxu0
    %6776 = vmatprep.subr.bf16.mxu0 %v5672
    %6777 = vmatpush1.bf16.msra.mxu0 %v5671
    %6778 = vmatprep.subr.bf16.mxu0 %v5674
    %6779 = vmatpush1.bf16.msra.mxu0 %v5673
    %6780 = vmatprep.subr.bf16.mxu0 %v5676
    %6781 = vmatpush1.bf16.msra.mxu0 %v5675
    %6782 = vmatprep.subr.bf16.mxu0 %v5678
    %6783 = vmatpush1.bf16.msra.mxu0 %v5677
    %6784 = vmatprep.subr.bf16.mxu0 %v5680
    %6785 = vmatpush1.bf16.msra.mxu0 %v5679
    %6786 = vmatprep.subr.bf16.mxu0 %v5682
    %6787 = vmatpush1.bf16.msra.mxu0 %v5681
    %6788 = vmatprep.subr.bf16.mxu0 %v5684
    %6789 = vmatpush1.bf16.msra.mxu0 %v5683
    %6790 = vmatprep.subr.bf16.mxu0 %v5686
    %6791 = vmatpush1.bf16.msra.mxu0 %v5685
    %6792 = vmatprep.subr.bf16.mxu0 %v5688
    %6793 = vmatpush1.bf16.msra.mxu0 %v5687
    %6794 = vmatprep.subr.bf16.mxu0 %v5690
    %6795 = vmatpush1.bf16.msra.mxu0 %v5689
    %6796 = vmatprep.subr.bf16.mxu0 %v5692
    %6797 = vmatpush1.bf16.msra.mxu0 %v5691
    %6798 = vmatprep.subr.bf16.mxu0 %v5694
    %6799 = vmatpush1.bf16.msra.mxu0 %v5693
    %6800 = vmatprep.subr.bf16.mxu0 %v5696
    %6801 = vmatpush1.bf16.msra.mxu0 %v5695
    %6802 = vmatprep.subr.bf16.mxu0 %v5698
    %6803 = vmatpush1.bf16.msra.mxu0 %v5697
    %6804 = vmatprep.subr.bf16.mxu0 %v5700
    %6805 = vmatpush1.bf16.msra.mxu0 %v5699
    %6806 = vmatprep.subr.bf16.mxu0 %v5702
    %6807 = vmatpush1.bf16.msra.mxu0 %v5701
    %6808 = vmatprep.mubr.bf16.mxu0 %v3320
    %6809 = vmatmul.mubr.bf16.gmra.mrb[0].mxu0 %v3319
    %v6810 = vpop.f32.mrb[0].mxu0
    %v6811 = vadd.f32 %v6770, %v6810
    %v6812 = vpop.f32.mrb[0].mxu0
    %v6813 = vadd.f32 %v6772, %v6812
    %v6814 = vpop.f32.mrb[0].mxu0
    %v6815 = vpop.f32.mrb[0].mxu0
    %6816 = vdwg.mxu0
    %6817 = vmatprep.subr.bf16.mxu0 %v5704
    %6818 = vmatpush1.bf16.msra.mxu0 %v5703
    %6819 = vmatprep.subr.bf16.mxu0 %v5706
    %6820 = vmatpush1.bf16.msra.mxu0 %v5705
    %6821 = vmatprep.subr.bf16.mxu0 %v5708
    %6822 = vmatpush1.bf16.msra.mxu0 %v5707
    %6823 = vmatprep.subr.bf16.mxu0 %v5710
    %6824 = vmatpush1.bf16.msra.mxu0 %v5709
    %6825 = vmatprep.subr.bf16.mxu0 %v5712
    %6826 = vmatpush1.bf16.msra.mxu0 %v5711
    %6827 = vmatprep.subr.bf16.mxu0 %v5714
    %6828 = vmatpush1.bf16.msra.mxu0 %v5713
    %6829 = vmatprep.subr.bf16.mxu0 %v5716
    %6830 = vmatpush1.bf16.msra.mxu0 %v5715
    %6831 = vmatprep.subr.bf16.mxu0 %v5718
    %6832 = vmatpush1.bf16.msra.mxu0 %v5717
    %6833 = vmatprep.subr.bf16.mxu0 %v5720
    %6834 = vmatpush1.bf16.msra.mxu0 %v5719
    %6835 = vmatprep.subr.bf16.mxu0 %v5722
    %6836 = vmatpush1.bf16.msra.mxu0 %v5721
    %6837 = vmatprep.subr.bf16.mxu0 %v5724
    %6838 = vmatpush1.bf16.msra.mxu0 %v5723
    %6839 = vmatprep.subr.bf16.mxu0 %v5726
    %6840 = vmatpush1.bf16.msra.mxu0 %v5725
    %6841 = vmatprep.subr.bf16.mxu0 %v5728
    %6842 = vmatpush1.bf16.msra.mxu0 %v5727
    %6843 = vmatprep.subr.bf16.mxu0 %v5730
    %6844 = vmatpush1.bf16.msra.mxu0 %v5729
    %6845 = vmatprep.subr.bf16.mxu0 %v5732
    %6846 = vmatpush1.bf16.msra.mxu0 %v5731
    %6847 = vmatprep.subr.bf16.mxu0 %v5734
    %6848 = vmatpush1.bf16.msra.mxu0 %v5733
    %6849 = vmatprep.mubr.bf16.mxu0 %v3322
    %6850 = vmatmul.mubr.bf16.gmra.mrb[0].mxu0 %v3321
    %v6851 = vpop.f32.mrb[0].mxu0
    %v6852 = vadd.f32 %v6811, %v6851
    %v6853 = vpop.f32.mrb[0].mxu0
    %v6854 = vadd.f32 %v6813, %v6853
    %v6855 = vpop.f32.mrb[0].mxu0
    %v6856 = vpop.f32.mrb[0].mxu0
    %6857 = vdwg.mxu0
    %6858 = vmatprep.subr.bf16.mxu0 %v5736
    %6859 = vmatpush1.bf16.msra.mxu0 %v5735
    %6860 = vmatprep.subr.bf16.mxu0 %v5738
    %6861 = vmatpush1.bf16.msra.mxu0 %v5737
    %6862 = vmatprep.subr.bf16.mxu0 %v5740
    %6863 = vmatpush1.bf16.msra.mxu0 %v5739
    %6864 = vmatprep.subr.bf16.mxu0 %v5742
    %6865 = vmatpush1.bf16.msra.mxu0 %v5741
    %6866 = vmatprep.subr.bf16.mxu0 %v5744
    %6867 = vmatpush1.bf16.msra.mxu0 %v5743
    %6868 = vmatprep.subr.bf16.mxu0 %v5746
    %6869 = vmatpush1.bf16.msra.mxu0 %v5745
    %6870 = vmatprep.subr.bf16.mxu0 %v5748
    %6871 = vmatpush1.bf16.msra.mxu0 %v5747
    %6872 = vmatprep.subr.bf16.mxu0 %v5750
    %6873 = vmatpush1.bf16.msra.mxu0 %v5749
    %6874 = vmatprep.subr.bf16.mxu0 %v5752
    %6875 = vmatpush1.bf16.msra.mxu0 %v5751
    %6876 = vmatprep.subr.bf16.mxu0 %v5754
    %6877 = vmatpush1.bf16.msra.mxu0 %v5753
    %6878 = vmatprep.subr.bf16.mxu0 %v5756
    %6879 = vmatpush1.bf16.msra.mxu0 %v5755
    %6880 = vmatprep.subr.bf16.mxu0 %v5758
    %6881 = vmatpush1.bf16.msra.mxu0 %v5757
    %6882 = vmatprep.subr.bf16.mxu0 %v5760
    %6883 = vmatpush1.bf16.msra.mxu0 %v5759
    %6884 = vmatprep.subr.bf16.mxu0 %v5762
    %6885 = vmatpush1.bf16.msra.mxu0 %v5761
    %6886 = vmatprep.subr.bf16.mxu0 %v5764
    %6887 = vmatpush1.bf16.msra.mxu0 %v5763
    %6888 = vmatprep.subr.bf16.mxu0 %v5766
    %6889 = vmatpush1.bf16.msra.mxu0 %v5765
    %6890 = vmatprep.mubr.bf16.mxu0 %v3324
    %6891 = vmatmul.mubr.bf16.gmra.mrb[0].mxu0 %v3323
    %v6892 = vpop.f32.mrb[0].mxu0
    %v6893 = vadd.f32 %v6852, %v6892
    %v6894 = vpop.f32.mrb[0].mxu0
    %v6895 = vadd.f32 %v6854, %v6894
    %v6896 = vpop.f32.mrb[0].mxu0
    %v6897 = vpop.f32.mrb[0].mxu0
    %6898 = vdwg.mxu0
    %6899 = vmatprep.subr.bf16.mxu0 %v5768
    %6900 = vmatpush1.bf16.msra.mxu0 %v5767
    %6901 = vmatprep.subr.bf16.mxu0 %v5770
    %6902 = vmatpush1.bf16.msra.mxu0 %v5769
    %6903 = vmatprep.subr.bf16.mxu0 %v5772
    %6904 = vmatpush1.bf16.msra.mxu0 %v5771
    %6905 = vmatprep.subr.bf16.mxu0 %v5774
    %6906 = vmatpush1.bf16.msra.mxu0 %v5773
    %6907 = vmatprep.subr.bf16.mxu0 %v5776
    %6908 = vmatpush1.bf16.msra.mxu0 %v5775
    %6909 = vmatprep.subr.bf16.mxu0 %v5778
    %6910 = vmatpush1.bf16.msra.mxu0 %v5777
    %6911 = vmatprep.subr.bf16.mxu0 %v5780
    %6912 = vmatpush1.bf16.msra.mxu0 %v5779
    %6913 = vmatprep.subr.bf16.mxu0 %v5782
    %6914 = vmatpush1.bf16.msra.mxu0 %v5781
    %6915 = vmatprep.subr.bf16.mxu0 %v5784
    %6916 = vmatpush1.bf16.msra.mxu0 %v5783
    %6917 = vmatprep.subr.bf16.mxu0 %v5786
    %6918 = vmatpush1.bf16.msra.mxu0 %v5785
    %6919 = vmatprep.subr.bf16.mxu0 %v5788
    %6920 = vmatpush1.bf16.msra.mxu0 %v5787
    %6921 = vmatprep.subr.bf16.mxu0 %v5790
    %6922 = vmatpush1.bf16.msra.mxu0 %v5789
    %6923 = vmatprep.subr.bf16.mxu0 %v5792
    %6924 = vmatpush1.bf16.msra.mxu0 %v5791
    %6925 = vmatprep.subr.bf16.mxu0 %v5794
    %6926 = vmatpush1.bf16.msra.mxu0 %v5793
    %6927 = vmatprep.subr.bf16.mxu0 %v5796
    %6928 = vmatpush1.bf16.msra.mxu0 %v5795
    %6929 = vmatprep.subr.bf16.mxu0 %v5798
    %6930 = vmatpush1.bf16.msra.mxu0 %v5797
    %6931 = vmatprep.mubr.bf16.mxu0 %v3326
    %6932 = vmatmul.mubr.bf16.gmra.mrb[0].mxu0 %v3325
    %v6933 = vpop.f32.mrb[0].mxu0
    %v6934 = vadd.f32 %v6893, %v6933
    %v6935 = vpop.f32.mrb[0].mxu0
    %v6936 = vadd.f32 %v6895, %v6935
    %v6937 = vpop.f32.mrb[0].mxu0
    %v6938 = vpop.f32.mrb[0].mxu0
    %6939 = vdwg.mxu0
    %6940 = vmatprep.subr.bf16.mxu0 %v5800
    %6941 = vmatpush1.bf16.msra.mxu0 %v5799
    %6942 = vmatprep.subr.bf16.mxu0 %v5802
    %6943 = vmatpush1.bf16.msra.mxu0 %v5801
    %6944 = vmatprep.subr.bf16.mxu0 %v5804
    %6945 = vmatpush1.bf16.msra.mxu0 %v5803
    %6946 = vmatprep.subr.bf16.mxu0 %v5806
    %6947 = vmatpush1.bf16.msra.mxu0 %v5805
    %6948 = vmatprep.subr.bf16.mxu0 %v5808
    %6949 = vmatpush1.bf16.msra.mxu0 %v5807
    %6950 = vmatprep.subr.bf16.mxu0 %v5810
    %6951 = vmatpush1.bf16.msra.mxu0 %v5809
    %6952 = vmatprep.subr.bf16.mxu0 %v5812
    %6953 = vmatpush1.bf16.msra.mxu0 %v5811
    %6954 = vmatprep.subr.bf16.mxu0 %v5814
    %6955 = vmatpush1.bf16.msra.mxu0 %v5813
    %6956 = vmatprep.subr.bf16.mxu0 %v5816
    %6957 = vmatpush1.bf16.msra.mxu0 %v5815
    %6958 = vmatprep.subr.bf16.mxu0 %v5818
    %6959 = vmatpush1.bf16.msra.mxu0 %v5817
    %6960 = vmatprep.subr.bf16.mxu0 %v5820
    %6961 = vmatpush1.bf16.msra.mxu0 %v5819
    %6962 = vmatprep.subr.bf16.mxu0 %v5822
    %6963 = vmatpush1.bf16.msra.mxu0 %v5821
    %6964 = vmatprep.subr.bf16.mxu0 %v5824
    %6965 = vmatpush1.bf16.msra.mxu0 %v5823
    %6966 = vmatprep.subr.bf16.mxu0 %v5826
    %6967 = vmatpush1.bf16.msra.mxu0 %v5825
    %6968 = vmatprep.subr.bf16.mxu0 %v5828
    %6969 = vmatpush1.bf16.msra.mxu0 %v5827
    %6970 = vmatprep.subr.bf16.mxu0 %v5830
    %6971 = vmatpush1.bf16.msra.mxu0 %v5829
    %6972 = vmatprep.mubr.bf16.mxu0 %v3328
    %6973 = vmatmul.mubr.bf16.gmra.mrb[0].mxu0 %v3327
    %v6974 = vpop.f32.mrb[0].mxu0
    %v6975 = vadd.f32 %v6934, %v6974
    %v6976 = vpop.f32.mrb[0].mxu0
    %v6977 = vadd.f32 %v6936, %v6976
    %v6978 = vpop.f32.mrb[0].mxu0
    %v6979 = vpop.f32.mrb[0].mxu0
    %6980 = vdwg.mxu0
    %6981 = vmatprep.subr.bf16.mxu0 %v5832
    %6982 = vmatpush1.bf16.msra.mxu0 %v5831
    %6983 = vmatprep.subr.bf16.mxu0 %v5834
    %6984 = vmatpush1.bf16.msra.mxu0 %v5833
    %6985 = vmatprep.subr.bf16.mxu0 %v5836
    %6986 = vmatpush1.bf16.msra.mxu0 %v5835
    %6987 = vmatprep.subr.bf16.mxu0 %v5838
    %6988 = vmatpush1.bf16.msra.mxu0 %v5837
    %6989 = vmatprep.subr.bf16.mxu0 %v5840
    %6990 = vmatpush1.bf16.msra.mxu0 %v5839
    %6991 = vmatprep.subr.bf16.mxu0 %v5842
    %6992 = vmatpush1.bf16.msra.mxu0 %v5841
    %6993 = vmatprep.subr.bf16.mxu0 %v5844
    %6994 = vmatpush1.bf16.msra.mxu0 %v5843
    %6995 = vmatprep.subr.bf16.mxu0 %v5846
    %6996 = vmatpush1.bf16.msra.mxu0 %v5845
    %6997 = vmatprep.subr.bf16.mxu0 %v5848
    %6998 = vmatpush1.bf16.msra.mxu0 %v5847
    %6999 = vmatprep.subr.bf16.mxu0 %v5850
    %7000 = vmatpush1.bf16.msra.mxu0 %v5849
    %7001 = vmatprep.subr.bf16.mxu0 %v5852
    %7002 = vmatpush1.bf16.msra.mxu0 %v5851
    %7003 = vmatprep.subr.bf16.mxu0 %v5854
    %7004 = vmatpush1.bf16.msra.mxu0 %v5853
    %7005 = vmatprep.subr.bf16.mxu0 %v5856
    %7006 = vmatpush1.bf16.msra.mxu0 %v5855
    %7007 = vmatprep.subr.bf16.mxu0 %v5858
    %7008 = vmatpush1.bf16.msra.mxu0 %v5857
    %7009 = vmatprep.subr.bf16.mxu0 %v5860
    %7010 = vmatpush1.bf16.msra.mxu0 %v5859
    %7011 = vmatprep.subr.bf16.mxu0 %v5862
    %7012 = vmatpush1.bf16.msra.mxu0 %v5861
    %7013 = vmatprep.mubr.bf16.mxu0 %v3330
    %7014 = vmatmul.mubr.bf16.gmra.mrb[0].mxu0 %v3329
    %v7015 = vpop.f32.mrb[0].mxu0
    %v7016 = vadd.f32 %v6975, %v7015
    %v7017 = vpop.f32.mrb[0].mxu0
    %v7018 = vadd.f32 %v6977, %v7017
    %v7019 = vpop.f32.mrb[0].mxu0
    %v7020 = vpop.f32.mrb[0].mxu0
    %7021 = vdwg.mxu0
    %7022 = vmatprep.subr.bf16.mxu0 %v5864
    %7023 = vmatpush1.bf16.msra.mxu0 %v5863
    %7024 = vmatprep.subr.bf16.mxu0 %v5866
    %7025 = vmatpush1.bf16.msra.mxu0 %v5865
    %7026 = vmatprep.subr.bf16.mxu0 %v5868
    %7027 = vmatpush1.bf16.msra.mxu0 %v5867
    %7028 = vmatprep.subr.bf16.mxu0 %v5870
    %7029 = vmatpush1.bf16.msra.mxu0 %v5869
    %7030 = vmatprep.subr.bf16.mxu0 %v5872
    %7031 = vmatpush1.bf16.msra.mxu0 %v5871
    %7032 = vmatprep.subr.bf16.mxu0 %v5874
    %7033 = vmatpush1.bf16.msra.mxu0 %v5873
    %7034 = vmatprep.subr.bf16.mxu0 %v5876
    %7035 = vmatpush1.bf16.msra.mxu0 %v5875
    %7036 = vmatprep.subr.bf16.mxu0 %v5878
    %7037 = vmatpush1.bf16.msra.mxu0 %v5877
    %7038 = vmatprep.subr.bf16.mxu0 %v5880
    %7039 = vmatpush1.bf16.msra.mxu0 %v5879
    %7040 = vmatprep.subr.bf16.mxu0 %v5882
    %7041 = vmatpush1.bf16.msra.mxu0 %v5881
    %7042 = vmatprep.subr.bf16.mxu0 %v5884
    %7043 = vmatpush1.bf16.msra.mxu0 %v5883
    %7044 = vmatprep.subr.bf16.mxu0 %v5886
    %7045 = vmatpush1.bf16.msra.mxu0 %v5885
    %7046 = vmatprep.subr.bf16.mxu0 %v5888
    %7047 = vmatpush1.bf16.msra.mxu0 %v5887
    %7048 = vmatprep.subr.bf16.mxu0 %v5890
    %7049 = vmatpush1.bf16.msra.mxu0 %v5889
    %7050 = vmatprep.subr.bf16.mxu0 %v5892
    %7051 = vmatpush1.bf16.msra.mxu0 %v5891
    %7052 = vmatprep.subr.bf16.mxu0 %v5894
    %7053 = vmatpush1.bf16.msra.mxu0 %v5893
    %7054 = vmatprep.mubr.bf16.mxu0 %v3332
    %7055 = vmatmul.mubr.bf16.gmra.mrb[0].mxu0 %v3331
    %v7056 = vpop.f32.mrb[0].mxu0
    %v7057 = vadd.f32 %v7016, %v7056
    %v7058 = vpop.f32.mrb[0].mxu0
    %v7059 = vadd.f32 %v7018, %v7058
    %v7060 = vpop.f32.mrb[0].mxu0
    %v7061 = vpop.f32.mrb[0].mxu0
    %7062 = vdwg.mxu0
    %v7063 = vadd.f32 %v3333, %v7057
    %v7064 = vadd.f32 %v3334, %v7059
    %7065 = vst [vmem:[#allocation11] sm:$0xff] %v7063
    %7066 = vst [vmem:[#allocation11 + $0x8] sm:$0xff] %v7064
    // Predicated region
    $region46: #{tpu_custom_call.1} parent=1 // pred_check
      _
    $region47: #{tpu_custom_call.1} parent=1 // pred_check_branch
      %7068 = sbr.rel (0) target = $region49
    $region48: #{tpu_custom_call.1} parent=1 // pred_region
      %s7070 = ssub.s32 256, 256
      %7071 = vsyncadd [#allocation4], %s7070
      %s7073 = sshll.u32 [#allocation11], 4
      %s7074 = int_to_ptr.vmem [resolvable:$true] %s7073
      %7076 = dma.vmem_to_hbm [thread:$0]  %s7074, 256, %s5, [#allocation4]
    $region49: #{tpu_custom_call.1} parent=1 // pred_fallthru
      _
    // Predicated region
    $region50: #{tpu_custom_call.1} parent=1 // pred_check
      _
    $region51: #{tpu_custom_call.1} parent=1 // pred_check_branch
      %7078 = sbr.rel (0) target = $region53
    $region52: #{tpu_custom_call.1} parent=1 // pred_region
      %7079 = dma.done [#allocation4], 256
    $region53: #{tpu_custom_call.1} parent=1 // pred_fallthru
      _
    %7080 = vsyncpa [#allocation3], 1
    %7081 = vsyncpa [#allocation6], 1
    %7082 = vsyncpa [#allocation9], 1
    %7083 = vsyncpa [#allocation4], 1

</llo_original>
